<compile_context>
chip_gen: v7x
topology: tpu7x:2x2x1
jax: 0.10.0
libtpu: 0.0.40
codegen_flags: <defaults>
</compile_context>

<pallas_src>
import math
import functools

import numpy as np
import jax
import jax.numpy as jnp
from jax import lax
from jax.experimental import pallas as pl
from jax.experimental.pallas import tpu as pltpu


# ----------------------------------------------------------------------------
# Per-query-tile attention body (per-head 2D matmuls; per-head contexts packed
# head-major and projected by the full (C, C) output weight in one MXU matmul).
# ----------------------------------------------------------------------------
def _attention_tile(hid_b, k_scr, v_scr, wq3_ref, bq3_ref, wo_ref, bo_ref, o_ref, num_heads):
    ctx_parts = []
    for h in range(num_heads):
        # Q projection for head h: full-C contraction, output already head-shaped (scale folded in).
        q = jnp.dot(hid_b, wq3_ref[h], preferred_element_type=jnp.float32) + bq3_ref[h]   # (TQ, d) f32
        # Scores: K cached transposed (d, Nkv) -> natural (K, N) MXU operand, lane-dense on Nkv.
        s = jnp.dot(q.astype(jnp.bfloat16), k_scr[h],
                    preferred_element_type=jnp.float32)                                    # (TQ, Nkv) f32
        s = s - jnp.max(s, axis=-1, keepdims=True)
        p = jnp.exp(s)
        p = p * pl.reciprocal(jnp.sum(p, axis=-1, keepdims=True))                          # exact recip
        ctx = jnp.dot(p.astype(jnp.bfloat16), v_scr[h],
                      preferred_element_type=jnp.float32)                                  # (TQ, d) f32
        ctx_parts.append(ctx)
    # Head-major lane-contiguous pack -> one full-depth (TQ,C) x (C,C) output matmul.
    ctx_packed = ctx_parts[0] if num_heads == 1 else jnp.concatenate(ctx_parts, axis=-1)   # (TQ, C)
    out = jnp.dot(ctx_packed.astype(jnp.bfloat16), wo_ref[...],
                  preferred_element_type=jnp.float32) + bo_ref[...]
    o_ref[0] = out.astype(o_ref.dtype)


def _fill_kv_scratch(kv_b, wk3_ref, bk3_ref, wv3_ref, bv3_ref, k_scr, v_scr, num_heads):
    """kv_b: (Nkv, C) bf16.  Fills K transposed (H, d, Nkv) and V (H, Nkv, d) bf16 scratch."""
    for h in range(num_heads):
        # K^T[h] = Wk[h] (d, C) contracted with kv (Nkv, C) over C -> (d, Nkv); no relayout later.
        kT = lax.dot_general(wk3_ref[h], kv_b, (((1,), (1,)), ((), ())),
                             preferred_element_type=jnp.float32) + bk3_ref[h]
        k_scr[h] = kT.astype(k_scr.dtype)
        v = jnp.dot(kv_b, wv3_ref[h], preferred_element_type=jnp.float32) + bv3_ref[h]
        v_scr[h] = v.astype(v_scr.dtype)


# ----------------------------------------------------------------------------
# Kernel: sr_ratio > 1 (sequence-reduction conv + LayerNorm + K/V fused at qi == 0)
# ----------------------------------------------------------------------------
def _segformer_attn_sr_kernel(
    hid_ref, patch_ref, wsr_ref, bsr_ref, g_ref, beta_ref,
    wq3_ref, bq3_ref, wk3_ref, bk3_ref, wv3_ref, bv3_ref, wo_ref, bo_ref,
    o_ref,
    k_scr, v_scr,
    *, num_heads,
):
    qi = pl.program_id(2)

    @pl.when(qi == 0)
    def _():
        # Sequence-reduction conv as a patch matmul (bf16 MXU / f32 acc) + bias.
        kv = jnp.dot(patch_ref[0], wsr_ref[...],
                     preferred_element_type=jnp.float32) + bsr_ref[...]
        # LayerNorm with f32 statistics.
        mean = jnp.mean(kv, axis=-1, keepdims=True)
        var = jnp.mean((kv - mean) ** 2, axis=-1, keepdims=True)
        kv = (kv - mean) * lax.rsqrt(var + 1e-5)
        kv = kv * g_ref[...] + beta_ref[...]
        _fill_kv_scratch(kv.astype(jnp.bfloat16), wk3_ref, bk3_ref, wv3_ref, bv3_ref,
                         k_scr, v_scr, num_heads)

    _attention_tile(hid_ref[0], k_scr, v_scr, wq3_ref, bq3_ref, wo_ref, bo_ref, o_ref, num_heads)


# ----------------------------------------------------------------------------
# Kernel: sr_ratio == 1 (hidden loaded once per batch, shared by Q tiles and K/V)
# ----------------------------------------------------------------------------
def _segformer_attn_kernel(
    hid_ref,
    wq3_ref, bq3_ref, wk3_ref, bk3_ref, wv3_ref, bv3_ref, wo_ref, bo_ref,
    o_ref,
    k_scr, v_scr,
    *, num_heads, tq, n_inner,
):
    qs = pl.program_id(1)
    qi = pl.program_id(2)

    @pl.when(qi == 0)
    def _():
        _fill_kv_scratch(hid_ref[0], wk3_ref, bk3_ref, wv3_ref, bv3_ref,
                         k_scr, v_scr, num_heads)

    start = pl.multiple_of((qs * n_inner + qi) * tq, tq)
    hid_tile = hid_ref[0, pl.ds(start, tq), :]                         # (TQ, C) bf16
    _attention_tile(hid_tile, k_scr, v_scr, wq3_ref, bq3_ref, wo_ref, bo_ref, o_ref, num_heads)


# ----------------------------------------------------------------------------
# Wrapper
# ----------------------------------------------------------------------------
def _pick_tq(n):
    # Largest 8-aligned query tile (<= 1024) that exactly divides N; tq == N is allowed
    # (>=512-sized blocks already sit near the HBM roofline and the batch axis still pipelines).
    for tq in (1024, 512, 256, 128, 64, 32, 16, 8):
        if n % tq == 0:
            return tq
    return n


def _vmem_limit_bytes():
    try:
        cap = int(pltpu.get_tpu_info().vmem_capacity_bytes)
    except Exception:
        cap = 64 * 1024 * 1024
    half_mb = cap // (2 * 1024 * 1024)
    return int(max(32, min(96, half_mb))) * 1024 * 1024


def segformer_attention(hidden_states, params, height, width, num_heads, sr_ratio):
    """Pallas implementation of SegformerAttention.forward (eval mode, dropout = identity)."""
    B, N, C = hidden_states.shape
    assert N == height * width and C % num_heads == 0
    d = C // num_heads
    out_dtype = hidden_states.dtype
    bf16, f32 = jnp.bfloat16, jnp.float32

    tq = _pick_tq(N)
    nq = N // tq
    # Query-axis parallel split so B == 1 inference still feeds both v7x TCs / megacore.
    q_split = 1
    if B == 1:
        if nq >= 2 and nq % 2 == 0:
            q_split = 2
        elif nq == 1 and tq % 16 == 0:
            tq //= 2
            nq = 2
            q_split = 2
    n_inner = nq // q_split

    # --- wrapper-side parameter prep (layout plumbing; bf16 MXU operands, f32 biases) ---
    scale = 1.0 / math.sqrt(d)
    wq3 = jnp.transpose((params["wq"].T * scale).reshape(C, num_heads, d), (1, 0, 2)).astype(bf16)
    bq3 = (params["bq"] * scale).reshape(num_heads, 1, d).astype(f32)
    wk3 = params["wk"].reshape(num_heads, d, C).astype(bf16)        # (H, d, C): K produced pre-transposed
    bk3 = params["bk"].reshape(num_heads, d, 1).astype(f32)
    wv3 = jnp.transpose(params["wv"].T.reshape(C, num_heads, d), (1, 0, 2)).astype(bf16)
    bv3 = params["bv"].reshape(num_heads, 1, d).astype(f32)
    wo_t = params["wo"].T.astype(bf16)                              # (C, C): rows head-major like packed ctx
    bo = params["bo"].reshape(1, C).astype(f32)

    hid_bf = hidden_states.astype(bf16)

    const2 = lambda shape: pl.BlockSpec(shape, lambda b, qs, qi: (0, 0))
    const3 = lambda shape: pl.BlockSpec(shape, lambda b, qs, qi: (0, 0, 0))
    qtile_map = lambda b, qs, qi: (b, qs * n_inner + qi, 0)
    out_spec = pl.BlockSpec((1, tq, C), qtile_map)
    out_shape = jax.ShapeDtypeStruct((B, N, C), out_dtype)
    grid = (B, q_split, n_inner)

    cparams = pltpu.CompilerParams(
        dimension_semantics=("parallel", "parallel", "arbitrary"),
        vmem_limit_bytes=_vmem_limit_bytes(),
    )

    head_specs = [
        const3((num_heads, C, d)), const3((num_heads, 1, d)),       # Wq (pre-scaled), bq
        const3((num_heads, d, C)), const3((num_heads, d, 1)),       # Wk (transposed-output layout), bk
        const3((num_heads, C, d)), const3((num_heads, 1, d)),       # Wv, bv
        const2((C, C)), const2((1, C)),                             # Wo, bo
    ]

    if sr_ratio > 1:
        r = sr_ratio
        assert height % r == 0 and width % r == 0
        Hr, Wr = height // r, width // r
        Nr = Hr * Wr
        # Conv2d(kernel=stride=r) lowered to a patch matmul: pure layout glue, wrapper-side.
        x = hidden_states.reshape(B, height, width, C).reshape(B, Hr, r, Wr, r, C)
        patches = jnp.transpose(x, (0, 1, 3, 5, 2, 4)).reshape(B, Nr, C * r * r).astype(bf16)
        # conv weight (Cout, Cin, r, r) -> (Cin*r*r, Cout), matching the (ci, kh, kw) patch order.
        w_sr_flat = params["w_sr"].reshape(C, C * r * r).T.astype(bf16)

        kernel = functools.partial(_segformer_attn_sr_kernel, num_heads=num_heads)
        out = pl.pallas_call(
            kernel,
            out_shape=out_shape,
            grid=grid,
            in_specs=[
                pl.BlockSpec((1, tq, C), qtile_map),                            # hidden query tile
                pl.BlockSpec((1, Nr, C * r * r), lambda b, qs, qi: (b, 0, 0)),  # patches (per batch, resident)
                const2((C * r * r, C)), const2((1, C)),                         # SR conv weight / bias
                const2((1, C)), const2((1, C)),                                 # LN gamma / beta
            ] + head_specs,
            out_specs=out_spec,
            scratch_shapes=[
                pltpu.VMEM((num_heads, d, Nr), bf16),   # K^T cache (lane-dense on Nr)
                pltpu.VMEM((num_heads, Nr, d), bf16),   # V cache
            ],
            compiler_params=cparams,
        )(hid_bf, patches, w_sr_flat, params["b_sr"].reshape(1, C).astype(f32),
          params["g"].reshape(1, C).astype(f32), params["beta"].reshape(1, C).astype(f32),
          wq3, bq3, wk3, bk3, wv3, bv3, wo_t, bo)
    else:
        kernel = functools.partial(_segformer_attn_kernel,
                                   num_heads=num_heads, tq=tq, n_inner=n_inner)
        out = pl.pallas_call(
            kernel,
            out_shape=out_shape,
            grid=grid,
            in_specs=[pl.BlockSpec((1, N, C), lambda b, qs, qi: (b, 0, 0))] + head_specs,
            out_specs=out_spec,
            scratch_shapes=[
                pltpu.VMEM((num_heads, d, N), bf16),
                pltpu.VMEM((num_heads, N, d), bf16),
            ],
            compiler_params=cparams,
        )(hid_bf, wq3, bq3, wk3, bk3, wv3, bv3, wo_t, bo)

    return out


# ----------------------------------------------------------------------------
# Pure-JAX reference (mirrors the PyTorch forward exactly), for verification.
# ----------------------------------------------------------------------------
def segformer_attention_ref(hidden, params, height, width, num_heads, sr_ratio):
    B, N, C = hidden.shape
    d = C // num_heads
    linear = lambda x, w, b: x @ w.T + b

    q = linear(hidden, params["wq"], params["bq"])
    if sr_ratio > 1:
        x = jnp.transpose(hidden, (0, 2, 1)).reshape(B, C, height, width)
        conv = jax.lax.conv_general_dilated(
            x, params["w_sr"], (sr_ratio, sr_ratio), "VALID",
            dimension_numbers=("NCHW", "OIHW", "NCHW"),
        ) + params["b_sr"][None, :, None, None]
        kvh = jnp.transpose(conv.reshape(B, C, -1), (0, 2, 1))
        mean = kvh.mean(-1, keepdims=True)
        var = ((kvh - mean) ** 2).mean(-1, keepdims=True)
        kvh = (kvh - mean) / jnp.sqrt(var + 1e-5) * params["g"] + params["beta"]
    else:
        kvh = hidden

    k = linear(kvh, params["wk"], params["bk"])
    v = linear(kvh, params["wv"], params["bv"])
    heads = lambda x: jnp.transpose(x.reshape(B, -1, num_heads, d), (0, 2, 1, 3))
    qh, kh, vh = heads(q), heads(k), heads(v)
    s = qh @ jnp.transpose(kh, (0, 1, 3, 2)) / math.sqrt(d)
    p = jax.nn.softmax(s, axis=-1)
    ctx = jnp.transpose(p @ vh, (0, 2, 1, 3)).reshape(B, -1, C)
    return linear(ctx, params["wo"], params["bo"])


# ----------------------------------------------------------------------------
if __name__ == "__main__":
    def make_params(key, C, sr_ratio):
        ks = jax.random.split(key, 10)
        f32 = jnp.float32
        p = {
            "wq": jax.random.normal(ks[0], (C, C), f32) * 0.05,
            "bq": jax.random.normal(ks[1], (C,), f32) * 0.05,
            "wk": jax.random.normal(ks[2], (C, C), f32) * 0.05,
            "bk": jax.random.normal(ks[3], (C,), f32) * 0.05,
            "wv": jax.random.normal(ks[4], (C, C), f32) * 0.05,
            "bv": jax.random.normal(ks[5], (C,), f32) * 0.05,
            "wo": jax.random.normal(ks[6], (C, C), f32) * 0.05,
            "bo": jax.random.normal(ks[7], (C,), f32) * 0.05,
        }
        if sr_ratio > 1:
            p["w_sr"] = jax.random.normal(ks[8], (C, C, sr_ratio, sr_ratio), f32) * 0.05
            p["b_sr"] = jax.random.normal(ks[9], (C,), f32) * 0.05
            p["g"] = jnp.ones((C,), f32) * 1.1
            p["beta"] = jnp.ones((C,), f32) * 0.02
        return p

    key = jax.random.PRNGKey(0)
    k1, k2, k3, k4 = jax.random.split(key, 4)

    # bf16 MXU operands (f32 accumulation) -> tolerances relaxed accordingly.
    RTOL = ATOL = 2e-2

    # --- Config A: sequence-reduction path (sr_ratio = 2) ---
    B, C, H, W, heads, sr = 2, 32, 16, 16, 2, 2
    params_a = make_params(k1, C, sr)
    hidden_a = jax.random.normal(k2, (B, H * W, C), jnp.float32)
    out_a = jax.block_until_ready(segformer_attention(hidden_a, params_a, H, W, heads, sr))
    ref_a = jax.block_until_ready(segformer_attention_ref(hidden_a, params_a, H, W, heads, sr))
    assert out_a.shape == (B, H * W, C)
    np.testing.assert_allclose(np.asarray(out_a), np.asarray(ref_a), rtol=RTOL, atol=ATOL)

    # --- Config B: no sequence reduction (sr_ratio = 1) ---
    B, C, H, W, heads, sr = 2, 64, 8, 8, 4, 1
    params_b = make_params(k3, C, sr)
    hidden_bb = jax.random.normal(k4, (B, H * W, C), jnp.float32)
    out_b = jax.block_until_ready(segformer_attention(hidden_bb, params_b, H, W, heads, sr))
    ref_b = jax.block_until_ready(segformer_attention_ref(hidden_bb, params_b, H, W, heads, sr))
    assert out_b.shape == (B, H * W, C)
    np.testing.assert_allclose(np.asarray(out_b), np.asarray(ref_b), rtol=RTOL, atol=ATOL)

    # --- Config C: batch = 1 exercises the query-axis parallel split path ---
    out_c = jax.block_until_ready(segformer_attention(hidden_a[:1], params_a, 16, 16, 2, 2))
    assert out_c.shape == (1, 256, 32)
    np.testing.assert_allclose(np.asarray(out_c), np.asarray(ref_a[:1]), rtol=RTOL, atol=ATOL)

    print("KERNEL_OK")
</pallas_src>

<mosaic_0001>
module attributes {stable_mosaic.version = 11 : i64} {
  func.func @_segformer_attn_sr_kernel(%arg0: i32, %arg1: i32, %arg2: i32, %arg3: memref<1x256x32xbf16, #tpu.memory_space<vmem>>, %arg4: memref<1x64x128xbf16, #tpu.memory_space<vmem>>, %arg5: memref<128x32xbf16, #tpu.memory_space<vmem>>, %arg6: memref<1x32xf32, #tpu.memory_space<vmem>>, %arg7: memref<1x32xf32, #tpu.memory_space<vmem>>, %arg8: memref<1x32xf32, #tpu.memory_space<vmem>>, %arg9: memref<2x32x16xbf16, #tpu.memory_space<vmem>>, %arg10: memref<2x1x16xf32, #tpu.memory_space<vmem>>, %arg11: memref<2x16x32xbf16, #tpu.memory_space<vmem>>, %arg12: memref<2x16x1xf32, #tpu.memory_space<vmem>>, %arg13: memref<2x32x16xbf16, #tpu.memory_space<vmem>>, %arg14: memref<2x1x16xf32, #tpu.memory_space<vmem>>, %arg15: memref<32x32xbf16, #tpu.memory_space<vmem>>, %arg16: memref<1x32xf32, #tpu.memory_space<vmem>>, %arg17: memref<1x256x32xf32, #tpu.memory_space<vmem>>, %arg18: memref<2x16x64xbf16, #tpu.memory_space<vmem>>, %arg19: memref<2x64x16xbf16, #tpu.memory_space<vmem>>) attributes {dimension_semantics = [#tpu.dimension_semantics<parallel>, #tpu.dimension_semantics<parallel>, #tpu.dimension_semantics<arbitrary>], iteration_bounds = array<i64: 2, 1, 1>, scalar_prefetch = 0 : i64, scratch_operands = 2 : i64, tpu.core_type = #tpu.core_type<tc>, window_params = [{transform_indices = @transform_0, window_bounds = array<i64: 1, 256, 32>}, {transform_indices = @transform_1, window_bounds = array<i64: 1, 64, 128>}, {pipeline_mode = #tpu.pipeline_mode<synchronous>, transform_indices = @transform_2, window_bounds = array<i64: 128, 32>}, {pipeline_mode = #tpu.pipeline_mode<synchronous>, transform_indices = @transform_3, window_bounds = array<i64: 1, 32>}, {pipeline_mode = #tpu.pipeline_mode<synchronous>, transform_indices = @transform_4, window_bounds = array<i64: 1, 32>}, {pipeline_mode = #tpu.pipeline_mode<synchronous>, transform_indices = @transform_5, window_bounds = array<i64: 1, 32>}, {pipeline_mode = #tpu.pipeline_mode<synchronous>, transform_indices = @transform_6, window_bounds = array<i64: 2, 32, 16>}, {pipeline_mode = #tpu.pipeline_mode<synchronous>, transform_indices = @transform_7, window_bounds = array<i64: 2, 1, 16>}, {pipeline_mode = #tpu.pipeline_mode<synchronous>, transform_indices = @transform_8, window_bounds = array<i64: 2, 16, 32>}, {pipeline_mode = #tpu.pipeline_mode<synchronous>, transform_indices = @transform_9, window_bounds = array<i64: 2, 16, 1>}, {pipeline_mode = #tpu.pipeline_mode<synchronous>, transform_indices = @transform_10, window_bounds = array<i64: 2, 32, 16>}, {pipeline_mode = #tpu.pipeline_mode<synchronous>, transform_indices = @transform_11, window_bounds = array<i64: 2, 1, 16>}, {pipeline_mode = #tpu.pipeline_mode<synchronous>, transform_indices = @transform_12, window_bounds = array<i64: 32, 32>}, {pipeline_mode = #tpu.pipeline_mode<synchronous>, transform_indices = @transform_13, window_bounds = array<i64: 1, 32>}, {transform_indices = @transform_14, window_bounds = array<i64: 1, 256, 32>}]} {
    %c0_i32 = arith.constant 0 : i32
    %0 = arith.cmpi eq, %arg2, %c0_i32 : i32
    %1 = arith.extui %0 : i1 to i32
    %c0_i32_0 = arith.constant 0 : i32
    %2 = arith.cmpi ne, %1, %c0_i32_0 : i32
    scf.if %2 {
      %c0_43 = arith.constant 0 : index
      %c0_44 = arith.constant 0 : index
      %c0_45 = arith.constant 0 : index
      %65 = vector.load %arg4[%c0_43, %c0_44, %c0_45] : memref<1x64x128xbf16, #tpu.memory_space<vmem>>, vector<1x64x128xbf16>
      %66 = vector.shape_cast %65 : vector<1x64x128xbf16> to vector<64x128xbf16>
      %c0_46 = arith.constant 0 : index
      %c0_47 = arith.constant 0 : index
      %67 = vector.load %arg5[%c0_46, %c0_47] : memref<128x32xbf16, #tpu.memory_space<vmem>>, vector<128x32xbf16>
      %cst_48 = arith.constant dense<0.000000e+00> : vector<64x32xf32>
      %68 = tpu.matmul %66, %67, %cst_48 {dimension_numbers = #tpu.dot_dimension_numbers<[1], [0], [0], [1], [0, 0, 1, 1], [], []>} : vector<64x128xbf16>, vector<128x32xbf16>, vector<64x32xf32> -> vector<64x32xf32>
      %c0_49 = arith.constant 0 : index
      %c0_50 = arith.constant 0 : index
      %69 = vector.load %arg6[%c0_49, %c0_50] : memref<1x32xf32, #tpu.memory_space<vmem>>, vector<1x32xf32>
      %70 = vector.broadcast %69 : vector<1x32xf32> to vector<64x32xf32>
      %71 = arith.addf %68, %70 : vector<64x32xf32>
      %cst_51 = arith.constant dense<0.000000e+00> : vector<64xf32>
      %72 = vector.multi_reduction <add>, %71, %cst_51 [1] : vector<64x32xf32> to vector<64xf32>
      %73 = vector.shape_cast %72 : vector<64xf32> to vector<64x1xf32>
      %cst_52 = arith.constant 3.200000e+01 : f32
      %74 = vector.broadcast %cst_52 : f32 to vector<64x1xf32>
      %75 = arith.divf %73, %74 : vector<64x1xf32>
      %76 = vector.broadcast %75 : vector<64x1xf32> to vector<64x32xf32>
      %77 = arith.subf %71, %76 : vector<64x32xf32>
      %78 = arith.mulf %77, %77 : vector<64x32xf32>
      %cst_53 = arith.constant dense<0.000000e+00> : vector<64xf32>
      %79 = vector.multi_reduction <add>, %78, %cst_53 [1] : vector<64x32xf32> to vector<64xf32>
      %80 = vector.shape_cast %79 : vector<64xf32> to vector<64x1xf32>
      %cst_54 = arith.constant 3.200000e+01 : f32
      %81 = vector.broadcast %cst_54 : f32 to vector<64x1xf32>
      %82 = arith.divf %80, %81 : vector<64x1xf32>
      %83 = vector.broadcast %75 : vector<64x1xf32> to vector<64x32xf32>
      %84 = arith.subf %71, %83 : vector<64x32xf32>
      %cst_55 = arith.constant 9.99999974E-6 : f32
      %85 = vector.broadcast %cst_55 : f32 to vector<64x1xf32>
      %86 = arith.addf %82, %85 : vector<64x1xf32>
      %87 = math.rsqrt %86 : vector<64x1xf32>
      %88 = vector.broadcast %87 : vector<64x1xf32> to vector<64x32xf32>
      %89 = arith.mulf %84, %88 : vector<64x32xf32>
      %c0_56 = arith.constant 0 : index
      %c0_57 = arith.constant 0 : index
      %90 = vector.load %arg7[%c0_56, %c0_57] : memref<1x32xf32, #tpu.memory_space<vmem>>, vector<1x32xf32>
      %91 = vector.broadcast %90 : vector<1x32xf32> to vector<64x32xf32>
      %92 = arith.mulf %89, %91 : vector<64x32xf32>
      %c0_58 = arith.constant 0 : index
      %c0_59 = arith.constant 0 : index
      %93 = vector.load %arg8[%c0_58, %c0_59] : memref<1x32xf32, #tpu.memory_space<vmem>>, vector<1x32xf32>
      %94 = vector.broadcast %93 : vector<1x32xf32> to vector<64x32xf32>
      %95 = arith.addf %92, %94 : vector<64x32xf32>
      %96 = arith.truncf %95 : vector<64x32xf32> to vector<64x32xbf16>
      %c0_60 = arith.constant 0 : index
      %c0_61 = arith.constant 0 : index
      %c0_62 = arith.constant 0 : index
      %97 = vector.load %arg11[%c0_60, %c0_61, %c0_62] : memref<2x16x32xbf16, #tpu.memory_space<vmem>>, vector<1x16x32xbf16>
      %98 = vector.shape_cast %97 : vector<1x16x32xbf16> to vector<16x32xbf16>
      %cst_63 = arith.constant dense<0.000000e+00> : vector<16x64xf32>
      %99 = tpu.matmul %98, %96, %cst_63 {dimension_numbers = #tpu.dot_dimension_numbers<[1], [1], [0], [0], [0, 0, 1, 0], [], []>} : vector<16x32xbf16>, vector<64x32xbf16>, vector<16x64xf32> -> vector<16x64xf32>
      %c0_64 = arith.constant 0 : index
      %c0_65 = arith.constant 0 : index
      %c0_66 = arith.constant 0 : index
      %100 = vector.load %arg12[%c0_64, %c0_65, %c0_66] : memref<2x16x1xf32, #tpu.memory_space<vmem>>, vector<1x16x1xf32>
      %101 = vector.shape_cast %100 : vector<1x16x1xf32> to vector<16x1xf32>
      %102 = vector.broadcast %101 : vector<16x1xf32> to vector<16x64xf32>
      %103 = arith.addf %99, %102 : vector<16x64xf32>
      %104 = arith.truncf %103 : vector<16x64xf32> to vector<16x64xbf16>
      %c0_67 = arith.constant 0 : index
      %c0_68 = arith.constant 0 : index
      %c0_69 = arith.constant 0 : index
      %105 = vector.load %arg18[%c0_67, %c0_68, %c0_69] : memref<2x16x64xbf16, #tpu.memory_space<vmem>>, vector<1x16x64xbf16>
      %106 = vector.shape_cast %105 : vector<1x16x64xbf16> to vector<16x64xbf16>
      %107 = vector.shape_cast %104 : vector<16x64xbf16> to vector<1x16x64xbf16>
      tpu.vector_store %arg18[%c0_67, %c0_68, %c0_69], %107 {strides = array<i32>} : memref<2x16x64xbf16, #tpu.memory_space<vmem>>, vector<1x16x64xbf16>,
      %c0_70 = arith.constant 0 : index
      %c0_71 = arith.constant 0 : index
      %c0_72 = arith.constant 0 : index
      %108 = vector.load %arg13[%c0_70, %c0_71, %c0_72] : memref<2x32x16xbf16, #tpu.memory_space<vmem>>, vector<1x32x16xbf16>
      %109 = vector.shape_cast %108 : vector<1x32x16xbf16> to vector<32x16xbf16>
      %cst_73 = arith.constant dense<0.000000e+00> : vector<64x16xf32>
      %110 = tpu.matmul %96, %109, %cst_73 {dimension_numbers = #tpu.dot_dimension_numbers<[1], [0], [0], [1], [0, 0, 1, 1], [], []>} : vector<64x32xbf16>, vector<32x16xbf16>, vector<64x16xf32> -> vector<64x16xf32>
      %c0_74 = arith.constant 0 : index
      %c0_75 = arith.constant 0 : index
      %c0_76 = arith.constant 0 : index
      %111 = vector.load %arg14[%c0_74, %c0_75, %c0_76] : memref<2x1x16xf32, #tpu.memory_space<vmem>>, vector<1x1x16xf32>
      %112 = vector.shape_cast %111 : vector<1x1x16xf32> to vector<1x16xf32>
      %113 = vector.broadcast %112 : vector<1x16xf32> to vector<64x16xf32>
      %114 = arith.addf %110, %113 : vector<64x16xf32>
      %115 = arith.truncf %114 : vector<64x16xf32> to vector<64x16xbf16>
      %c0_77 = arith.constant 0 : index
      %c0_78 = arith.constant 0 : index
      %c0_79 = arith.constant 0 : index
      %116 = vector.load %arg19[%c0_77, %c0_78, %c0_79] : memref<2x64x16xbf16, #tpu.memory_space<vmem>>, vector<1x64x16xbf16>
      %117 = vector.shape_cast %116 : vector<1x64x16xbf16> to vector<64x16xbf16>
      %118 = vector.shape_cast %115 : vector<64x16xbf16> to vector<1x64x16xbf16>
      tpu.vector_store %arg19[%c0_77, %c0_78, %c0_79], %118 {strides = array<i32>} : memref<2x64x16xbf16, #tpu.memory_space<vmem>>, vector<1x64x16xbf16>,
      %c1_80 = arith.constant 1 : index
      %c0_81 = arith.constant 0 : index
      %c0_82 = arith.constant 0 : index
      %119 = vector.load %arg11[%c1_80, %c0_81, %c0_82] : memref<2x16x32xbf16, #tpu.memory_space<vmem>>, vector<1x16x32xbf16>
      %120 = vector.shape_cast %119 : vector<1x16x32xbf16> to vector<16x32xbf16>
      %cst_83 = arith.constant dense<0.000000e+00> : vector<16x64xf32>
      %121 = tpu.matmul %120, %96, %cst_83 {dimension_numbers = #tpu.dot_dimension_numbers<[1], [1], [0], [0], [0, 0, 1, 0], [], []>} : vector<16x32xbf16>, vector<64x32xbf16>, vector<16x64xf32> -> vector<16x64xf32>
      %c1_84 = arith.constant 1 : index
      %c0_85 = arith.constant 0 : index
      %c0_86 = arith.constant 0 : index
      %122 = vector.load %arg12[%c1_84, %c0_85, %c0_86] : memref<2x16x1xf32, #tpu.memory_space<vmem>>, vector<1x16x1xf32>
      %123 = vector.shape_cast %122 : vector<1x16x1xf32> to vector<16x1xf32>
      %124 = vector.broadcast %123 : vector<16x1xf32> to vector<16x64xf32>
      %125 = arith.addf %121, %124 : vector<16x64xf32>
      %126 = arith.truncf %125 : vector<16x64xf32> to vector<16x64xbf16>
      %c1_87 = arith.constant 1 : index
      %c0_88 = arith.constant 0 : index
      %c0_89 = arith.constant 0 : index
      %127 = vector.load %arg18[%c1_87, %c0_88, %c0_89] : memref<2x16x64xbf16, #tpu.memory_space<vmem>>, vector<1x16x64xbf16>
      %128 = vector.shape_cast %127 : vector<1x16x64xbf16> to vector<16x64xbf16>
      %129 = vector.shape_cast %126 : vector<16x64xbf16> to vector<1x16x64xbf16>
      tpu.vector_store %arg18[%c1_87, %c0_88, %c0_89], %129 {strides = array<i32>} : memref<2x16x64xbf16, #tpu.memory_space<vmem>>, vector<1x16x64xbf16>,
      %c1_90 = arith.constant 1 : index
      %c0_91 = arith.constant 0 : index
      %c0_92 = arith.constant 0 : index
      %130 = vector.load %arg13[%c1_90, %c0_91, %c0_92] : memref<2x32x16xbf16, #tpu.memory_space<vmem>>, vector<1x32x16xbf16>
      %131 = vector.shape_cast %130 : vector<1x32x16xbf16> to vector<32x16xbf16>
      %cst_93 = arith.constant dense<0.000000e+00> : vector<64x16xf32>
      %132 = tpu.matmul %96, %131, %cst_93 {dimension_numbers = #tpu.dot_dimension_numbers<[1], [0], [0], [1], [0, 0, 1, 1], [], []>} : vector<64x32xbf16>, vector<32x16xbf16>, vector<64x16xf32> -> vector<64x16xf32>
      %c1_94 = arith.constant 1 : index
      %c0_95 = arith.constant 0 : index
      %c0_96 = arith.constant 0 : index
      %133 = vector.load %arg14[%c1_94, %c0_95, %c0_96] : memref<2x1x16xf32, #tpu.memory_space<vmem>>, vector<1x1x16xf32>
      %134 = vector.shape_cast %133 : vector<1x1x16xf32> to vector<1x16xf32>
      %135 = vector.broadcast %134 : vector<1x16xf32> to vector<64x16xf32>
      %136 = arith.addf %132, %135 : vector<64x16xf32>
      %137 = arith.truncf %136 : vector<64x16xf32> to vector<64x16xbf16>
      %c1_97 = arith.constant 1 : index
      %c0_98 = arith.constant 0 : index
      %c0_99 = arith.constant 0 : index
      %138 = vector.load %arg19[%c1_97, %c0_98, %c0_99] : memref<2x64x16xbf16, #tpu.memory_space<vmem>>, vector<1x64x16xbf16>
      %139 = vector.shape_cast %138 : vector<1x64x16xbf16> to vector<64x16xbf16>
      %140 = vector.shape_cast %137 : vector<64x16xbf16> to vector<1x64x16xbf16>
      tpu.vector_store %arg19[%c1_97, %c0_98, %c0_99], %140 {strides = array<i32>} : memref<2x64x16xbf16, #tpu.memory_space<vmem>>, vector<1x64x16xbf16>,
    } else {
    }
    %c0 = arith.constant 0 : index
    %c0_1 = arith.constant 0 : index
    %c0_2 = arith.constant 0 : index
    %3 = vector.load %arg3[%c0, %c0_1, %c0_2] : memref<1x256x32xbf16, #tpu.memory_space<vmem>>, vector<1x256x32xbf16>
    %4 = vector.shape_cast %3 : vector<1x256x32xbf16> to vector<256x32xbf16>
    %c0_3 = arith.constant 0 : index
    %c0_4 = arith.constant 0 : index
    %c0_5 = arith.constant 0 : index
    %5 = vector.load %arg9[%c0_3, %c0_4, %c0_5] : memref<2x32x16xbf16, #tpu.memory_space<vmem>>, vector<1x32x16xbf16>
    %6 = vector.shape_cast %5 : vector<1x32x16xbf16> to vector<32x16xbf16>
    %cst = arith.constant dense<0.000000e+00> : vector<256x16xf32>
    %7 = tpu.matmul %4, %6, %cst {dimension_numbers = #tpu.dot_dimension_numbers<[1], [0], [0], [1], [0, 0, 1, 1], [], []>} : vector<256x32xbf16>, vector<32x16xbf16>, vector<256x16xf32> -> vector<256x16xf32>
    %c0_6 = arith.constant 0 : index
    %c0_7 = arith.constant 0 : index
    %c0_8 = arith.constant 0 : index
    %8 = vector.load %arg10[%c0_6, %c0_7, %c0_8] : memref<2x1x16xf32, #tpu.memory_space<vmem>>, vector<1x1x16xf32>
    %9 = vector.shape_cast %8 : vector<1x1x16xf32> to vector<1x16xf32>
    %10 = vector.broadcast %9 : vector<1x16xf32> to vector<256x16xf32>
    %11 = arith.addf %7, %10 : vector<256x16xf32>
    %12 = arith.truncf %11 : vector<256x16xf32> to vector<256x16xbf16>
    %c0_9 = arith.constant 0 : index
    %c0_10 = arith.constant 0 : index
    %c0_11 = arith.constant 0 : index
    %13 = vector.load %arg18[%c0_9, %c0_10, %c0_11] : memref<2x16x64xbf16, #tpu.memory_space<vmem>>, vector<1x16x64xbf16>
    %14 = vector.shape_cast %13 : vector<1x16x64xbf16> to vector<16x64xbf16>
    %cst_12 = arith.constant dense<0.000000e+00> : vector<256x64xf32>
    %15 = tpu.matmul %12, %14, %cst_12 {dimension_numbers = #tpu.dot_dimension_numbers<[1], [0], [0], [1], [0, 0, 1, 1], [], []>} : vector<256x16xbf16>, vector<16x64xbf16>, vector<256x64xf32> -> vector<256x64xf32>
    %cst_13 = arith.constant dense<0xFF800000> : vector<256xf32>
    %16 = vector.multi_reduction <maximumf>, %15, %cst_13 [1] : vector<256x64xf32> to vector<256xf32>
    %17 = vector.shape_cast %16 : vector<256xf32> to vector<256x1xf32>
    %18 = vector.broadcast %17 : vector<256x1xf32> to vector<256x64xf32>
    %19 = arith.subf %15, %18 : vector<256x64xf32>
    %20 = math.exp %19 : vector<256x64xf32>
    %cst_14 = arith.constant dense<0.000000e+00> : vector<256xf32>
    %21 = vector.multi_reduction <add>, %20, %cst_14 [1] : vector<256x64xf32> to vector<256xf32>
    %22 = vector.shape_cast %21 : vector<256xf32> to vector<256x1xf32>
    %23 = tpu.reciprocal %22 : vector<256x1xf32> -> vector<256x1xf32>
    %24 = vector.broadcast %23 : vector<256x1xf32> to vector<256x64xf32>
    %25 = arith.mulf %20, %24 : vector<256x64xf32>
    %26 = arith.truncf %25 : vector<256x64xf32> to vector<256x64xbf16>
    %c0_15 = arith.constant 0 : index
    %c0_16 = arith.constant 0 : index
    %c0_17 = arith.constant 0 : index
    %27 = vector.load %arg19[%c0_15, %c0_16, %c0_17] : memref<2x64x16xbf16, #tpu.memory_space<vmem>>, vector<1x64x16xbf16>
    %28 = vector.shape_cast %27 : vector<1x64x16xbf16> to vector<64x16xbf16>
    %cst_18 = arith.constant dense<0.000000e+00> : vector<256x16xf32>
    %29 = tpu.matmul %26, %28, %cst_18 {dimension_numbers = #tpu.dot_dimension_numbers<[1], [0], [0], [1], [0, 0, 1, 1], [], []>} : vector<256x64xbf16>, vector<64x16xbf16>, vector<256x16xf32> -> vector<256x16xf32>
    %c1 = arith.constant 1 : index
    %c0_19 = arith.constant 0 : index
    %c0_20 = arith.constant 0 : index
    %30 = vector.load %arg9[%c1, %c0_19, %c0_20] : memref<2x32x16xbf16, #tpu.memory_space<vmem>>, vector<1x32x16xbf16>
    %31 = vector.shape_cast %30 : vector<1x32x16xbf16> to vector<32x16xbf16>
    %cst_21 = arith.constant dense<0.000000e+00> : vector<256x16xf32>
    %32 = tpu.matmul %4, %31, %cst_21 {dimension_numbers = #tpu.dot_dimension_numbers<[1], [0], [0], [1], [0, 0, 1, 1], [], []>} : vector<256x32xbf16>, vector<32x16xbf16>, vector<256x16xf32> -> vector<256x16xf32>
    %c1_22 = arith.constant 1 : index
    %c0_23 = arith.constant 0 : index
    %c0_24 = arith.constant 0 : index
    %33 = vector.load %arg10[%c1_22, %c0_23, %c0_24] : memref<2x1x16xf32, #tpu.memory_space<vmem>>, vector<1x1x16xf32>
    %34 = vector.shape_cast %33 : vector<1x1x16xf32> to vector<1x16xf32>
    %35 = vector.broadcast %34 : vector<1x16xf32> to vector<256x16xf32>
    %36 = arith.addf %32, %35 : vector<256x16xf32>
    %37 = arith.truncf %36 : vector<256x16xf32> to vector<256x16xbf16>
    %c1_25 = arith.constant 1 : index
    %c0_26 = arith.constant 0 : index
    %c0_27 = arith.constant 0 : index
    %38 = vector.load %arg18[%c1_25, %c0_26, %c0_27] : memref<2x16x64xbf16, #tpu.memory_space<vmem>>, vector<1x16x64xbf16>
    %39 = vector.shape_cast %38 : vector<1x16x64xbf16> to vector<16x64xbf16>
    %cst_28 = arith.constant dense<0.000000e+00> : vector<256x64xf32>
    %40 = tpu.matmul %37, %39, %cst_28 {dimension_numbers = #tpu.dot_dimension_numbers<[1], [0], [0], [1], [0, 0, 1, 1], [], []>} : vector<256x16xbf16>, vector<16x64xbf16>, vector<256x64xf32> -> vector<256x64xf32>
    %cst_29 = arith.constant dense<0xFF800000> : vector<256xf32>
    %41 = vector.multi_reduction <maximumf>, %40, %cst_29 [1] : vector<256x64xf32> to vector<256xf32>
    %42 = vector.shape_cast %41 : vector<256xf32> to vector<256x1xf32>
    %43 = vector.broadcast %42 : vector<256x1xf32> to vector<256x64xf32>
    %44 = arith.subf %40, %43 : vector<256x64xf32>
    %45 = math.exp %44 : vector<256x64xf32>
    %cst_30 = arith.constant dense<0.000000e+00> : vector<256xf32>
    %46 = vector.multi_reduction <add>, %45, %cst_30 [1] : vector<256x64xf32> to vector<256xf32>
    %47 = vector.shape_cast %46 : vector<256xf32> to vector<256x1xf32>
    %48 = tpu.reciprocal %47 : vector<256x1xf32> -> vector<256x1xf32>
    %49 = vector.broadcast %48 : vector<256x1xf32> to vector<256x64xf32>
    %50 = arith.mulf %45, %49 : vector<256x64xf32>
    %51 = arith.truncf %50 : vector<256x64xf32> to vector<256x64xbf16>
    %c1_31 = arith.constant 1 : index
    %c0_32 = arith.constant 0 : index
    %c0_33 = arith.constant 0 : index
    %52 = vector.load %arg19[%c1_31, %c0_32, %c0_33] : memref<2x64x16xbf16, #tpu.memory_space<vmem>>, vector<1x64x16xbf16>
    %53 = vector.shape_cast %52 : vector<1x64x16xbf16> to vector<64x16xbf16>
    %cst_34 = arith.constant dense<0.000000e+00> : vector<256x16xf32>
    %54 = tpu.matmul %51, %53, %cst_34 {dimension_numbers = #tpu.dot_dimension_numbers<[1], [0], [0], [1], [0, 0, 1, 1], [], []>} : vector<256x64xbf16>, vector<64x16xbf16>, vector<256x16xf32> -> vector<256x16xf32>
    %55 = tpu.concatenate %29, %54 in 1 : vector<256x16xf32>, vector<256x16xf32> -> vector<256x32xf32>
    %56 = arith.truncf %55 : vector<256x32xf32> to vector<256x32xbf16>
    %c0_35 = arith.constant 0 : index
    %c0_36 = arith.constant 0 : index
    %57 = vector.load %arg15[%c0_35, %c0_36] : memref<32x32xbf16, #tpu.memory_space<vmem>>, vector<32x32xbf16>
    %cst_37 = arith.constant dense<0.000000e+00> : vector<256x32xf32>
    %58 = tpu.matmul %56, %57, %cst_37 {dimension_numbers = #tpu.dot_dimension_numbers<[1], [0], [0], [1], [0, 0, 1, 1], [], []>} : vector<256x32xbf16>, vector<32x32xbf16>, vector<256x32xf32> -> vector<256x32xf32>
    %c0_38 = arith.constant 0 : index
    %c0_39 = arith.constant 0 : index
    %59 = vector.load %arg16[%c0_38, %c0_39] : memref<1x32xf32, #tpu.memory_space<vmem>>, vector<1x32xf32>
    %60 = vector.broadcast %59 : vector<1x32xf32> to vector<256x32xf32>
    %61 = arith.addf %58, %60 : vector<256x32xf32>
    %c0_40 = arith.constant 0 : index
    %c0_41 = arith.constant 0 : index
    %c0_42 = arith.constant 0 : index
    %62 = vector.load %arg17[%c0_40, %c0_41, %c0_42] : memref<1x256x32xf32, #tpu.memory_space<vmem>>, vector<1x256x32xf32>
    %63 = vector.shape_cast %62 : vector<1x256x32xf32> to vector<256x32xf32>
    %64 = vector.shape_cast %61 : vector<256x32xf32> to vector<1x256x32xf32>
    tpu.vector_store %arg17[%c0_40, %c0_41, %c0_42], %64 {strides = array<i32>} : memref<1x256x32xf32, #tpu.memory_space<vmem>>, vector<1x256x32xf32>,
    return
  }
  func.func @transform_0(%arg0: i32, %arg1: i32, %arg2: i32) -> (i32, i32, i32) {
    %c1_i32 = arith.constant 1 : i32
    %0 = arith.muli %arg1, %c1_i32 : i32
    %1 = arith.addi %0, %arg2 : i32
    %c0_i32 = arith.constant 0 : i32
    %c0_i32_0 = arith.constant 0 : i32
    return %arg0, %1, %c0_i32 : i32, i32, i32
  }
  func.func @transform_1(%arg0: i32, %arg1: i32, %arg2: i32) -> (i32, i32, i32) {
    %c0_i32 = arith.constant 0 : i32
    %c0_i32_0 = arith.constant 0 : i32
    %c0_i32_1 = arith.constant 0 : i32
    return %arg0, %c0_i32, %c0_i32_0 : i32, i32, i32
  }
  func.func @transform_2(%arg0: i32, %arg1: i32, %arg2: i32) -> (i32, i32) {
    %c0_i32 = arith.constant 0 : i32
    %c0_i32_0 = arith.constant 0 : i32
    %c0_i32_1 = arith.constant 0 : i32
    return %c0_i32, %c0_i32_0 : i32, i32
  }
  func.func @transform_3(%arg0: i32, %arg1: i32, %arg2: i32) -> (i32, i32) {
    %c0_i32 = arith.constant 0 : i32
    %c0_i32_0 = arith.constant 0 : i32
    %c0_i32_1 = arith.constant 0 : i32
    return %c0_i32, %c0_i32_0 : i32, i32
  }
  func.func @transform_4(%arg0: i32, %arg1: i32, %arg2: i32) -> (i32, i32) {
    %c0_i32 = arith.constant 0 : i32
    %c0_i32_0 = arith.constant 0 : i32
    %c0_i32_1 = arith.constant 0 : i32
    return %c0_i32, %c0_i32_0 : i32, i32
  }
  func.func @transform_5(%arg0: i32, %arg1: i32, %arg2: i32) -> (i32, i32) {
    %c0_i32 = arith.constant 0 : i32
    %c0_i32_0 = arith.constant 0 : i32
    %c0_i32_1 = arith.constant 0 : i32
    return %c0_i32, %c0_i32_0 : i32, i32
  }
  func.func @transform_6(%arg0: i32, %arg1: i32, %arg2: i32) -> (i32, i32, i32) {
    %c0_i32 = arith.constant 0 : i32
    %c0_i32_0 = arith.constant 0 : i32
    %c0_i32_1 = arith.constant 0 : i32
    %c0_i32_2 = arith.constant 0 : i32
    return %c0_i32, %c0_i32_0, %c0_i32_1 : i32, i32, i32
  }
  func.func @transform_7(%arg0: i32, %arg1: i32, %arg2: i32) -> (i32, i32, i32) {
    %c0_i32 = arith.constant 0 : i32
    %c0_i32_0 = arith.constant 0 : i32
    %c0_i32_1 = arith.constant 0 : i32
    %c0_i32_2 = arith.constant 0 : i32
    return %c0_i32, %c0_i32_0, %c0_i32_1 : i32, i32, i32
  }
  func.func @transform_8(%arg0: i32, %arg1: i32, %arg2: i32) -> (i32, i32, i32) {
    %c0_i32 = arith.constant 0 : i32
    %c0_i32_0 = arith.constant 0 : i32
    %c0_i32_1 = arith.constant 0 : i32
    %c0_i32_2 = arith.constant 0 : i32
    return %c0_i32, %c0_i32_0, %c0_i32_1 : i32, i32, i32
  }
  func.func @transform_9(%arg0: i32, %arg1: i32, %arg2: i32) -> (i32, i32, i32) {
    %c0_i32 = arith.constant 0 : i32
    %c0_i32_0 = arith.constant 0 : i32
    %c0_i32_1 = arith.constant 0 : i32
    %c0_i32_2 = arith.constant 0 : i32
    return %c0_i32, %c0_i32_0, %c0_i32_1 : i32, i32, i32
  }
  func.func @transform_10(%arg0: i32, %arg1: i32, %arg2: i32) -> (i32, i32, i32) {
    %c0_i32 = arith.constant 0 : i32
    %c0_i32_0 = arith.constant 0 : i32
    %c0_i32_1 = arith.constant 0 : i32
    %c0_i32_2 = arith.constant 0 : i32
    return %c0_i32, %c0_i32_0, %c0_i32_1 : i32, i32, i32
  }
  func.func @transform_11(%arg0: i32, %arg1: i32, %arg2: i32) -> (i32, i32, i32) {
    %c0_i32 = arith.constant 0 : i32
    %c0_i32_0 = arith.constant 0 : i32
    %c0_i32_1 = arith.constant 0 : i32
    %c0_i32_2 = arith.constant 0 : i32
    return %c0_i32, %c0_i32_0, %c0_i32_1 : i32, i32, i32
  }
  func.func @transform_12(%arg0: i32, %arg1: i32, %arg2: i32) -> (i32, i32) {
    %c0_i32 = arith.constant 0 : i32
    %c0_i32_0 = arith.constant 0 : i32
    %c0_i32_1 = arith.constant 0 : i32
    return %c0_i32, %c0_i32_0 : i32, i32
  }
  func.func @transform_13(%arg0: i32, %arg1: i32, %arg2: i32) -> (i32, i32) {
    %c0_i32 = arith.constant 0 : i32
    %c0_i32_0 = arith.constant 0 : i32
    %c0_i32_1 = arith.constant 0 : i32
    return %c0_i32, %c0_i32_0 : i32, i32
  }
  func.func @transform_14(%arg0: i32, %arg1: i32, %arg2: i32) -> (i32, i32, i32) {
    %c1_i32 = arith.constant 1 : i32
    %0 = arith.muli %arg1, %c1_i32 : i32
    %1 = arith.addi %0, %arg2 : i32
    %c0_i32 = arith.constant 0 : i32
    %c0_i32_0 = arith.constant 0 : i32
    return %arg0, %1, %c0_i32 : i32, i32, i32
  }
}

</mosaic_0001>

<llo_original>
// kernel: tpu_custom_call.1
$region0: #{tpu_custom_call.1}
  #allocation0 [shape = 'u32[]', space=smem, size = 0x4, offset = 0x4, fixed_abs, tag = 'smem constant byte address 0x4 - core index']
  #allocation1 [shape = 'u32[144,128]{1,0:T(1,128)}', space=vmem, size = 0x12000, scoped, tag = 'internal scratch']
  #allocation2 [shape = 'bf16[2,16,64]{2,1,0:T(16,128)(2,1)}', space=vmem, size = 0x2000, scoped, tag = 'scratch operand']
  #allocation3 [shape = 'bf16[2,64,16]{2,1,0:T(16,128)(2,1)}', space=vmem, size = 0x8000, scoped, tag = 'scratch operand']
  %s0 = inlined_call_operand.vmem [shape: bf16[2,256,32], index: 0, kind: input, shape index: {}]
  %s1 = inlined_call_operand.vmem [shape: bf16[2,64,128], index: 1, kind: input, shape index: {}]
  %s2 = inlined_call_operand.vmem [shape: bf16[128,32], index: 2, kind: input, shape index: {}]
  %s3 = inlined_call_operand.vmem [shape: f32[1,32], index: 3, kind: input, shape index: {}]
  %s4 = inlined_call_operand.vmem [shape: f32[1,32], index: 4, kind: input, shape index: {}]
  %s5 = inlined_call_operand.vmem [shape: f32[1,32], index: 5, kind: input, shape index: {}]
  %s6 = inlined_call_operand.vmem [shape: bf16[2,32,16], index: 6, kind: input, shape index: {}]
  %s7 = inlined_call_operand.vmem [shape: f32[2,1,16], index: 7, kind: input, shape index: {}]
  %s8 = inlined_call_operand.vmem [shape: bf16[2,16,32], index: 8, kind: input, shape index: {}]
  %s9 = inlined_call_operand.vmem [shape: f32[2,16,1], index: 9, kind: input, shape index: {}]
  %s10 = inlined_call_operand.vmem [shape: bf16[2,32,16], index: 10, kind: input, shape index: {}]
  %s11 = inlined_call_operand.vmem [shape: f32[2,1,16], index: 11, kind: input, shape index: {}]
  %s12 = inlined_call_operand.vmem [shape: bf16[32,32], index: 12, kind: input, shape index: {}]
  %s13 = inlined_call_operand.vmem [shape: f32[1,32], index: 13, kind: input, shape index: {}]
  %s14 = inlined_call_operand.vmem [shape: f32[2,256,32], index: 14, kind: output, shape index: {}]
  %s15 = sld [smem:[#allocation0]]
  $region93: #{tpu_custom_call.1} parent=0
    _
  %s17 = ssub.s32 1, %s15
  %s18 = scalar_select 0, %s17, %s15
  loop: start=0, step=1, limit=4
  $region2: #{tpu_custom_call.1} parent=0 // loop_pre_header
    _
  $region3: #{tpu_custom_call.1} parent=0 // loop_header
    %s20 = sphi 0, %s24
    %p21 = scmp.ge.s32.totalorder %s20, 4
    %s27 = sphi 0, %s46
    %s28 = sphi 0, %s42
    %s29 = sphi 0, %s38
    %s30 = sphi 0, %s27
    %s31 = sphi 0, %s28
    %s32 = sphi 0, %s29
    %s33 = sphi 0, %s30
    %s34 = sphi 0, %s31
    %s35 = sphi 0, %s32
    %s53 = sphi 0, %s55
    %s56 = sphi 0, %s53
    %s57 = sphi 0, %s56
    %s73 = sphi 0, %s57
    %s79 = sphi 0, %s81
    %s82 = sphi 0, %s79
    %s83 = sphi 0, %s82
    %s99 = sphi 0, %s83
    %s103 = sphi 0, %s103
    %s105 = sphi 0, %s103
    %s106 = sphi 0, %s105
    %s120 = sphi 0, %s106
    %s124 = sphi 0, %s124
    %s126 = sphi 0, %s124
    %s127 = sphi 0, %s126
    %s141 = sphi 0, %s127
    %s145 = sphi 0, %s145
    %s147 = sphi 0, %s145
    %s148 = sphi 0, %s147
    %s162 = sphi 0, %s148
    %s166 = sphi 0, %s166
    %s168 = sphi 0, %s166
    %s169 = sphi 0, %s168
    %s183 = sphi 0, %s169
    %s187 = sphi 0, %s187
    %s189 = sphi 0, %s187
    %s190 = sphi 0, %s189
    %s204 = sphi 0, %s190
    %s208 = sphi 0, %s208
    %s210 = sphi 0, %s208
    %s211 = sphi 0, %s210
    %s225 = sphi 0, %s211
    %s229 = sphi 0, %s229
    %s231 = sphi 0, %s229
    %s232 = sphi 0, %s231
    %s246 = sphi 0, %s232
    %s250 = sphi 0, %s250
    %s252 = sphi 0, %s250
    %s253 = sphi 0, %s252
    %s267 = sphi 0, %s253
    %s271 = sphi 0, %s271
    %s273 = sphi 0, %s271
    %s274 = sphi 0, %s273
    %s288 = sphi 0, %s274
    %s292 = sphi 0, %s292
    %s294 = sphi 0, %s292
    %s295 = sphi 0, %s294
    %s309 = sphi 0, %s295
    %s313 = sphi 0, %s313
    %s315 = sphi 0, %s313
    %s316 = sphi 0, %s315
    %s330 = sphi 0, %s316
    %s334 = sphi 0, %s334
    %s336 = sphi 0, %s334
    %s337 = sphi 0, %s336
    %s351 = sphi 0, %s337
    %s361 = sphi 0, %s363
    %s364 = sphi 0, %s361
    %s365 = sphi 0, %s364
    %s381 = sphi 0, %s365
  $region4: #{tpu_custom_call.1} parent=0 // loop_header_branch
    %23 = sbr.rel (%p21) target = $region8
  $region5: #{tpu_custom_call.1} parent=0 // loop_body
    %s25 = ssub.s32 %s20, 1
    %s26 = ssub.s32 %s20, 2
    %s36 = sadd.s32 1, %s29
    %p37 = scmp.ge.s32.totalorder %s36, 1
    %s38 = scalar_select %p37, 0, %s36
    %s39 = sadd.s32 1, %s28
    %s40 = scalar_select %p37, %s39, %s28
    %p41 = scmp.ge.s32.totalorder %s40, 1
    %s42 = scalar_select %p41, 0, %s40
    %s43 = sadd.s32 1, %s27
    %s44 = scalar_select %p41, %s43, %s27
    %p45 = scmp.ge.s32.totalorder %s44, 2
    %s46 = scalar_select %p45, 0, %s44
    %s47 = sadd.s32 %s28, %s29
    %s48 = sadd.s32 %s42, %s38
    %s49 = ssub.s32 %s27, %s46
    %s50 = ssub.s32 %s47, %s48
    %s51 = sor.u32 %s49, %s50
    %p52 = scmp.eq.s32.totalorder %s51, 0
    %s54 = sadd.s32 %s53, 1
    %s55 = scalar_select %p52, %s53, %s54
    %p58 = pneg %p52
    %p59 = scmp.eq.s32.totalorder %s20, 1
    %p60 = por %p58, %p59
    %p61 = scmp.ne.s32.totalorder %s53, %s56
    %p62 = scmp.eq.s32.totalorder %s20, 0
    %p63 = por %p61, %p62
    %p64 = scmp.ne.s32.totalorder %s53, %s56
    %p65 = scmp.eq.s32.totalorder %s25, 1
    %p66 = por %p64, %p65
    %p67 = scmp.ne.s32.totalorder %s56, %s57
    %p68 = scmp.eq.s32.totalorder %s25, 0
    %p69 = por %p67, %p68
    %p70 = scmp.ne.s32.totalorder %s56, %s57
    %p71 = scmp.eq.s32.totalorder %s26, 1
    %p72 = por %p70, %p71
    %p74 = scmp.ne.s32.totalorder %s57, %s73
    %p75 = scmp.eq.s32.totalorder %s26, 0
    %p76 = por %p74, %p75
    %s77 = ssub.s32 %s27, %s46
    %p78 = scmp.eq.s32.totalorder %s77, 0
    %s80 = sadd.s32 %s79, 1
    %s81 = scalar_select %p78, %s79, %s80
    %p84 = pneg %p78
    %p85 = scmp.eq.s32.totalorder %s20, 1
    %p86 = por %p84, %p85
    %p87 = scmp.ne.s32.totalorder %s79, %s82
    %p88 = scmp.eq.s32.totalorder %s20, 0
    %p89 = por %p87, %p88
    %p90 = scmp.ne.s32.totalorder %s79, %s82
    %p91 = scmp.eq.s32.totalorder %s25, 1
    %p92 = por %p90, %p91
    %p93 = scmp.ne.s32.totalorder %s82, %s83
    %p94 = scmp.eq.s32.totalorder %s25, 0
    %p95 = por %p93, %p94
    %p96 = scmp.ne.s32.totalorder %s82, %s83
    %p97 = scmp.eq.s32.totalorder %s26, 1
    %p98 = por %p96, %p97
    %p100 = scmp.ne.s32.totalorder %s83, %s99
    %p101 = scmp.eq.s32.totalorder %s26, 0
    %p102 = por %p100, %p101
    %s104 = sadd.s32 %s103, 1
    %p107 = scmp.eq.s32.totalorder %s20, 1
    %p108 = scmp.ne.s32.totalorder %s103, %s105
    %p109 = scmp.eq.s32.totalorder %s20, 0
    %p110 = por %p108, %p109
    %p111 = scmp.ne.s32.totalorder %s103, %s105
    %p112 = scmp.eq.s32.totalorder %s25, 1
    %p113 = por %p111, %p112
    %p114 = scmp.ne.s32.totalorder %s105, %s106
    %p115 = scmp.eq.s32.totalorder %s25, 0
    %p116 = por %p114, %p115
    %p117 = scmp.ne.s32.totalorder %s105, %s106
    %p118 = scmp.eq.s32.totalorder %s26, 1
    %p119 = por %p117, %p118
    %p121 = scmp.ne.s32.totalorder %s106, %s120
    %p122 = scmp.eq.s32.totalorder %s26, 0
    %p123 = por %p121, %p122
    %s125 = sadd.s32 %s124, 1
    %p128 = scmp.eq.s32.totalorder %s20, 1
    %p129 = scmp.ne.s32.totalorder %s124, %s126
    %p130 = scmp.eq.s32.totalorder %s20, 0
    %p131 = por %p129, %p130
    %p132 = scmp.ne.s32.totalorder %s124, %s126
    %p133 = scmp.eq.s32.totalorder %s25, 1
    %p134 = por %p132, %p133
    %p135 = scmp.ne.s32.totalorder %s126, %s127
    %p136 = scmp.eq.s32.totalorder %s25, 0
    %p137 = por %p135, %p136
    %p138 = scmp.ne.s32.totalorder %s126, %s127
    %p139 = scmp.eq.s32.totalorder %s26, 1
    %p140 = por %p138, %p139
    %p142 = scmp.ne.s32.totalorder %s127, %s141
    %p143 = scmp.eq.s32.totalorder %s26, 0
    %p144 = por %p142, %p143
    %s146 = sadd.s32 %s145, 1
    %p149 = scmp.eq.s32.totalorder %s20, 1
    %p150 = scmp.ne.s32.totalorder %s145, %s147
    %p151 = scmp.eq.s32.totalorder %s20, 0
    %p152 = por %p150, %p151
    %p153 = scmp.ne.s32.totalorder %s145, %s147
    %p154 = scmp.eq.s32.totalorder %s25, 1
    %p155 = por %p153, %p154
    %p156 = scmp.ne.s32.totalorder %s147, %s148
    %p157 = scmp.eq.s32.totalorder %s25, 0
    %p158 = por %p156, %p157
    %p159 = scmp.ne.s32.totalorder %s147, %s148
    %p160 = scmp.eq.s32.totalorder %s26, 1
    %p161 = por %p159, %p160
    %p163 = scmp.ne.s32.totalorder %s148, %s162
    %p164 = scmp.eq.s32.totalorder %s26, 0
    %p165 = por %p163, %p164
    %s167 = sadd.s32 %s166, 1
    %p170 = scmp.eq.s32.totalorder %s20, 1
    %p171 = scmp.ne.s32.totalorder %s166, %s168
    %p172 = scmp.eq.s32.totalorder %s20, 0
    %p173 = por %p171, %p172
    %p174 = scmp.ne.s32.totalorder %s166, %s168
    %p175 = scmp.eq.s32.totalorder %s25, 1
    %p176 = por %p174, %p175
    %p177 = scmp.ne.s32.totalorder %s168, %s169
    %p178 = scmp.eq.s32.totalorder %s25, 0
    %p179 = por %p177, %p178
    %p180 = scmp.ne.s32.totalorder %s168, %s169
    %p181 = scmp.eq.s32.totalorder %s26, 1
    %p182 = por %p180, %p181
    %p184 = scmp.ne.s32.totalorder %s169, %s183
    %p185 = scmp.eq.s32.totalorder %s26, 0
    %p186 = por %p184, %p185
    %s188 = sadd.s32 %s187, 1
    %p191 = scmp.eq.s32.totalorder %s20, 1
    %p192 = scmp.ne.s32.totalorder %s187, %s189
    %p193 = scmp.eq.s32.totalorder %s20, 0
    %p194 = por %p192, %p193
    %p195 = scmp.ne.s32.totalorder %s187, %s189
    %p196 = scmp.eq.s32.totalorder %s25, 1
    %p197 = por %p195, %p196
    %p198 = scmp.ne.s32.totalorder %s189, %s190
    %p199 = scmp.eq.s32.totalorder %s25, 0
    %p200 = por %p198, %p199
    %p201 = scmp.ne.s32.totalorder %s189, %s190
    %p202 = scmp.eq.s32.totalorder %s26, 1
    %p203 = por %p201, %p202
    %p205 = scmp.ne.s32.totalorder %s190, %s204
    %p206 = scmp.eq.s32.totalorder %s26, 0
    %p207 = por %p205, %p206
    %s209 = sadd.s32 %s208, 1
    %p212 = scmp.eq.s32.totalorder %s20, 1
    %p213 = scmp.ne.s32.totalorder %s208, %s210
    %p214 = scmp.eq.s32.totalorder %s20, 0
    %p215 = por %p213, %p214
    %p216 = scmp.ne.s32.totalorder %s208, %s210
    %p217 = scmp.eq.s32.totalorder %s25, 1
    %p218 = por %p216, %p217
    %p219 = scmp.ne.s32.totalorder %s210, %s211
    %p220 = scmp.eq.s32.totalorder %s25, 0
    %p221 = por %p219, %p220
    %p222 = scmp.ne.s32.totalorder %s210, %s211
    %p223 = scmp.eq.s32.totalorder %s26, 1
    %p224 = por %p222, %p223
    %p226 = scmp.ne.s32.totalorder %s211, %s225
    %p227 = scmp.eq.s32.totalorder %s26, 0
    %p228 = por %p226, %p227
    %s230 = sadd.s32 %s229, 1
    %p233 = scmp.eq.s32.totalorder %s20, 1
    %p234 = scmp.ne.s32.totalorder %s229, %s231
    %p235 = scmp.eq.s32.totalorder %s20, 0
    %p236 = por %p234, %p235
    %p237 = scmp.ne.s32.totalorder %s229, %s231
    %p238 = scmp.eq.s32.totalorder %s25, 1
    %p239 = por %p237, %p238
    %p240 = scmp.ne.s32.totalorder %s231, %s232
    %p241 = scmp.eq.s32.totalorder %s25, 0
    %p242 = por %p240, %p241
    %p243 = scmp.ne.s32.totalorder %s231, %s232
    %p244 = scmp.eq.s32.totalorder %s26, 1
    %p245 = por %p243, %p244
    %p247 = scmp.ne.s32.totalorder %s232, %s246
    %p248 = scmp.eq.s32.totalorder %s26, 0
    %p249 = por %p247, %p248
    %s251 = sadd.s32 %s250, 1
    %p254 = scmp.eq.s32.totalorder %s20, 1
    %p255 = scmp.ne.s32.totalorder %s250, %s252
    %p256 = scmp.eq.s32.totalorder %s20, 0
    %p257 = por %p255, %p256
    %p258 = scmp.ne.s32.totalorder %s250, %s252
    %p259 = scmp.eq.s32.totalorder %s25, 1
    %p260 = por %p258, %p259
    %p261 = scmp.ne.s32.totalorder %s252, %s253
    %p262 = scmp.eq.s32.totalorder %s25, 0
    %p263 = por %p261, %p262
    %p264 = scmp.ne.s32.totalorder %s252, %s253
    %p265 = scmp.eq.s32.totalorder %s26, 1
    %p266 = por %p264, %p265
    %p268 = scmp.ne.s32.totalorder %s253, %s267
    %p269 = scmp.eq.s32.totalorder %s26, 0
    %p270 = por %p268, %p269
    %s272 = sadd.s32 %s271, 1
    %p275 = scmp.eq.s32.totalorder %s20, 1
    %p276 = scmp.ne.s32.totalorder %s271, %s273
    %p277 = scmp.eq.s32.totalorder %s20, 0
    %p278 = por %p276, %p277
    %p279 = scmp.ne.s32.totalorder %s271, %s273
    %p280 = scmp.eq.s32.totalorder %s25, 1
    %p281 = por %p279, %p280
    %p282 = scmp.ne.s32.totalorder %s273, %s274
    %p283 = scmp.eq.s32.totalorder %s25, 0
    %p284 = por %p282, %p283
    %p285 = scmp.ne.s32.totalorder %s273, %s274
    %p286 = scmp.eq.s32.totalorder %s26, 1
    %p287 = por %p285, %p286
    %p289 = scmp.ne.s32.totalorder %s274, %s288
    %p290 = scmp.eq.s32.totalorder %s26, 0
    %p291 = por %p289, %p290
    %s293 = sadd.s32 %s292, 1
    %p296 = scmp.eq.s32.totalorder %s20, 1
    %p297 = scmp.ne.s32.totalorder %s292, %s294
    %p298 = scmp.eq.s32.totalorder %s20, 0
    %p299 = por %p297, %p298
    %p300 = scmp.ne.s32.totalorder %s292, %s294
    %p301 = scmp.eq.s32.totalorder %s25, 1
    %p302 = por %p300, %p301
    %p303 = scmp.ne.s32.totalorder %s294, %s295
    %p304 = scmp.eq.s32.totalorder %s25, 0
    %p305 = por %p303, %p304
    %p306 = scmp.ne.s32.totalorder %s294, %s295
    %p307 = scmp.eq.s32.totalorder %s26, 1
    %p308 = por %p306, %p307
    %p310 = scmp.ne.s32.totalorder %s295, %s309
    %p311 = scmp.eq.s32.totalorder %s26, 0
    %p312 = por %p310, %p311
    %s314 = sadd.s32 %s313, 1
    %p317 = scmp.eq.s32.totalorder %s20, 1
    %p318 = scmp.ne.s32.totalorder %s313, %s315
    %p319 = scmp.eq.s32.totalorder %s20, 0
    %p320 = por %p318, %p319
    %p321 = scmp.ne.s32.totalorder %s313, %s315
    %p322 = scmp.eq.s32.totalorder %s25, 1
    %p323 = por %p321, %p322
    %p324 = scmp.ne.s32.totalorder %s315, %s316
    %p325 = scmp.eq.s32.totalorder %s25, 0
    %p326 = por %p324, %p325
    %p327 = scmp.ne.s32.totalorder %s315, %s316
    %p328 = scmp.eq.s32.totalorder %s26, 1
    %p329 = por %p327, %p328
    %p331 = scmp.ne.s32.totalorder %s316, %s330
    %p332 = scmp.eq.s32.totalorder %s26, 0
    %p333 = por %p331, %p332
    %s335 = sadd.s32 %s334, 1
    %p338 = scmp.eq.s32.totalorder %s20, 1
    %p339 = scmp.ne.s32.totalorder %s334, %s336
    %p340 = scmp.eq.s32.totalorder %s20, 0
    %p341 = por %p339, %p340
    %p342 = scmp.ne.s32.totalorder %s334, %s336
    %p343 = scmp.eq.s32.totalorder %s25, 1
    %p344 = por %p342, %p343
    %p345 = scmp.ne.s32.totalorder %s336, %s337
    %p346 = scmp.eq.s32.totalorder %s25, 0
    %p347 = por %p345, %p346
    %p348 = scmp.ne.s32.totalorder %s336, %s337
    %p349 = scmp.eq.s32.totalorder %s26, 1
    %p350 = por %p348, %p349
    %p352 = scmp.ne.s32.totalorder %s337, %s351
    %p353 = scmp.eq.s32.totalorder %s26, 0
    %p354 = por %p352, %p353
    %s355 = sadd.s32 %s28, %s29
    %s356 = sadd.s32 %s42, %s38
    %s357 = ssub.s32 %s27, %s46
    %s358 = ssub.s32 %s355, %s356
    %s359 = sor.u32 %s357, %s358
    %p360 = scmp.eq.s32.totalorder %s359, 0
    %s362 = sadd.s32 %s361, 1
    %s363 = scalar_select %p360, %s361, %s362
    %p366 = pneg %p360
    %p367 = scmp.eq.s32.totalorder %s20, 1
    %p368 = por %p366, %p367
    %p369 = scmp.ne.s32.totalorder %s361, %s364
    %p370 = scmp.eq.s32.totalorder %s20, 0
    %p371 = por %p369, %p370
    %p372 = scmp.ne.s32.totalorder %s361, %s364
    %p373 = scmp.eq.s32.totalorder %s25, 1
    %p374 = por %p372, %p373
    %p375 = scmp.ne.s32.totalorder %s364, %s365
    %p376 = scmp.eq.s32.totalorder %s25, 0
    %p377 = por %p375, %p376
    %p378 = scmp.ne.s32.totalorder %s364, %s365
    %p379 = scmp.eq.s32.totalorder %s26, 1
    %p380 = por %p378, %p379
    %p382 = scmp.ne.s32.totalorder %s365, %s381
    %p383 = scmp.eq.s32.totalorder %s26, 0
    %p384 = por %p382, %p383
    %p385 = scmp.le.s32.totalorder 1, %s20
    %p386 = scmp.lt.s32.totalorder %s20, 3
    %p387 = pnand %p385, %p386
    %p388 = pneg %p387
    // Predicated region
    $region9: #{tpu_custom_call.1} parent=5 // pred_check
      _
    $region10: #{tpu_custom_call.1} parent=5 // pred_check_branch
      %390 = sbr.rel (%p387) target = $region12
    $region11: #{tpu_custom_call.1} parent=5 // pred_region
      %s391 = ssub.s32 %s20, 1
      // Predicated region
      $region13: #{tpu_custom_call.1} parent=11 // pred_check
        %p392 = pneg %p116
      $region14: #{tpu_custom_call.1} parent=11 // pred_check_branch
        %394 = sbr.rel (%p392) target = $region16
      $region15: #{tpu_custom_call.1} parent=11 // pred_region
        _
      $region16: #{tpu_custom_call.1} parent=11 // pred_fallthru
        _
      // Predicated region
      $region17: #{tpu_custom_call.1} parent=11 // pred_check
        %p395 = pneg %p137
      $region18: #{tpu_custom_call.1} parent=11 // pred_check_branch
        %397 = sbr.rel (%p395) target = $region20
      $region19: #{tpu_custom_call.1} parent=11 // pred_region
        _
      $region20: #{tpu_custom_call.1} parent=11 // pred_fallthru
        _
      // Predicated region
      $region21: #{tpu_custom_call.1} parent=11 // pred_check
        %p398 = pneg %p158
      $region22: #{tpu_custom_call.1} parent=11 // pred_check_branch
        %400 = sbr.rel (%p398) target = $region24
      $region23: #{tpu_custom_call.1} parent=11 // pred_region
        _
      $region24: #{tpu_custom_call.1} parent=11 // pred_fallthru
        _
      // Predicated region
      $region25: #{tpu_custom_call.1} parent=11 // pred_check
        %p401 = pneg %p179
      $region26: #{tpu_custom_call.1} parent=11 // pred_check_branch
        %403 = sbr.rel (%p401) target = $region28
      $region27: #{tpu_custom_call.1} parent=11 // pred_region
        _
      $region28: #{tpu_custom_call.1} parent=11 // pred_fallthru
        _
      // Predicated region
      $region29: #{tpu_custom_call.1} parent=11 // pred_check
        %p404 = pneg %p200
      $region30: #{tpu_custom_call.1} parent=11 // pred_check_branch
        %406 = sbr.rel (%p404) target = $region32
      $region31: #{tpu_custom_call.1} parent=11 // pred_region
        _
      $region32: #{tpu_custom_call.1} parent=11 // pred_fallthru
        _
      // Predicated region
      $region33: #{tpu_custom_call.1} parent=11 // pred_check
        %p407 = pneg %p221
      $region34: #{tpu_custom_call.1} parent=11 // pred_check_branch
        %409 = sbr.rel (%p407) target = $region36
      $region35: #{tpu_custom_call.1} parent=11 // pred_region
        _
      $region36: #{tpu_custom_call.1} parent=11 // pred_fallthru
        _
      // Predicated region
      $region37: #{tpu_custom_call.1} parent=11 // pred_check
        %p410 = pneg %p242
      $region38: #{tpu_custom_call.1} parent=11 // pred_check_branch
        %412 = sbr.rel (%p410) target = $region40
      $region39: #{tpu_custom_call.1} parent=11 // pred_region
        _
      $region40: #{tpu_custom_call.1} parent=11 // pred_fallthru
        _
      // Predicated region
      $region41: #{tpu_custom_call.1} parent=11 // pred_check
        %p413 = pneg %p263
      $region42: #{tpu_custom_call.1} parent=11 // pred_check_branch
        %415 = sbr.rel (%p413) target = $region44
      $region43: #{tpu_custom_call.1} parent=11 // pred_region
        _
      $region44: #{tpu_custom_call.1} parent=11 // pred_fallthru
        _
      // Predicated region
      $region45: #{tpu_custom_call.1} parent=11 // pred_check
        %p416 = pneg %p284
      $region46: #{tpu_custom_call.1} parent=11 // pred_check_branch
        %418 = sbr.rel (%p416) target = $region48
      $region47: #{tpu_custom_call.1} parent=11 // pred_region
        _
      $region48: #{tpu_custom_call.1} parent=11 // pred_fallthru
        _
      // Predicated region
      $region49: #{tpu_custom_call.1} parent=11 // pred_check
        %p419 = pneg %p305
      $region50: #{tpu_custom_call.1} parent=11 // pred_check_branch
        %421 = sbr.rel (%p419) target = $region52
      $region51: #{tpu_custom_call.1} parent=11 // pred_region
        _
      $region52: #{tpu_custom_call.1} parent=11 // pred_fallthru
        _
      // Predicated region
      $region53: #{tpu_custom_call.1} parent=11 // pred_check
        %p422 = pneg %p326
      $region54: #{tpu_custom_call.1} parent=11 // pred_check_branch
        %424 = sbr.rel (%p422) target = $region56
      $region55: #{tpu_custom_call.1} parent=11 // pred_region
        _
      $region56: #{tpu_custom_call.1} parent=11 // pred_fallthru
        _
      // Predicated region
      $region57: #{tpu_custom_call.1} parent=11 // pred_check
        %p425 = pneg %p347
      $region58: #{tpu_custom_call.1} parent=11 // pred_check_branch
        %427 = sbr.rel (%p425) target = $region60
      $region59: #{tpu_custom_call.1} parent=11 // pred_region
        _
      $region60: #{tpu_custom_call.1} parent=11 // pred_fallthru
        _
    $region12: #{tpu_custom_call.1} parent=5 // pred_fallthru
      _
    %p428 = scmp.lt.s32.totalorder %s20, 2
    // Predicated region
    $region61: #{tpu_custom_call.1} parent=5 // pred_check
      %p429 = pneg %p428
    $region62: #{tpu_custom_call.1} parent=5 // pred_check_branch
      %431 = sbr.rel (%p429) target = $region64
    $region63: #{tpu_custom_call.1} parent=5 // pred_region
      // Predicated region
      $region65: #{tpu_custom_call.1} parent=63 // pred_check
        %p432 = pneg %p63
      $region66: #{tpu_custom_call.1} parent=63 // pred_check_branch
        %434 = sbr.rel (%p432) target = $region68
      $region67: #{tpu_custom_call.1} parent=63 // pred_region
        %s435 = sadd.s32 %s28, %s29
        %s436 = smul.u32 32, %s435
        %p437 = scmp.lt.s32.totalorder %s27, 1
        %s438 = scalar_select %p437, %s27, 1
        %p439 = scmp.lt.s32.totalorder %s436, 31
        %s440 = scalar_select %p439, %s436, 31
        %s441 = smul.addr %s438, 32
        %s442 = sadd.s32 %s440, %s441
        %s443 = smul.addr %s442, 4
        %s444 = scalar_lea.vmem %s0, %s443
        %s445 = sadd.s32 %s28, %s29
        %s446 = smul.u32 32, %s445
      $region68: #{tpu_custom_call.1} parent=63 // pred_fallthru
        _
      // Predicated region
      $region69: #{tpu_custom_call.1} parent=63 // pred_check
        %p447 = pneg %p89
      $region70: #{tpu_custom_call.1} parent=63 // pred_check_branch
        %449 = sbr.rel (%p447) target = $region72
      $region71: #{tpu_custom_call.1} parent=63 // pred_region
        %p450 = scmp.lt.s32.totalorder %s27, 1
        %s451 = scalar_select %p450, %s27, 1
        %s452 = smul.addr %s451, 8
        %s453 = smul.addr %s452, 4
        %s454 = scalar_lea.vmem %s1, %s453
      $region72: #{tpu_custom_call.1} parent=63 // pred_fallthru
        _
    $region64: #{tpu_custom_call.1} parent=5 // pred_fallthru
      _
    %p455 = scmp.le.s32.totalorder 1, %s20
    %p456 = scmp.lt.s32.totalorder %s20, 3
    %p457 = pnand %p455, %p456
    %p458 = pneg %p457
    // Predicated region
    $region73: #{tpu_custom_call.1} parent=5 // pred_check
      _
    $region74: #{tpu_custom_call.1} parent=5 // pred_check_branch
      %460 = sbr.rel (%p457) target = $region76
    $region75: #{tpu_custom_call.1} parent=5 // pred_region
      %s461 = ssub.s32 %s20, 1
      %s462 = sadd.s32 %s31, %s32
      %s463 = smul.u32 32, %s462
      %p464 = scmp.lt.s32.totalorder %s30, 1
      %s465 = scalar_select %p464, %s30, 1
      %p466 = scmp.lt.s32.totalorder %s463, 31
      %s467 = scalar_select %p466, %s463, 31
      %s468 = smul.addr %s465, 32
      %s469 = sadd.s32 %s467, %s468
      %s470 = smul.addr %s469, 4
      %s471 = scalar_lea.vmem %s0, %s470
      %p472 = pneg %p69
      %p473 = pneg %p66
      %p474 = scmp.lt.s32.totalorder %s30, 1
      %s475 = scalar_select %p474, %s30, 1
      %s476 = smul.addr %s475, 8
      %s477 = smul.addr %s476, 4
      %s478 = scalar_lea.vmem %s1, %s477
      %p479 = pneg %p95
      %p480 = pneg %p92
      %p481 = pneg %p116
      %p482 = pneg %p113
      %p483 = pneg %p137
      %p484 = pneg %p134
      %p485 = pneg %p158
      %p486 = pneg %p155
      %p487 = pneg %p179
      %p488 = pneg %p176
      %p489 = pneg %p200
      %p490 = pneg %p197
      %p491 = pneg %p221
      %p492 = pneg %p218
      %p493 = pneg %p242
      %p494 = pneg %p239
      %p495 = pneg %p263
      %p496 = pneg %p260
      %p497 = pneg %p284
      %p498 = pneg %p281
      %p499 = pneg %p305
      %p500 = pneg %p302
      %p501 = pneg %p326
      %p502 = pneg %p323
      %p503 = pneg %p347
      %p504 = pneg %p344
      %p505 = pneg %p377
      %p506 = pneg %p374
      %s507 = sadd.s32 %s31, %s32
      %s508 = smul.u32 32, %s507
      %p509 = scmp.lt.s32.totalorder %s30, 1
      %s510 = scalar_select %p509, %s30, 1
      %p511 = scmp.lt.s32.totalorder %s508, 31
      %s512 = scalar_select %p511, %s508, 31
      %s513 = smul.addr %s510, 32
      %s514 = sadd.s32 %s512, %s513
      %s515 = smul.addr %s514, 8
      %s516 = scalar_lea.vmem %s14, %s515
      %s517 = sadd.s32 %s31, %s32
      %s518 = smul.u32 32, %s517
      %p519 = scmp.lt.s32.totalorder %s30, 1
      %s520 = scalar_select %p519, %s30, 1
      %p521 = scmp.lt.s32.totalorder %s518, 31
      %s522 = scalar_select %p521, %s518, 31
      %s523 = smul.addr %s520, 32
      %s524 = sadd.s32 %s522, %s523
      %s525 = smul.addr %s524, 4
      %s526 = scalar_lea.vmem %s0, %s525
      %s527 = sadd.s32 %s31, %s32
      %s528 = smul.u32 32, %s527
      %p529 = scmp.lt.s32.totalorder %s30, 1
      %s530 = scalar_select %p529, %s30, 1
      %s531 = smul.addr %s530, 8
      %s532 = smul.addr %s531, 4
      %s533 = scalar_lea.vmem %s1, %s532
      %s534 = sadd.s32 %s31, %s32
      %s535 = smul.u32 32, %s534
      %p536 = scmp.lt.s32.totalorder %s30, 1
      %s537 = scalar_select %p536, %s30, 1
      %p538 = scmp.lt.s32.totalorder %s535, 31
      %s539 = scalar_select %p538, %s535, 31
      %s540 = smul.addr %s537, 32
      %s541 = sadd.s32 %s539, %s540
      %s542 = smul.addr %s541, 8
      %s543 = scalar_lea.vmem %s14, %s542
      %s544 = sadd.s32 %s31, %s32
      %s545 = smul.u32 32, %s544
      %p547 = scmp.eq.s32.totalorder %s32, 0
      // Predicated region
      $region77: #{tpu_custom_call.1} parent=75 // pred_check
        %p548 = pneg %p547
      $region78: #{tpu_custom_call.1} parent=75 // pred_check_branch
        %550 = sbr.rel (%p548) target = $region80
      $region79: #{tpu_custom_call.1} parent=75 // pred_region
        %v551 = vld [vmem:[%s533] sm:$0xf]
        %v552 = vld [vmem:[%s533 + $0x4] sm:$0xf]
        %v553 = vld [vmem:[%s533 + $0x8] sm:$0xf]
        %v554 = vld [vmem:[%s533 + $0xc] sm:$0xf]
        %v555 = vld [vmem:[%s533 + $0x10] sm:$0xf]
        %v556 = vld [vmem:[%s533 + $0x14] sm:$0xf]
        %v557 = vld [vmem:[%s533 + $0x18] sm:$0xf]
        %v558 = vld [vmem:[%s533 + $0x1c] sm:$0xf]
        %v559 = vld [vmem:[%s2] sm:$0xf]
        %v560 = vld [vmem:[%s2 + $0x4] sm:$0xf]
        %v561 = vld [vmem:[%s2 + $0x8] sm:$0xf]
        %v562 = vld [vmem:[%s2 + $0xc] sm:$0xf]
        %v563 = vld [vmem:[%s2 + $0x10] sm:$0xf]
        %v564 = vld [vmem:[%s2 + $0x14] sm:$0xf]
        %v565 = vld [vmem:[%s2 + $0x18] sm:$0xf]
        %v566 = vld [vmem:[%s2 + $0x1c] sm:$0xf]
        %v567 = vld [vmem:[%s2 + $0x20] sm:$0xf]
        %v568 = vld [vmem:[%s2 + $0x24] sm:$0xf]
        %v569 = vld [vmem:[%s2 + $0x28] sm:$0xf]
        %v570 = vld [vmem:[%s2 + $0x2c] sm:$0xf]
        %v571 = vld [vmem:[%s2 + $0x30] sm:$0xf]
        %v572 = vld [vmem:[%s2 + $0x34] sm:$0xf]
        %v573 = vld [vmem:[%s2 + $0x38] sm:$0xf]
        %v574 = vld [vmem:[%s2 + $0x3c] sm:$0xf]
        %v575 = vld [vmem:[%s3] sm:$0x1]
        %v577 = vlaneseq
        %v578 = vshrl.u32 %v577, 7
        %v579 = vsub.s32 0, %v578
        %v580 = vrot.slane %v575, %v579
        %v590 = vunpack.c.l.b16 %v551
        %v591 = vunpack.c.l.b16 %v552
        %v592 = vunpack.c.l.b16 %v553
        %v593 = vunpack.c.l.b16 %v554
        %v594 = vunpack.c.l.b16 %v555
        %v595 = vunpack.c.l.b16 %v556
        %v596 = vunpack.c.l.b16 %v557
        %v597 = vunpack.c.l.b16 %v558
        %v598 = vpack.c.b16 %v591, %v590
        %v599 = vpack.c.b16 %v593, %v592
        %v600 = vpack.c.b16 %v595, %v594
        %v601 = vpack.c.b16 %v597, %v596
        %v622 = vunpack.c.l.b16 %v559
        %v623 = vunpack.c.l.b16 %v560
        %v624 = vunpack.c.l.b16 %v561
        %v625 = vunpack.c.l.b16 %v562
        %v626 = vunpack.c.l.b16 %v563
        %v627 = vunpack.c.l.b16 %v564
        %v628 = vunpack.c.l.b16 %v565
        %v629 = vunpack.c.l.b16 %v566
        %v630 = vunpack.c.l.b16 %v567
        %v631 = vunpack.c.l.b16 %v568
        %v632 = vunpack.c.l.b16 %v569
        %v633 = vunpack.c.l.b16 %v570
        %v634 = vunpack.c.l.b16 %v571
        %v635 = vunpack.c.l.b16 %v572
        %v636 = vunpack.c.l.b16 %v573
        %v637 = vunpack.c.l.b16 %v574
        %v638 = vpack.c.b16 %v623, %v622
        %v639 = vpack.c.b16 %v625, %v624
        %v640 = vpack.c.b16 %v627, %v626
        %v641 = vpack.c.b16 %v629, %v628
        %v642 = vpack.c.b16 %v631, %v630
        %v643 = vpack.c.b16 %v633, %v632
        %v644 = vpack.c.b16 %v635, %v634
        %v645 = vpack.c.b16 %v637, %v636
        %654 = vmatprep.subr.bf16.mxu0 0
        %655 = vmatpush1.bf16.msra.mxu0 %v638
        %656 = vmatprep.subr.bf16.mxu0 0
        %657 = vmatpush1.bf16.msra.mxu0 %v639
        %658 = vmatprep.subr.bf16.mxu0 0
        %659 = vmatpush1.bf16.msra.mxu0 %v640
        %660 = vmatprep.subr.bf16.mxu0 0
        %661 = vmatpush1.bf16.msra.mxu0 %v641
        %662 = vmatprep.subr.bf16.mxu0 0
        %663 = vmatpush1.bf16.msra.mxu0 %v642
        %664 = vmatprep.subr.bf16.mxu0 0
        %665 = vmatpush1.bf16.msra.mxu0 %v643
        %666 = vmatprep.subr.bf16.mxu0 0
        %667 = vmatpush1.bf16.msra.mxu0 %v644
        %668 = vmatprep.subr.bf16.mxu0 0
        %669 = vmatpush1.bf16.msra.mxu0 %v645
        %670 = vmatprep.subr.bf16.mxu0 0
        %671 = vmatpush1.bf16.msra.mxu0 0
        %672 = vmatprep.subr.bf16.mxu0 0
        %673 = vmatpush1.bf16.msra.mxu0 0
        %674 = vmatprep.subr.bf16.mxu0 0
        %675 = vmatpush1.bf16.msra.mxu0 0
        %676 = vmatprep.subr.bf16.mxu0 0
        %677 = vmatpush1.bf16.msra.mxu0 0
        %678 = vmatprep.subr.bf16.mxu0 0
        %679 = vmatpush1.bf16.msra.mxu0 0
        %680 = vmatprep.subr.bf16.mxu0 0
        %681 = vmatpush1.bf16.msra.mxu0 0
        %682 = vmatprep.subr.bf16.mxu0 0
        %683 = vmatpush1.bf16.msra.mxu0 0
        %684 = vmatprep.subr.bf16.mxu0 0
        %685 = vmatpush1.bf16.msra.mxu0 0
        %686 = vmatprep.mubr.bf16.mxu0 0
        %687 = vmatmul.mubr.bf16.gmra.mrb[0].mxu0 %v598
        %v688 = vpop.f32.mrb[0].mxu0
        %v689 = vadd.f32 %v580, %v688
        %v690 = vpop.f32.mrb[0].mxu0
        %v691 = vpop.f32.mrb[0].mxu0
        %v692 = vadd.f32 %v580, %v691
        %v693 = vpop.f32.mrb[0].mxu0
        %694 = vmatprep.mubr.bf16.mxu0 0
        %695 = vmatmul.mubr.bf16.gmra.mrb[0].mxu0 %v599
        %v696 = vpop.f32.mrb[0].mxu0
        %v697 = vadd.f32 %v580, %v696
        %v698 = vpop.f32.mrb[0].mxu0
        %v699 = vpop.f32.mrb[0].mxu0
        %v700 = vadd.f32 %v580, %v699
        %v701 = vpop.f32.mrb[0].mxu0
        %702 = vmatprep.mubr.bf16.mxu0 0
        %703 = vmatmul.mubr.bf16.gmra.mrb[0].mxu0 %v600
        %v704 = vpop.f32.mrb[0].mxu0
        %v705 = vadd.f32 %v580, %v704
        %v706 = vpop.f32.mrb[0].mxu0
        %v707 = vpop.f32.mrb[0].mxu0
        %v708 = vadd.f32 %v580, %v707
        %v709 = vpop.f32.mrb[0].mxu0
        %710 = vmatprep.mubr.bf16.mxu0 0
        %711 = vmatmul.mubr.bf16.gmra.mrb[0].mxu0 %v601
        %v712 = vpop.f32.mrb[0].mxu0
        %v713 = vadd.f32 %v580, %v712
        %v714 = vpop.f32.mrb[0].mxu0
        %v715 = vpop.f32.mrb[0].mxu0
        %v716 = vadd.f32 %v580, %v715
        %v717 = vpop.f32.mrb[0].mxu0
        %718 = vdwg.mxu0
        %vm719 = vcmask 261120
        %v720 = vsel %vm719, %v689, 0.0
        %721 = vadd.xlane.f32.xlu0 %v720
        %v722 = vpop.xlane.xlu0 %721
        %v723 = vsel %vm719, %v692, 0.0
        %724 = vadd.xlane.f32.xlu0 %v723
        %v725 = vpop.xlane.xlu0 %724
        %v726 = vsel %vm719, %v697, 0.0
        %727 = vadd.xlane.f32.xlu0 %v726
        %v728 = vpop.xlane.xlu0 %727
        %v729 = vsel %vm719, %v700, 0.0
        %730 = vadd.xlane.f32.xlu0 %v729
        %v731 = vpop.xlane.xlu0 %730
        %v732 = vsel %vm719, %v705, 0.0
        %733 = vadd.xlane.f32.xlu0 %v732
        %v734 = vpop.xlane.xlu0 %733
        %v735 = vsel %vm719, %v708, 0.0
        %736 = vadd.xlane.f32.xlu0 %v735
        %v737 = vpop.xlane.xlu0 %736
        %v738 = vsel %vm719, %v713, 0.0
        %739 = vadd.xlane.f32.xlu0 %v738
        %v740 = vpop.xlane.xlu0 %739
        %v741 = vsel %vm719, %v716, 0.0
        %742 = vadd.xlane.f32.xlu0 %v741
        %v743 = vpop.xlane.xlu0 %742
        %v744 = vrcp.pop 32.0
        %v745 = vmul.f32 %v722, %v744
        %v746 = vmul.f32 %v725, %v744
        %v747 = vmul.f32 %v728, %v744
        %v748 = vmul.f32 %v731, %v744
        %v749 = vmul.f32 %v734, %v744
        %v750 = vmul.f32 %v737, %v744
        %v751 = vmul.f32 %v740, %v744
        %v752 = vmul.f32 %v743, %v744
        %v753 = vsub.f32 %v689, %v745
        %v754 = vsub.f32 %v692, %v746
        %v755 = vsub.f32 %v697, %v747
        %v756 = vsub.f32 %v700, %v748
        %v757 = vsub.f32 %v705, %v749
        %v758 = vsub.f32 %v708, %v750
        %v759 = vsub.f32 %v713, %v751
        %v760 = vsub.f32 %v716, %v752
        %v761 = vmul.f32 %v753, %v753
        %v762 = vmul.f32 %v754, %v754
        %v763 = vmul.f32 %v755, %v755
        %v764 = vmul.f32 %v756, %v756
        %v765 = vmul.f32 %v757, %v757
        %v766 = vmul.f32 %v758, %v758
        %v767 = vmul.f32 %v759, %v759
        %v768 = vmul.f32 %v760, %v760
        %v769 = vsel %vm719, %v761, 0.0
        %770 = vadd.xlane.f32.xlu0 %v769
        %v771 = vpop.xlane.xlu0 %770
        %v772 = vsel %vm719, %v762, 0.0
        %773 = vadd.xlane.f32.xlu0 %v772
        %v774 = vpop.xlane.xlu0 %773
        %v775 = vsel %vm719, %v763, 0.0
        %776 = vadd.xlane.f32.xlu0 %v775
        %v777 = vpop.xlane.xlu0 %776
        %v778 = vsel %vm719, %v764, 0.0
        %779 = vadd.xlane.f32.xlu0 %v778
        %v780 = vpop.xlane.xlu0 %779
        %v781 = vsel %vm719, %v765, 0.0
        %782 = vadd.xlane.f32.xlu0 %v781
        %v783 = vpop.xlane.xlu0 %782
        %v784 = vsel %vm719, %v766, 0.0
        %785 = vadd.xlane.f32.xlu0 %v784
        %v786 = vpop.xlane.xlu0 %785
        %v787 = vsel %vm719, %v767, 0.0
        %788 = vadd.xlane.f32.xlu0 %v787
        %v789 = vpop.xlane.xlu0 %788
        %v790 = vsel %vm719, %v768, 0.0
        %791 = vadd.xlane.f32.xlu0 %v790
        %v792 = vpop.xlane.xlu0 %791
        %v793 = vmul.f32 %v771, %v744
        %v794 = vmul.f32 %v774, %v744
        %v795 = vmul.f32 %v777, %v744
        %v796 = vmul.f32 %v780, %v744
        %v797 = vmul.f32 %v783, %v744
        %v798 = vmul.f32 %v786, %v744
        %v799 = vmul.f32 %v789, %v744
        %v800 = vmul.f32 %v792, %v744
        %v801 = vadd.f32 %v793, 1e-05
        %v802 = vadd.f32 %v794, 1e-05
        %v803 = vadd.f32 %v795, 1e-05
        %v804 = vadd.f32 %v796, 1e-05
        %v805 = vadd.f32 %v797, 1e-05
        %v806 = vadd.f32 %v798, 1e-05
        %v807 = vadd.f32 %v799, 1e-05
        %v808 = vadd.f32 %v800, 1e-05
        %v809 = vrsqrt.pop %v801
        %v810 = vrsqrt.pop %v802
        %v811 = vrsqrt.pop %v803
        %v812 = vrsqrt.pop %v804
        %v813 = vrsqrt.pop %v805
        %v814 = vrsqrt.pop %v806
        %v815 = vrsqrt.pop %v807
        %v816 = vrsqrt.pop %v808
        %v817 = vmul.f32 %v753, %v809
        %v818 = vmul.f32 %v754, %v810
        %v819 = vmul.f32 %v755, %v811
        %v820 = vmul.f32 %v756, %v812
        %v821 = vmul.f32 %v757, %v813
        %v822 = vmul.f32 %v758, %v814
        %v823 = vmul.f32 %v759, %v815
        %v824 = vmul.f32 %v760, %v816
        %v825 = vld [vmem:[%s4] sm:$0x1]
        %v827 = vlaneseq
        %v828 = vshrl.u32 %v827, 7
        %v829 = vsub.s32 0, %v828
        %v830 = vrot.slane %v825, %v829
        %v832 = vmul.f32 %v817, %v830
        %v833 = vmul.f32 %v818, %v830
        %v834 = vmul.f32 %v819, %v830
        %v835 = vmul.f32 %v820, %v830
        %v836 = vmul.f32 %v821, %v830
        %v837 = vmul.f32 %v822, %v830
        %v838 = vmul.f32 %v823, %v830
        %v839 = vmul.f32 %v824, %v830
        %v840 = vld [vmem:[%s5] sm:$0x1]
        %v842 = vlaneseq
        %v843 = vshrl.u32 %v842, 7
        %v844 = vsub.s32 0, %v843
        %v845 = vrot.slane %v840, %v844
        %v847 = vadd.f32 %v832, %v845
        %v848 = vadd.f32 %v833, %v845
        %v849 = vadd.f32 %v834, %v845
        %v850 = vadd.f32 %v835, %v845
        %v851 = vadd.f32 %v836, %v845
        %v852 = vadd.f32 %v837, %v845
        %v853 = vadd.f32 %v838, %v845
        %v854 = vadd.f32 %v839, %v845
        %v855 = vpack.c.bf16 %v848, %v847
        %v856 = vpack.c.bf16 %v850, %v849
        %v857 = vpack.c.bf16 %v852, %v851
        %v858 = vpack.c.bf16 %v854, %v853
        %v859 = vld [vmem:[%s8] sm:$0xf]
        %v860 = vld [vmem:[%s8 + $0x4] sm:$0xf]
        %v861 = vld [vmem:[%s9] sm:$0xff]
        %v862 = vld [vmem:[%s9 + $0x8] sm:$0xff]
        %864 = vset.pattern.permute.xlu0 0
        %865 = vperm.xlu0 %864, %v861
        %v866 = vpop.permute.xlu0 %865
        %869 = vset.pattern.permute.xlu0 0
        %870 = vperm.xlu0 %869, %v862
        %v871 = vpop.permute.xlu0 %870
        %v875 = vunpack.c.l.b16 %v859
        %v876 = vunpack.c.l.b16 %v860
        %v877 = vpack.c.b16 %v876, %v875
        %v879 = vsel %vm719, %v877, 0
        %v882 = vsel %vm719, %v855, 0
        %v885 = vsel %vm719, %v856, 0
        %v888 = vsel %vm719, %v857, 0
        %v891 = vsel %vm719, %v858, 0
        %893 = vmatprep.subr.bf16.mxu0 0
        %894 = vmatpush1.bf16.xpose.msra.mxu0 %v882
        %895 = vmatprep.subr.bf16.mxu0 0
        %896 = vmatpush1.bf16.xpose.msra.mxu0 %v885
        %897 = vmatprep.subr.bf16.mxu0 0
        %898 = vmatpush1.bf16.xpose.msra.mxu0 %v888
        %899 = vmatprep.subr.bf16.mxu0 0
        %900 = vmatpush1.bf16.xpose.msra.mxu0 %v891
        %901 = vmatprep.subr.bf16.mxu0 0
        %902 = vmatpush1.bf16.xpose.msra.mxu0 0
        %903 = vmatprep.subr.bf16.mxu0 0
        %904 = vmatpush1.bf16.xpose.msra.mxu0 0
        %905 = vmatprep.subr.bf16.mxu0 0
        %906 = vmatpush1.bf16.xpose.msra.mxu0 0
        %907 = vmatprep.subr.bf16.mxu0 0
        %908 = vmatpush1.bf16.xpose.msra.mxu0 0
        %909 = vmatprep.subr.bf16.mxu0 0
        %910 = vmatpush1.bf16.xpose.msra.mxu0 0
        %911 = vmatprep.subr.bf16.mxu0 0
        %912 = vmatpush1.bf16.xpose.msra.mxu0 0
        %913 = vmatprep.subr.bf16.mxu0 0
        %914 = vmatpush1.bf16.xpose.msra.mxu0 0
        %915 = vmatprep.subr.bf16.mxu0 0
        %916 = vmatpush1.bf16.xpose.msra.mxu0 0
        %917 = vmatprep.subr.bf16.mxu0 0
        %918 = vmatpush1.bf16.xpose.msra.mxu0 0
        %919 = vmatprep.subr.bf16.mxu0 0
        %920 = vmatpush1.bf16.xpose.msra.mxu0 0
        %921 = vmatprep.subr.bf16.mxu0 0
        %922 = vmatpush1.bf16.xpose.msra.mxu0 0
        %923 = vmatprep.subr.bf16.mxu0 0
        %924 = vmatpush1.bf16.xpose.msra.mxu0 0
        %925 = vmatprep.mubr.bf16.mxu0 0
        %926 = vmatmul.mubr.bf16.gmra.mrb[0].mxu0 %v879
        %v927 = vpop.f32.mrb[0].mxu0
        %v928 = vadd.f32 %v866, %v927
        %v929 = vpop.f32.mrb[0].mxu0
        %v930 = vpop.f32.mrb[0].mxu0
        %v931 = vadd.f32 %v871, %v930
        %v932 = vpop.f32.mrb[0].mxu0
        %933 = vdwg.mxu0
        %v934 = vpack.c.bf16 %v931, %v928
        %vm935 = vcmask 523264
        %936 = vst.msk [vmem:[#allocation2] sm:$0xff] %vm935, %v934
        %v937 = vld [vmem:[%s10] sm:$0xf]
        %v938 = vld [vmem:[%s10 + $0x4] sm:$0xf]
        %v939 = vld [vmem:[%s10 + $0x8] sm:$0xf]
        %v940 = vld [vmem:[%s10 + $0xc] sm:$0xf]
        %v941 = vld [vmem:[%s11] sm:$0x1]
        %v943 = vlaneseq
        %v944 = vshrl.u32 %v943, 7
        %v945 = vsub.s32 0, %v944
        %v946 = vrot.slane %v941, %v945
        %v952 = vunpack.c.l.b16 %v937
        %v953 = vunpack.c.l.b16 %v938
        %v954 = vunpack.c.l.b16 %v939
        %v955 = vunpack.c.l.b16 %v940
        %v956 = vpack.c.b16 %v953, %v952
        %v957 = vpack.c.b16 %v955, %v954
        %960 = vmatprep.subr.bf16.mxu0 0
        %961 = vmatpush1.bf16.msra.mxu0 %v956
        %962 = vmatprep.subr.bf16.mxu0 0
        %963 = vmatpush1.bf16.msra.mxu0 %v957
        %964 = vmatprep.subr.bf16.mxu0 0
        %965 = vmatpush1.bf16.msra.mxu0 0
        %966 = vmatprep.subr.bf16.mxu0 0
        %967 = vmatpush1.bf16.msra.mxu0 0
        %968 = vmatprep.subr.bf16.mxu0 0
        %969 = vmatpush1.bf16.msra.mxu0 0
        %970 = vmatprep.subr.bf16.mxu0 0
        %971 = vmatpush1.bf16.msra.mxu0 0
        %972 = vmatprep.subr.bf16.mxu0 0
        %973 = vmatpush1.bf16.msra.mxu0 0
        %974 = vmatprep.subr.bf16.mxu0 0
        %975 = vmatpush1.bf16.msra.mxu0 0
        %976 = vmatprep.subr.bf16.mxu0 0
        %977 = vmatpush1.bf16.msra.mxu0 0
        %978 = vmatprep.subr.bf16.mxu0 0
        %979 = vmatpush1.bf16.msra.mxu0 0
        %980 = vmatprep.subr.bf16.mxu0 0
        %981 = vmatpush1.bf16.msra.mxu0 0
        %982 = vmatprep.subr.bf16.mxu0 0
        %983 = vmatpush1.bf16.msra.mxu0 0
        %984 = vmatprep.subr.bf16.mxu0 0
        %985 = vmatpush1.bf16.msra.mxu0 0
        %986 = vmatprep.subr.bf16.mxu0 0
        %987 = vmatpush1.bf16.msra.mxu0 0
        %988 = vmatprep.subr.bf16.mxu0 0
        %989 = vmatpush1.bf16.msra.mxu0 0
        %990 = vmatprep.subr.bf16.mxu0 0
        %991 = vmatpush1.bf16.msra.mxu0 0
        %992 = vmatprep.mubr.bf16.mxu0 0
        %993 = vmatmul.mubr.bf16.gmra.mrb[0].mxu0 %v882
        %v994 = vpop.f32.mrb[0].mxu0
        %v995 = vadd.f32 %v946, %v994
        %v996 = vpop.f32.mrb[0].mxu0
        %v997 = vpop.f32.mrb[0].mxu0
        %v998 = vadd.f32 %v946, %v997
        %v999 = vpop.f32.mrb[0].mxu0
        %1000 = vmatprep.mubr.bf16.mxu0 0
        %1001 = vmatmul.mubr.bf16.gmra.mrb[0].mxu0 %v885
        %v1002 = vpop.f32.mrb[0].mxu0
        %v1003 = vadd.f32 %v946, %v1002
        %v1004 = vpop.f32.mrb[0].mxu0
        %v1005 = vpop.f32.mrb[0].mxu0
        %v1006 = vadd.f32 %v946, %v1005
        %v1007 = vpop.f32.mrb[0].mxu0
        %1008 = vmatprep.mubr.bf16.mxu0 0
        %1009 = vmatmul.mubr.bf16.gmra.mrb[0].mxu0 %v888
        %v1010 = vpop.f32.mrb[0].mxu0
        %v1011 = vadd.f32 %v946, %v1010
        %v1012 = vpop.f32.mrb[0].mxu0
        %v1013 = vpop.f32.mrb[0].mxu0
        %v1014 = vadd.f32 %v946, %v1013
        %v1015 = vpop.f32.mrb[0].mxu0
        %1016 = vmatprep.mubr.bf16.mxu0 0
        %1017 = vmatmul.mubr.bf16.gmra.mrb[0].mxu0 %v891
        %v1018 = vpop.f32.mrb[0].mxu0
        %v1019 = vadd.f32 %v946, %v1018
        %v1020 = vpop.f32.mrb[0].mxu0
        %v1021 = vpop.f32.mrb[0].mxu0
        %v1022 = vadd.f32 %v946, %v1021
        %v1023 = vpop.f32.mrb[0].mxu0
        %1024 = vdwg.mxu0
        %v1025 = vpack.c.bf16 %v998, %v995
        %v1026 = vpack.c.bf16 %v1006, %v1003
        %v1027 = vpack.c.bf16 %v1014, %v1011
        %v1028 = vpack.c.bf16 %v1022, %v1019
        %vm1029 = vcmask 130048
        %1030 = vst.msk [vmem:[#allocation3] sm:$0xff] %vm1029, %v1025
        %1031 = vst.msk [vmem:[#allocation3 + $0x8] sm:$0xff] %vm1029, %v1026
        %1032 = vst.msk [vmem:[#allocation3 + $0x10] sm:$0xff] %vm1029, %v1027
        %1033 = vst.msk [vmem:[#allocation3 + $0x18] sm:$0xff] %vm1029, %v1028
        %s1034 = scalar_lea.vmem %s8, 8
        %v1035 = vld [vmem:[%s1034] sm:$0xf]
        %v1036 = vld [vmem:[%s1034 + $0x4] sm:$0xf]
        %s1037 = scalar_lea.vmem %s9, 16
        %v1038 = vld [vmem:[%s1037] sm:$0xff]
        %v1039 = vld [vmem:[%s1037 + $0x8] sm:$0xff]
        %1041 = vset.pattern.permute.xlu0 0
        %1042 = vperm.xlu0 %1041, %v1038
        %v1043 = vpop.permute.xlu0 %1042
        %1046 = vset.pattern.permute.xlu0 0
        %1047 = vperm.xlu0 %1046, %v1039
        %v1048 = vpop.permute.xlu0 %1047
        %v1052 = vunpack.c.l.b16 %v1035
        %v1053 = vunpack.c.l.b16 %v1036
        %v1054 = vpack.c.b16 %v1053, %v1052
        %v1056 = vsel %vm719, %v1054, 0
        %1058 = vmatprep.subr.bf16.mxu0 0
        %1059 = vmatpush1.bf16.xpose.msra.mxu0 %v882
        %1060 = vmatprep.subr.bf16.mxu0 0
        %1061 = vmatpush1.bf16.xpose.msra.mxu0 %v885
        %1062 = vmatprep.subr.bf16.mxu0 0
        %1063 = vmatpush1.bf16.xpose.msra.mxu0 %v888
        %1064 = vmatprep.subr.bf16.mxu0 0
        %1065 = vmatpush1.bf16.xpose.msra.mxu0 %v891
        %1066 = vmatprep.subr.bf16.mxu0 0
        %1067 = vmatpush1.bf16.xpose.msra.mxu0 0
        %1068 = vmatprep.subr.bf16.mxu0 0
        %1069 = vmatpush1.bf16.xpose.msra.mxu0 0
        %1070 = vmatprep.subr.bf16.mxu0 0
        %1071 = vmatpush1.bf16.xpose.msra.mxu0 0
        %1072 = vmatprep.subr.bf16.mxu0 0
        %1073 = vmatpush1.bf16.xpose.msra.mxu0 0
        %1074 = vmatprep.subr.bf16.mxu0 0
        %1075 = vmatpush1.bf16.xpose.msra.mxu0 0
        %1076 = vmatprep.subr.bf16.mxu0 0
        %1077 = vmatpush1.bf16.xpose.msra.mxu0 0
        %1078 = vmatprep.subr.bf16.mxu0 0
        %1079 = vmatpush1.bf16.xpose.msra.mxu0 0
        %1080 = vmatprep.subr.bf16.mxu0 0
        %1081 = vmatpush1.bf16.xpose.msra.mxu0 0
        %1082 = vmatprep.subr.bf16.mxu0 0
        %1083 = vmatpush1.bf16.xpose.msra.mxu0 0
        %1084 = vmatprep.subr.bf16.mxu0 0
        %1085 = vmatpush1.bf16.xpose.msra.mxu0 0
        %1086 = vmatprep.subr.bf16.mxu0 0
        %1087 = vmatpush1.bf16.xpose.msra.mxu0 0
        %1088 = vmatprep.subr.bf16.mxu0 0
        %1089 = vmatpush1.bf16.xpose.msra.mxu0 0
        %1090 = vmatprep.mubr.bf16.mxu0 0
        %1091 = vmatmul.mubr.bf16.gmra.mrb[0].mxu0 %v1056
        %v1092 = vpop.f32.mrb[0].mxu0
        %v1093 = vadd.f32 %v1043, %v1092
        %v1094 = vpop.f32.mrb[0].mxu0
        %v1095 = vpop.f32.mrb[0].mxu0
        %v1096 = vadd.f32 %v1048, %v1095
        %v1097 = vpop.f32.mrb[0].mxu0
        %1098 = vdwg.mxu0
        %v1099 = vpack.c.bf16 %v1096, %v1093
        %s1100 = scalar_lea.vmem [#allocation2], 8
        %1101 = vst.msk [vmem:[%s1100] sm:$0xff] %vm935, %v1099
        %s1102 = scalar_lea.vmem %s10, 16
        %v1103 = vld [vmem:[%s1102] sm:$0xf]
        %v1104 = vld [vmem:[%s1102 + $0x4] sm:$0xf]
        %v1105 = vld [vmem:[%s1102 + $0x8] sm:$0xf]
        %v1106 = vld [vmem:[%s1102 + $0xc] sm:$0xf]
        %s1107 = scalar_lea.vmem %s11, 1
        %v1108 = vld [vmem:[%s1107] sm:$0x1]
        %v1110 = vlaneseq
        %v1111 = vshrl.u32 %v1110, 7
        %v1112 = vsub.s32 0, %v1111
        %v1113 = vrot.slane %v1108, %v1112
        %v1119 = vunpack.c.l.b16 %v1103
        %v1120 = vunpack.c.l.b16 %v1104
        %v1121 = vunpack.c.l.b16 %v1105
        %v1122 = vunpack.c.l.b16 %v1106
        %v1123 = vpack.c.b16 %v1120, %v1119
        %v1124 = vpack.c.b16 %v1122, %v1121
        %1127 = vmatprep.subr.bf16.mxu0 0
        %1128 = vmatpush1.bf16.msra.mxu0 %v1123
        %1129 = vmatprep.subr.bf16.mxu0 0
        %1130 = vmatpush1.bf16.msra.mxu0 %v1124
        %1131 = vmatprep.subr.bf16.mxu0 0
        %1132 = vmatpush1.bf16.msra.mxu0 0
        %1133 = vmatprep.subr.bf16.mxu0 0
        %1134 = vmatpush1.bf16.msra.mxu0 0
        %1135 = vmatprep.subr.bf16.mxu0 0
        %1136 = vmatpush1.bf16.msra.mxu0 0
        %1137 = vmatprep.subr.bf16.mxu0 0
        %1138 = vmatpush1.bf16.msra.mxu0 0
        %1139 = vmatprep.subr.bf16.mxu0 0
        %1140 = vmatpush1.bf16.msra.mxu0 0
        %1141 = vmatprep.subr.bf16.mxu0 0
        %1142 = vmatpush1.bf16.msra.mxu0 0
        %1143 = vmatprep.subr.bf16.mxu0 0
        %1144 = vmatpush1.bf16.msra.mxu0 0
        %1145 = vmatprep.subr.bf16.mxu0 0
        %1146 = vmatpush1.bf16.msra.mxu0 0
        %1147 = vmatprep.subr.bf16.mxu0 0
        %1148 = vmatpush1.bf16.msra.mxu0 0
        %1149 = vmatprep.subr.bf16.mxu0 0
        %1150 = vmatpush1.bf16.msra.mxu0 0
        %1151 = vmatprep.subr.bf16.mxu0 0
        %1152 = vmatpush1.bf16.msra.mxu0 0
        %1153 = vmatprep.subr.bf16.mxu0 0
        %1154 = vmatpush1.bf16.msra.mxu0 0
        %1155 = vmatprep.subr.bf16.mxu0 0
        %1156 = vmatpush1.bf16.msra.mxu0 0
        %1157 = vmatprep.subr.bf16.mxu0 0
        %1158 = vmatpush1.bf16.msra.mxu0 0
        %1159 = vmatprep.mubr.bf16.mxu0 0
        %1160 = vmatmul.mubr.bf16.gmra.mrb[0].mxu0 %v882
        %v1161 = vpop.f32.mrb[0].mxu0
        %v1162 = vadd.f32 %v1113, %v1161
        %v1163 = vpop.f32.mrb[0].mxu0
        %v1164 = vpop.f32.mrb[0].mxu0
        %v1165 = vadd.f32 %v1113, %v1164
        %v1166 = vpop.f32.mrb[0].mxu0
        %1167 = vmatprep.mubr.bf16.mxu0 0
        %1168 = vmatmul.mubr.bf16.gmra.mrb[0].mxu0 %v885
        %v1169 = vpop.f32.mrb[0].mxu0
        %v1170 = vadd.f32 %v1113, %v1169
        %v1171 = vpop.f32.mrb[0].mxu0
        %v1172 = vpop.f32.mrb[0].mxu0
        %v1173 = vadd.f32 %v1113, %v1172
        %v1174 = vpop.f32.mrb[0].mxu0
        %1175 = vmatprep.mubr.bf16.mxu0 0
        %1176 = vmatmul.mubr.bf16.gmra.mrb[0].mxu0 %v888
        %v1177 = vpop.f32.mrb[0].mxu0
        %v1178 = vadd.f32 %v1113, %v1177
        %v1179 = vpop.f32.mrb[0].mxu0
        %v1180 = vpop.f32.mrb[0].mxu0
        %v1181 = vadd.f32 %v1113, %v1180
        %v1182 = vpop.f32.mrb[0].mxu0
        %1183 = vmatprep.mubr.bf16.mxu0 0
        %1184 = vmatmul.mubr.bf16.gmra.mrb[0].mxu0 %v891
        %v1185 = vpop.f32.mrb[0].mxu0
        %v1186 = vadd.f32 %v1113, %v1185
        %v1187 = vpop.f32.mrb[0].mxu0
        %v1188 = vpop.f32.mrb[0].mxu0
        %v1189 = vadd.f32 %v1113, %v1188
        %v1190 = vpop.f32.mrb[0].mxu0
        %1191 = vdwg.mxu0
        %v1192 = vpack.c.bf16 %v1165, %v1162
        %v1193 = vpack.c.bf16 %v1173, %v1170
        %v1194 = vpack.c.bf16 %v1181, %v1178
        %v1195 = vpack.c.bf16 %v1189, %v1186
        %s1196 = scalar_lea.vmem [#allocation3], 32
        %1197 = vst.msk [vmem:[%s1196] sm:$0xff] %vm1029, %v1192
        %1198 = vst.msk [vmem:[%s1196 + $0x8] sm:$0xff] %vm1029, %v1193
        %1199 = vst.msk [vmem:[%s1196 + $0x10] sm:$0xff] %vm1029, %v1194
        %1200 = vst.msk [vmem:[%s1196 + $0x18] sm:$0xff] %vm1029, %v1195
      $region80: #{tpu_custom_call.1} parent=75 // pred_fallthru
        _
      %v1201 = vld [vmem:[%s526] sm:$0xf]
      %v1202 = vld [vmem:[%s526 + $0x4] sm:$0xf]
      %v1203 = vld [vmem:[%s526 + $0x8] sm:$0xf]
      %v1204 = vld [vmem:[%s526 + $0xc] sm:$0xf]
      %v1205 = vld [vmem:[%s526 + $0x10] sm:$0xf]
      %v1206 = vld [vmem:[%s526 + $0x14] sm:$0xf]
      %v1207 = vld [vmem:[%s526 + $0x18] sm:$0xf]
      %v1208 = vld [vmem:[%s526 + $0x1c] sm:$0xf]
      %v1209 = vld [vmem:[%s526 + $0x20] sm:$0xf]
      %v1210 = vld [vmem:[%s526 + $0x24] sm:$0xf]
      %v1211 = vld [vmem:[%s526 + $0x28] sm:$0xf]
      %v1212 = vld [vmem:[%s526 + $0x2c] sm:$0xf]
      %v1213 = vld [vmem:[%s526 + $0x30] sm:$0xf]
      %v1214 = vld [vmem:[%s526 + $0x34] sm:$0xf]
      %v1215 = vld [vmem:[%s526 + $0x38] sm:$0xf]
      %v1216 = vld [vmem:[%s526 + $0x3c] sm:$0xf]
      %v1217 = vld [vmem:[%s526 + $0x40] sm:$0xf]
      %v1218 = vld [vmem:[%s526 + $0x44] sm:$0xf]
      %v1219 = vld [vmem:[%s526 + $0x48] sm:$0xf]
      %v1220 = vld [vmem:[%s526 + $0x4c] sm:$0xf]
      %v1221 = vld [vmem:[%s526 + $0x50] sm:$0xf]
      %v1222 = vld [vmem:[%s526 + $0x54] sm:$0xf]
      %v1223 = vld [vmem:[%s526 + $0x58] sm:$0xf]
      %v1224 = vld [vmem:[%s526 + $0x5c] sm:$0xf]
      %v1225 = vld [vmem:[%s526 + $0x60] sm:$0xf]
      %v1226 = vld [vmem:[%s526 + $0x64] sm:$0xf]
      %v1227 = vld [vmem:[%s526 + $0x68] sm:$0xf]
      %v1228 = vld [vmem:[%s526 + $0x6c] sm:$0xf]
      %v1229 = vld [vmem:[%s526 + $0x70] sm:$0xf]
      %v1230 = vld [vmem:[%s526 + $0x74] sm:$0xf]
      %v1231 = vld [vmem:[%s526 + $0x78] sm:$0xf]
      %v1232 = vld [vmem:[%s526 + $0x7c] sm:$0xf]
      %v1233 = vld [vmem:[%s6] sm:$0xf]
      %v1234 = vld [vmem:[%s6 + $0x4] sm:$0xf]
      %v1235 = vld [vmem:[%s6 + $0x8] sm:$0xf]
      %v1236 = vld [vmem:[%s6 + $0xc] sm:$0xf]
      %v1237 = vld [vmem:[%s7] sm:$0x1]
      %v1239 = vlaneseq
      %v1240 = vshrl.u32 %v1239, 7
      %v1241 = vsub.s32 0, %v1240
      %v1242 = vrot.slane %v1237, %v1241
      %v1276 = vunpack.c.l.b16 %v1201
      %v1277 = vunpack.c.l.b16 %v1202
      %v1278 = vunpack.c.l.b16 %v1203
      %v1279 = vunpack.c.l.b16 %v1204
      %v1280 = vunpack.c.l.b16 %v1205
      %v1281 = vunpack.c.l.b16 %v1206
      %v1282 = vunpack.c.l.b16 %v1207
      %v1283 = vunpack.c.l.b16 %v1208
      %v1284 = vunpack.c.l.b16 %v1209
      %v1285 = vunpack.c.l.b16 %v1210
      %v1286 = vunpack.c.l.b16 %v1211
      %v1287 = vunpack.c.l.b16 %v1212
      %v1288 = vunpack.c.l.b16 %v1213
      %v1289 = vunpack.c.l.b16 %v1214
      %v1290 = vunpack.c.l.b16 %v1215
      %v1291 = vunpack.c.l.b16 %v1216
      %v1292 = vunpack.c.l.b16 %v1217
      %v1293 = vunpack.c.l.b16 %v1218
      %v1294 = vunpack.c.l.b16 %v1219
      %v1295 = vunpack.c.l.b16 %v1220
      %v1296 = vunpack.c.l.b16 %v1221
      %v1297 = vunpack.c.l.b16 %v1222
      %v1298 = vunpack.c.l.b16 %v1223
      %v1299 = vunpack.c.l.b16 %v1224
      %v1300 = vunpack.c.l.b16 %v1225
      %v1301 = vunpack.c.l.b16 %v1226
      %v1302 = vunpack.c.l.b16 %v1227
      %v1303 = vunpack.c.l.b16 %v1228
      %v1304 = vunpack.c.l.b16 %v1229
      %v1305 = vunpack.c.l.b16 %v1230
      %v1306 = vunpack.c.l.b16 %v1231
      %v1307 = vunpack.c.l.b16 %v1232
      %v1308 = vpack.c.b16 %v1277, %v1276
      %v1309 = vpack.c.b16 %v1279, %v1278
      %v1310 = vpack.c.b16 %v1281, %v1280
      %v1311 = vpack.c.b16 %v1283, %v1282
      %v1312 = vpack.c.b16 %v1285, %v1284
      %v1313 = vpack.c.b16 %v1287, %v1286
      %v1314 = vpack.c.b16 %v1289, %v1288
      %v1315 = vpack.c.b16 %v1291, %v1290
      %v1316 = vpack.c.b16 %v1293, %v1292
      %v1317 = vpack.c.b16 %v1295, %v1294
      %v1318 = vpack.c.b16 %v1297, %v1296
      %v1319 = vpack.c.b16 %v1299, %v1298
      %v1320 = vpack.c.b16 %v1301, %v1300
      %v1321 = vpack.c.b16 %v1303, %v1302
      %v1322 = vpack.c.b16 %v1305, %v1304
      %v1323 = vpack.c.b16 %v1307, %v1306
      %v1328 = vunpack.c.l.b16 %v1233
      %v1329 = vunpack.c.l.b16 %v1234
      %v1330 = vunpack.c.l.b16 %v1235
      %v1331 = vunpack.c.l.b16 %v1236
      %v1332 = vpack.c.b16 %v1329, %v1328
      %v1333 = vpack.c.b16 %v1331, %v1330
      %vm1336 = vcmask 261120
      %v1338 = vsel %vm1336, %v1308, 0
      %v1341 = vsel %vm1336, %v1309, 0
      %v1344 = vsel %vm1336, %v1310, 0
      %v1347 = vsel %vm1336, %v1311, 0
      %v1350 = vsel %vm1336, %v1312, 0
      %v1353 = vsel %vm1336, %v1313, 0
      %v1356 = vsel %vm1336, %v1314, 0
      %v1359 = vsel %vm1336, %v1315, 0
      %v1362 = vsel %vm1336, %v1316, 0
      %v1365 = vsel %vm1336, %v1317, 0
      %v1368 = vsel %vm1336, %v1318, 0
      %v1371 = vsel %vm1336, %v1319, 0
      %v1374 = vsel %vm1336, %v1320, 0
      %v1377 = vsel %vm1336, %v1321, 0
      %v1380 = vsel %vm1336, %v1322, 0
      %v1383 = vsel %vm1336, %v1323, 0
      %1385 = vmatprep.subr.bf16.mxu0 0
      %1386 = vmatpush1.bf16.msra.mxu0 %v1332
      %1387 = vmatprep.subr.bf16.mxu0 0
      %1388 = vmatpush1.bf16.msra.mxu0 %v1333
      %1389 = vmatprep.subr.bf16.mxu0 0
      %1390 = vmatpush1.bf16.msra.mxu0 0
      %1391 = vmatprep.subr.bf16.mxu0 0
      %1392 = vmatpush1.bf16.msra.mxu0 0
      %1393 = vmatprep.subr.bf16.mxu0 0
      %1394 = vmatpush1.bf16.msra.mxu0 0
      %1395 = vmatprep.subr.bf16.mxu0 0
      %1396 = vmatpush1.bf16.msra.mxu0 0
      %1397 = vmatprep.subr.bf16.mxu0 0
      %1398 = vmatpush1.bf16.msra.mxu0 0
      %1399 = vmatprep.subr.bf16.mxu0 0
      %1400 = vmatpush1.bf16.msra.mxu0 0
      %1401 = vmatprep.subr.bf16.mxu0 0
      %1402 = vmatpush1.bf16.msra.mxu0 0
      %1403 = vmatprep.subr.bf16.mxu0 0
      %1404 = vmatpush1.bf16.msra.mxu0 0
      %1405 = vmatprep.subr.bf16.mxu0 0
      %1406 = vmatpush1.bf16.msra.mxu0 0
      %1407 = vmatprep.subr.bf16.mxu0 0
      %1408 = vmatpush1.bf16.msra.mxu0 0
      %1409 = vmatprep.subr.bf16.mxu0 0
      %1410 = vmatpush1.bf16.msra.mxu0 0
      %1411 = vmatprep.subr.bf16.mxu0 0
      %1412 = vmatpush1.bf16.msra.mxu0 0
      %1413 = vmatprep.subr.bf16.mxu0 0
      %1414 = vmatpush1.bf16.msra.mxu0 0
      %1415 = vmatprep.subr.bf16.mxu0 0
      %1416 = vmatpush1.bf16.msra.mxu0 0
      %1417 = vmatprep.mubr.bf16.mxu0 0
      %1418 = vmatmul.mubr.bf16.gmra.mrb[0].mxu0 %v1338
      %v1419 = vpop.f32.mrb[0].mxu0
      %v1420 = vadd.f32 %v1242, %v1419
      %v1421 = vpop.f32.mrb[0].mxu0
      %v1422 = vpop.f32.mrb[0].mxu0
      %v1423 = vadd.f32 %v1242, %v1422
      %v1424 = vpop.f32.mrb[0].mxu0
      %1425 = vmatprep.mubr.bf16.mxu0 0
      %1426 = vmatmul.mubr.bf16.gmra.mrb[0].mxu0 %v1341
      %v1427 = vpop.f32.mrb[0].mxu0
      %v1428 = vadd.f32 %v1242, %v1427
      %v1429 = vpop.f32.mrb[0].mxu0
      %v1430 = vpop.f32.mrb[0].mxu0
      %v1431 = vadd.f32 %v1242, %v1430
      %v1432 = vpop.f32.mrb[0].mxu0
      %1433 = vmatprep.mubr.bf16.mxu0 0
      %1434 = vmatmul.mubr.bf16.gmra.mrb[0].mxu0 %v1344
      %v1435 = vpop.f32.mrb[0].mxu0
      %v1436 = vadd.f32 %v1242, %v1435
      %v1437 = vpop.f32.mrb[0].mxu0
      %v1438 = vpop.f32.mrb[0].mxu0
      %v1439 = vadd.f32 %v1242, %v1438
      %v1440 = vpop.f32.mrb[0].mxu0
      %1441 = vmatprep.mubr.bf16.mxu0 0
      %1442 = vmatmul.mubr.bf16.gmra.mrb[0].mxu0 %v1347
      %v1443 = vpop.f32.mrb[0].mxu0
      %v1444 = vadd.f32 %v1242, %v1443
      %v1445 = vpop.f32.mrb[0].mxu0
      %v1446 = vpop.f32.mrb[0].mxu0
      %v1447 = vadd.f32 %v1242, %v1446
      %v1448 = vpop.f32.mrb[0].mxu0
      %1449 = vmatprep.mubr.bf16.mxu0 0
      %1450 = vmatmul.mubr.bf16.gmra.mrb[0].mxu0 %v1350
      %v1451 = vpop.f32.mrb[0].mxu0
      %v1452 = vadd.f32 %v1242, %v1451
      %v1453 = vpop.f32.mrb[0].mxu0
      %v1454 = vpop.f32.mrb[0].mxu0
      %v1455 = vadd.f32 %v1242, %v1454
      %v1456 = vpop.f32.mrb[0].mxu0
      %1457 = vmatprep.mubr.bf16.mxu0 0
      %1458 = vmatmul.mubr.bf16.gmra.mrb[0].mxu0 %v1353
      %v1459 = vpop.f32.mrb[0].mxu0
      %v1460 = vadd.f32 %v1242, %v1459
      %v1461 = vpop.f32.mrb[0].mxu0
      %v1462 = vpop.f32.mrb[0].mxu0
      %v1463 = vadd.f32 %v1242, %v1462
      %v1464 = vpop.f32.mrb[0].mxu0
      %1465 = vmatprep.mubr.bf16.mxu0 0
      %1466 = vmatmul.mubr.bf16.gmra.mrb[0].mxu0 %v1356
      %v1467 = vpop.f32.mrb[0].mxu0
      %v1468 = vadd.f32 %v1242, %v1467
      %v1469 = vpop.f32.mrb[0].mxu0
      %v1470 = vpop.f32.mrb[0].mxu0
      %v1471 = vadd.f32 %v1242, %v1470
      %v1472 = vpop.f32.mrb[0].mxu0
      %1473 = vmatprep.mubr.bf16.mxu0 0
      %1474 = vmatmul.mubr.bf16.gmra.mrb[0].mxu0 %v1359
      %v1475 = vpop.f32.mrb[0].mxu0
      %v1476 = vadd.f32 %v1242, %v1475
      %v1477 = vpop.f32.mrb[0].mxu0
      %v1478 = vpop.f32.mrb[0].mxu0
      %v1479 = vadd.f32 %v1242, %v1478
      %v1480 = vpop.f32.mrb[0].mxu0
      %1481 = vmatprep.mubr.bf16.mxu0 0
      %1482 = vmatmul.mubr.bf16.gmra.mrb[0].mxu0 %v1362
      %v1483 = vpop.f32.mrb[0].mxu0
      %v1484 = vadd.f32 %v1242, %v1483
      %v1485 = vpop.f32.mrb[0].mxu0
      %v1486 = vpop.f32.mrb[0].mxu0
      %v1487 = vadd.f32 %v1242, %v1486
      %v1488 = vpop.f32.mrb[0].mxu0
      %1489 = vmatprep.mubr.bf16.mxu0 0
      %1490 = vmatmul.mubr.bf16.gmra.mrb[0].mxu0 %v1365
      %v1491 = vpop.f32.mrb[0].mxu0
      %v1492 = vadd.f32 %v1242, %v1491
      %v1493 = vpop.f32.mrb[0].mxu0
      %v1494 = vpop.f32.mrb[0].mxu0
      %v1495 = vadd.f32 %v1242, %v1494
      %v1496 = vpop.f32.mrb[0].mxu0
      %1497 = vmatprep.mubr.bf16.mxu0 0
      %1498 = vmatmul.mubr.bf16.gmra.mrb[0].mxu0 %v1368
      %v1499 = vpop.f32.mrb[0].mxu0
      %v1500 = vadd.f32 %v1242, %v1499
      %v1501 = vpop.f32.mrb[0].mxu0
      %v1502 = vpop.f32.mrb[0].mxu0
      %v1503 = vadd.f32 %v1242, %v1502
      %v1504 = vpop.f32.mrb[0].mxu0
      %1505 = vmatprep.mubr.bf16.mxu0 0
      %1506 = vmatmul.mubr.bf16.gmra.mrb[0].mxu0 %v1371
      %v1507 = vpop.f32.mrb[0].mxu0
      %v1508 = vadd.f32 %v1242, %v1507
      %v1509 = vpop.f32.mrb[0].mxu0
      %v1510 = vpop.f32.mrb[0].mxu0
      %v1511 = vadd.f32 %v1242, %v1510
      %v1512 = vpop.f32.mrb[0].mxu0
      %1513 = vmatprep.mubr.bf16.mxu0 0
      %1514 = vmatmul.mubr.bf16.gmra.mrb[0].mxu0 %v1374
      %v1515 = vpop.f32.mrb[0].mxu0
      %v1516 = vadd.f32 %v1242, %v1515
      %v1517 = vpop.f32.mrb[0].mxu0
      %v1518 = vpop.f32.mrb[0].mxu0
      %v1519 = vadd.f32 %v1242, %v1518
      %v1520 = vpop.f32.mrb[0].mxu0
      %1521 = vmatprep.mubr.bf16.mxu0 0
      %1522 = vmatmul.mubr.bf16.gmra.mrb[0].mxu0 %v1377
      %v1523 = vpop.f32.mrb[0].mxu0
      %v1524 = vadd.f32 %v1242, %v1523
      %v1525 = vpop.f32.mrb[0].mxu0
      %v1526 = vpop.f32.mrb[0].mxu0
      %v1527 = vadd.f32 %v1242, %v1526
      %v1528 = vpop.f32.mrb[0].mxu0
      %1529 = vmatprep.mubr.bf16.mxu0 0
      %1530 = vmatmul.mubr.bf16.gmra.mrb[0].mxu0 %v1380
      %v1531 = vpop.f32.mrb[0].mxu0
      %v1532 = vadd.f32 %v1242, %v1531
      %v1533 = vpop.f32.mrb[0].mxu0
      %v1534 = vpop.f32.mrb[0].mxu0
      %v1535 = vadd.f32 %v1242, %v1534
      %v1536 = vpop.f32.mrb[0].mxu0
      %1537 = vmatprep.mubr.bf16.mxu0 0
      %1538 = vmatmul.mubr.bf16.gmra.mrb[0].mxu0 %v1383
      %v1539 = vpop.f32.mrb[0].mxu0
      %v1540 = vadd.f32 %v1242, %v1539
      %v1541 = vpop.f32.mrb[0].mxu0
      %v1542 = vpop.f32.mrb[0].mxu0
      %v1543 = vadd.f32 %v1242, %v1542
      %v1544 = vpop.f32.mrb[0].mxu0
      %1545 = vdwg.mxu0
      %v1546 = vpack.c.bf16 %v1423, %v1420
      %v1547 = vpack.c.bf16 %v1431, %v1428
      %v1548 = vpack.c.bf16 %v1439, %v1436
      %v1549 = vpack.c.bf16 %v1447, %v1444
      %v1550 = vpack.c.bf16 %v1455, %v1452
      %v1551 = vpack.c.bf16 %v1463, %v1460
      %v1552 = vpack.c.bf16 %v1471, %v1468
      %v1553 = vpack.c.bf16 %v1479, %v1476
      %v1554 = vpack.c.bf16 %v1487, %v1484
      %v1555 = vpack.c.bf16 %v1495, %v1492
      %v1556 = vpack.c.bf16 %v1503, %v1500
      %v1557 = vpack.c.bf16 %v1511, %v1508
      %v1558 = vpack.c.bf16 %v1519, %v1516
      %v1559 = vpack.c.bf16 %v1527, %v1524
      %v1560 = vpack.c.bf16 %v1535, %v1532
      %v1561 = vpack.c.bf16 %v1543, %v1540
      %v1562 = vld [vmem:[#allocation2] sm:$0xff]
      %vm1563 = vcmask 130048
      %v1565 = vsel %vm1563, %v1546, 0
      %v1568 = vsel %vm1563, %v1547, 0
      %v1571 = vsel %vm1563, %v1548, 0
      %v1574 = vsel %vm1563, %v1549, 0
      %v1577 = vsel %vm1563, %v1550, 0
      %v1580 = vsel %vm1563, %v1551, 0
      %v1583 = vsel %vm1563, %v1552, 0
      %v1586 = vsel %vm1563, %v1553, 0
      %v1589 = vsel %vm1563, %v1554, 0
      %v1592 = vsel %vm1563, %v1555, 0
      %v1595 = vsel %vm1563, %v1556, 0
      %v1598 = vsel %vm1563, %v1557, 0
      %v1601 = vsel %vm1563, %v1558, 0
      %v1604 = vsel %vm1563, %v1559, 0
      %v1607 = vsel %vm1563, %v1560, 0
      %v1610 = vsel %vm1563, %v1561, 0
      %1612 = vmatprep.subr.bf16.mxu0 0
      %1613 = vmatpush1.bf16.msra.mxu0 %v1562
      %1614 = vmatprep.subr.bf16.mxu0 0
      %1615 = vmatpush1.bf16.msra.mxu0 0
      %1616 = vmatprep.subr.bf16.mxu0 0
      %1617 = vmatpush1.bf16.msra.mxu0 0
      %1618 = vmatprep.subr.bf16.mxu0 0
      %1619 = vmatpush1.bf16.msra.mxu0 0
      %1620 = vmatprep.subr.bf16.mxu0 0
      %1621 = vmatpush1.bf16.msra.mxu0 0
      %1622 = vmatprep.subr.bf16.mxu0 0
      %1623 = vmatpush1.bf16.msra.mxu0 0
      %1624 = vmatprep.subr.bf16.mxu0 0
      %1625 = vmatpush1.bf16.msra.mxu0 0
      %1626 = vmatprep.subr.bf16.mxu0 0
      %1627 = vmatpush1.bf16.msra.mxu0 0
      %1628 = vmatprep.subr.bf16.mxu0 0
      %1629 = vmatpush1.bf16.msra.mxu0 0
      %1630 = vmatprep.subr.bf16.mxu0 0
      %1631 = vmatpush1.bf16.msra.mxu0 0
      %1632 = vmatprep.subr.bf16.mxu0 0
      %1633 = vmatpush1.bf16.msra.mxu0 0
      %1634 = vmatprep.subr.bf16.mxu0 0
      %1635 = vmatpush1.bf16.msra.mxu0 0
      %1636 = vmatprep.subr.bf16.mxu0 0
      %1637 = vmatpush1.bf16.msra.mxu0 0
      %1638 = vmatprep.subr.bf16.mxu0 0
      %1639 = vmatpush1.bf16.msra.mxu0 0
      %1640 = vmatprep.subr.bf16.mxu0 0
      %1641 = vmatpush1.bf16.msra.mxu0 0
      %1642 = vmatprep.subr.bf16.mxu0 0
      %1643 = vmatpush1.bf16.msra.mxu0 0
      %1644 = vmatprep.mubr.bf16.mxu0 0
      %1645 = vmatmul.mubr.bf16.gmra.mrb[0].mxu0 %v1565
      %v1646 = vpop.f32.mrb[0].mxu0
      %v1647 = vadd.f32 0.0, %v1646
      %v1648 = vpop.f32.mrb[0].mxu0
      %v1649 = vpop.f32.mrb[0].mxu0
      %v1650 = vadd.f32 0.0, %v1649
      %v1651 = vpop.f32.mrb[0].mxu0
      %1652 = vmatprep.mubr.bf16.mxu0 0
      %1653 = vmatmul.mubr.bf16.gmra.mrb[0].mxu0 %v1568
      %v1654 = vpop.f32.mrb[0].mxu0
      %v1655 = vadd.f32 0.0, %v1654
      %v1656 = vpop.f32.mrb[0].mxu0
      %v1657 = vpop.f32.mrb[0].mxu0
      %v1658 = vadd.f32 0.0, %v1657
      %v1659 = vpop.f32.mrb[0].mxu0
      %1660 = vmatprep.mubr.bf16.mxu0 0
      %1661 = vmatmul.mubr.bf16.gmra.mrb[0].mxu0 %v1571
      %v1662 = vpop.f32.mrb[0].mxu0
      %v1663 = vadd.f32 0.0, %v1662
      %v1664 = vpop.f32.mrb[0].mxu0
      %v1665 = vpop.f32.mrb[0].mxu0
      %v1666 = vadd.f32 0.0, %v1665
      %v1667 = vpop.f32.mrb[0].mxu0
      %1668 = vmatprep.mubr.bf16.mxu0 0
      %1669 = vmatmul.mubr.bf16.gmra.mrb[0].mxu0 %v1574
      %v1670 = vpop.f32.mrb[0].mxu0
      %v1671 = vadd.f32 0.0, %v1670
      %v1672 = vpop.f32.mrb[0].mxu0
      %v1673 = vpop.f32.mrb[0].mxu0
      %v1674 = vadd.f32 0.0, %v1673
      %v1675 = vpop.f32.mrb[0].mxu0
      %1676 = vmatprep.mubr.bf16.mxu0 0
      %1677 = vmatmul.mubr.bf16.gmra.mrb[0].mxu0 %v1577
      %v1678 = vpop.f32.mrb[0].mxu0
      %v1679 = vadd.f32 0.0, %v1678
      %v1680 = vpop.f32.mrb[0].mxu0
      %v1681 = vpop.f32.mrb[0].mxu0
      %v1682 = vadd.f32 0.0, %v1681
      %v1683 = vpop.f32.mrb[0].mxu0
      %1684 = vmatprep.mubr.bf16.mxu0 0
      %1685 = vmatmul.mubr.bf16.gmra.mrb[0].mxu0 %v1580
      %v1686 = vpop.f32.mrb[0].mxu0
      %v1687 = vadd.f32 0.0, %v1686
      %v1688 = vpop.f32.mrb[0].mxu0
      %v1689 = vpop.f32.mrb[0].mxu0
      %v1690 = vadd.f32 0.0, %v1689
      %v1691 = vpop.f32.mrb[0].mxu0
      %1692 = vmatprep.mubr.bf16.mxu0 0
      %1693 = vmatmul.mubr.bf16.gmra.mrb[0].mxu0 %v1583
      %v1694 = vpop.f32.mrb[0].mxu0
      %v1695 = vadd.f32 0.0, %v1694
      %v1696 = vpop.f32.mrb[0].mxu0
      %v1697 = vpop.f32.mrb[0].mxu0
      %v1698 = vadd.f32 0.0, %v1697
      %v1699 = vpop.f32.mrb[0].mxu0
      %1700 = vmatprep.mubr.bf16.mxu0 0
      %1701 = vmatmul.mubr.bf16.gmra.mrb[0].mxu0 %v1586
      %v1702 = vpop.f32.mrb[0].mxu0
      %v1703 = vadd.f32 0.0, %v1702
      %v1704 = vpop.f32.mrb[0].mxu0
      %v1705 = vpop.f32.mrb[0].mxu0
      %v1706 = vadd.f32 0.0, %v1705
      %v1707 = vpop.f32.mrb[0].mxu0
      %1708 = vmatprep.mubr.bf16.mxu0 0
      %1709 = vmatmul.mubr.bf16.gmra.mrb[0].mxu0 %v1589
      %v1710 = vpop.f32.mrb[0].mxu0
      %v1711 = vadd.f32 0.0, %v1710
      %v1712 = vpop.f32.mrb[0].mxu0
      %v1713 = vpop.f32.mrb[0].mxu0
      %v1714 = vadd.f32 0.0, %v1713
      %v1715 = vpop.f32.mrb[0].mxu0
      %1716 = vmatprep.mubr.bf16.mxu0 0
      %1717 = vmatmul.mubr.bf16.gmra.mrb[0].mxu0 %v1592
      %v1718 = vpop.f32.mrb[0].mxu0
      %v1719 = vadd.f32 0.0, %v1718
      %v1720 = vpop.f32.mrb[0].mxu0
      %v1721 = vpop.f32.mrb[0].mxu0
      %v1722 = vadd.f32 0.0, %v1721
      %v1723 = vpop.f32.mrb[0].mxu0
      %1724 = vmatprep.mubr.bf16.mxu0 0
      %1725 = vmatmul.mubr.bf16.gmra.mrb[0].mxu0 %v1595
      %v1726 = vpop.f32.mrb[0].mxu0
      %v1727 = vadd.f32 0.0, %v1726
      %v1728 = vpop.f32.mrb[0].mxu0
      %v1729 = vpop.f32.mrb[0].mxu0
      %v1730 = vadd.f32 0.0, %v1729
      %v1731 = vpop.f32.mrb[0].mxu0
      %1732 = vmatprep.mubr.bf16.mxu0 0
      %1733 = vmatmul.mubr.bf16.gmra.mrb[0].mxu0 %v1598
      %v1734 = vpop.f32.mrb[0].mxu0
      %v1735 = vadd.f32 0.0, %v1734
      %v1736 = vpop.f32.mrb[0].mxu0
      %v1737 = vpop.f32.mrb[0].mxu0
      %v1738 = vadd.f32 0.0, %v1737
      %v1739 = vpop.f32.mrb[0].mxu0
      %1740 = vmatprep.mubr.bf16.mxu0 0
      %1741 = vmatmul.mubr.bf16.gmra.mrb[0].mxu0 %v1601
      %v1742 = vpop.f32.mrb[0].mxu0
      %v1743 = vadd.f32 0.0, %v1742
      %v1744 = vpop.f32.mrb[0].mxu0
      %v1745 = vpop.f32.mrb[0].mxu0
      %v1746 = vadd.f32 0.0, %v1745
      %v1747 = vpop.f32.mrb[0].mxu0
      %1748 = vmatprep.mubr.bf16.mxu0 0
      %1749 = vmatmul.mubr.bf16.gmra.mrb[0].mxu0 %v1604
      %v1750 = vpop.f32.mrb[0].mxu0
      %v1751 = vadd.f32 0.0, %v1750
      %v1752 = vpop.f32.mrb[0].mxu0
      %v1753 = vpop.f32.mrb[0].mxu0
      %v1754 = vadd.f32 0.0, %v1753
      %v1755 = vpop.f32.mrb[0].mxu0
      %1756 = vmatprep.mubr.bf16.mxu0 0
      %1757 = vmatmul.mubr.bf16.gmra.mrb[0].mxu0 %v1607
      %v1758 = vpop.f32.mrb[0].mxu0
      %v1759 = vadd.f32 0.0, %v1758
      %v1760 = vpop.f32.mrb[0].mxu0
      %v1761 = vpop.f32.mrb[0].mxu0
      %v1762 = vadd.f32 0.0, %v1761
      %v1763 = vpop.f32.mrb[0].mxu0
      %1764 = vmatprep.mubr.bf16.mxu0 0
      %1765 = vmatmul.mubr.bf16.gmra.mrb[0].mxu0 %v1610
      %v1766 = vpop.f32.mrb[0].mxu0
      %v1767 = vadd.f32 0.0, %v1766
      %v1768 = vpop.f32.mrb[0].mxu0
      %v1769 = vpop.f32.mrb[0].mxu0
      %v1770 = vadd.f32 0.0, %v1769
      %v1771 = vpop.f32.mrb[0].mxu0
      %1772 = vdwg.mxu0
      %vm1773 = vcmask 523264
      %v1774 = vsel %vm1773, %v1647, -inf
      %1775 = vmax.xlane.f32.xlu0 %v1774
      %v1776 = vpop.xlane.xlu0 %1775
      %v1777 = vsel %vm1773, %v1650, -inf
      %1778 = vmax.xlane.f32.xlu0 %v1777
      %v1779 = vpop.xlane.xlu0 %1778
      %v1780 = vsel %vm1773, %v1655, -inf
      %1781 = vmax.xlane.f32.xlu0 %v1780
      %v1782 = vpop.xlane.xlu0 %1781
      %v1783 = vsel %vm1773, %v1658, -inf
      %1784 = vmax.xlane.f32.xlu0 %v1783
      %v1785 = vpop.xlane.xlu0 %1784
      %v1786 = vsel %vm1773, %v1663, -inf
      %1787 = vmax.xlane.f32.xlu0 %v1786
      %v1788 = vpop.xlane.xlu0 %1787
      %v1789 = vsel %vm1773, %v1666, -inf
      %1790 = vmax.xlane.f32.xlu0 %v1789
      %v1791 = vpop.xlane.xlu0 %1790
      %v1792 = vsel %vm1773, %v1671, -inf
      %1793 = vmax.xlane.f32.xlu0 %v1792
      %v1794 = vpop.xlane.xlu0 %1793
      %v1795 = vsel %vm1773, %v1674, -inf
      %1796 = vmax.xlane.f32.xlu0 %v1795
      %v1797 = vpop.xlane.xlu0 %1796
      %v1798 = vsel %vm1773, %v1679, -inf
      %1799 = vmax.xlane.f32.xlu0 %v1798
      %v1800 = vpop.xlane.xlu0 %1799
      %v1801 = vsel %vm1773, %v1682, -inf
      %1802 = vmax.xlane.f32.xlu0 %v1801
      %v1803 = vpop.xlane.xlu0 %1802
      %v1804 = vsel %vm1773, %v1687, -inf
      %1805 = vmax.xlane.f32.xlu0 %v1804
      %v1806 = vpop.xlane.xlu0 %1805
      %v1807 = vsel %vm1773, %v1690, -inf
      %1808 = vmax.xlane.f32.xlu0 %v1807
      %v1809 = vpop.xlane.xlu0 %1808
      %v1810 = vsel %vm1773, %v1695, -inf
      %1811 = vmax.xlane.f32.xlu0 %v1810
      %v1812 = vpop.xlane.xlu0 %1811
      %v1813 = vsel %vm1773, %v1698, -inf
      %1814 = vmax.xlane.f32.xlu0 %v1813
      %v1815 = vpop.xlane.xlu0 %1814
      %v1816 = vsel %vm1773, %v1703, -inf
      %1817 = vmax.xlane.f32.xlu0 %v1816
      %v1818 = vpop.xlane.xlu0 %1817
      %v1819 = vsel %vm1773, %v1706, -inf
      %1820 = vmax.xlane.f32.xlu0 %v1819
      %v1821 = vpop.xlane.xlu0 %1820
      %v1822 = vsel %vm1773, %v1711, -inf
      %1823 = vmax.xlane.f32.xlu0 %v1822
      %v1824 = vpop.xlane.xlu0 %1823
      %v1825 = vsel %vm1773, %v1714, -inf
      %1826 = vmax.xlane.f32.xlu0 %v1825
      %v1827 = vpop.xlane.xlu0 %1826
      %v1828 = vsel %vm1773, %v1719, -inf
      %1829 = vmax.xlane.f32.xlu0 %v1828
      %v1830 = vpop.xlane.xlu0 %1829
      %v1831 = vsel %vm1773, %v1722, -inf
      %1832 = vmax.xlane.f32.xlu0 %v1831
      %v1833 = vpop.xlane.xlu0 %1832
      %v1834 = vsel %vm1773, %v1727, -inf
      %1835 = vmax.xlane.f32.xlu0 %v1834
      %v1836 = vpop.xlane.xlu0 %1835
      %v1837 = vsel %vm1773, %v1730, -inf
      %1838 = vmax.xlane.f32.xlu0 %v1837
      %v1839 = vpop.xlane.xlu0 %1838
      %v1840 = vsel %vm1773, %v1735, -inf
      %1841 = vmax.xlane.f32.xlu0 %v1840
      %v1842 = vpop.xlane.xlu0 %1841
      %v1843 = vsel %vm1773, %v1738, -inf
      %1844 = vmax.xlane.f32.xlu0 %v1843
      %v1845 = vpop.xlane.xlu0 %1844
      %v1846 = vsel %vm1773, %v1743, -inf
      %1847 = vmax.xlane.f32.xlu0 %v1846
      %v1848 = vpop.xlane.xlu0 %1847
      %v1849 = vsel %vm1773, %v1746, -inf
      %1850 = vmax.xlane.f32.xlu0 %v1849
      %v1851 = vpop.xlane.xlu0 %1850
      %v1852 = vsel %vm1773, %v1751, -inf
      %1853 = vmax.xlane.f32.xlu0 %v1852
      %v1854 = vpop.xlane.xlu0 %1853
      %v1855 = vsel %vm1773, %v1754, -inf
      %1856 = vmax.xlane.f32.xlu0 %v1855
      %v1857 = vpop.xlane.xlu0 %1856
      %v1858 = vsel %vm1773, %v1759, -inf
      %1859 = vmax.xlane.f32.xlu0 %v1858
      %v1860 = vpop.xlane.xlu0 %1859
      %v1861 = vsel %vm1773, %v1762, -inf
      %1862 = vmax.xlane.f32.xlu0 %v1861
      %v1863 = vpop.xlane.xlu0 %1862
      %v1864 = vsel %vm1773, %v1767, -inf
      %1865 = vmax.xlane.f32.xlu0 %v1864
      %v1866 = vpop.xlane.xlu0 %1865
      %v1867 = vsel %vm1773, %v1770, -inf
      %1868 = vmax.xlane.f32.xlu0 %v1867
      %v1869 = vpop.xlane.xlu0 %1868
      %v1870 = vsub.f32 %v1647, %v1776
      %v1871 = vsub.f32 %v1650, %v1779
      %v1872 = vsub.f32 %v1655, %v1782
      %v1873 = vsub.f32 %v1658, %v1785
      %v1874 = vsub.f32 %v1663, %v1788
      %v1875 = vsub.f32 %v1666, %v1791
      %v1876 = vsub.f32 %v1671, %v1794
      %v1877 = vsub.f32 %v1674, %v1797
      %v1878 = vsub.f32 %v1679, %v1800
      %v1879 = vsub.f32 %v1682, %v1803
      %v1880 = vsub.f32 %v1687, %v1806
      %v1881 = vsub.f32 %v1690, %v1809
      %v1882 = vsub.f32 %v1695, %v1812
      %v1883 = vsub.f32 %v1698, %v1815
      %v1884 = vsub.f32 %v1703, %v1818
      %v1885 = vsub.f32 %v1706, %v1821
      %v1886 = vsub.f32 %v1711, %v1824
      %v1887 = vsub.f32 %v1714, %v1827
      %v1888 = vsub.f32 %v1719, %v1830
      %v1889 = vsub.f32 %v1722, %v1833
      %v1890 = vsub.f32 %v1727, %v1836
      %v1891 = vsub.f32 %v1730, %v1839
      %v1892 = vsub.f32 %v1735, %v1842
      %v1893 = vsub.f32 %v1738, %v1845
      %v1894 = vsub.f32 %v1743, %v1848
      %v1895 = vsub.f32 %v1746, %v1851
      %v1896 = vsub.f32 %v1751, %v1854
      %v1897 = vsub.f32 %v1754, %v1857
      %v1898 = vsub.f32 %v1759, %v1860
      %v1899 = vsub.f32 %v1762, %v1863
      %v1900 = vsub.f32 %v1767, %v1866
      %v1901 = vsub.f32 %v1770, %v1869
      %v1902 = vmul.f32 %v1870, 1.442695
      %v1903 = vpow.pop %v1902
      %v1904 = vmul.f32 %v1871, 1.442695
      %v1905 = vpow.pop %v1904
      %v1906 = vmul.f32 %v1872, 1.442695
      %v1907 = vpow.pop %v1906
      %v1908 = vmul.f32 %v1873, 1.442695
      %v1909 = vpow.pop %v1908
      %v1910 = vmul.f32 %v1874, 1.442695
      %v1911 = vpow.pop %v1910
      %v1912 = vmul.f32 %v1875, 1.442695
      %v1913 = vpow.pop %v1912
      %v1914 = vmul.f32 %v1876, 1.442695
      %v1915 = vpow.pop %v1914
      %v1916 = vmul.f32 %v1877, 1.442695
      %v1917 = vpow.pop %v1916
      %v1918 = vmul.f32 %v1878, 1.442695
      %v1919 = vpow.pop %v1918
      %v1920 = vmul.f32 %v1879, 1.442695
      %v1921 = vpow.pop %v1920
      %v1922 = vmul.f32 %v1880, 1.442695
      %v1923 = vpow.pop %v1922
      %v1924 = vmul.f32 %v1881, 1.442695
      %v1925 = vpow.pop %v1924
      %v1926 = vmul.f32 %v1882, 1.442695
      %v1927 = vpow.pop %v1926
      %v1928 = vmul.f32 %v1883, 1.442695
      %v1929 = vpow.pop %v1928
      %v1930 = vmul.f32 %v1884, 1.442695
      %v1931 = vpow.pop %v1930
      %v1932 = vmul.f32 %v1885, 1.442695
      %v1933 = vpow.pop %v1932
      %v1934 = vmul.f32 %v1886, 1.442695
      %v1935 = vpow.pop %v1934
      %v1936 = vmul.f32 %v1887, 1.442695
      %v1937 = vpow.pop %v1936
      %v1938 = vmul.f32 %v1888, 1.442695
      %v1939 = vpow.pop %v1938
      %v1940 = vmul.f32 %v1889, 1.442695
      %v1941 = vpow.pop %v1940
      %v1942 = vmul.f32 %v1890, 1.442695
      %v1943 = vpow.pop %v1942
      %v1944 = vmul.f32 %v1891, 1.442695
      %v1945 = vpow.pop %v1944
      %v1946 = vmul.f32 %v1892, 1.442695
      %v1947 = vpow.pop %v1946
      %v1948 = vmul.f32 %v1893, 1.442695
      %v1949 = vpow.pop %v1948
      %v1950 = vmul.f32 %v1894, 1.442695
      %v1951 = vpow.pop %v1950
      %v1952 = vmul.f32 %v1895, 1.442695
      %v1953 = vpow.pop %v1952
      %v1954 = vmul.f32 %v1896, 1.442695
      %v1955 = vpow.pop %v1954
      %v1956 = vmul.f32 %v1897, 1.442695
      %v1957 = vpow.pop %v1956
      %v1958 = vmul.f32 %v1898, 1.442695
      %v1959 = vpow.pop %v1958
      %v1960 = vmul.f32 %v1899, 1.442695
      %v1961 = vpow.pop %v1960
      %v1962 = vmul.f32 %v1900, 1.442695
      %v1963 = vpow.pop %v1962
      %v1964 = vmul.f32 %v1901, 1.442695
      %v1965 = vpow.pop %v1964
      %v1966 = vsel %vm1773, %v1903, 0.0
      %1967 = vadd.xlane.f32.xlu0 %v1966
      %v1968 = vpop.xlane.xlu0 %1967
      %v1969 = vsel %vm1773, %v1905, 0.0
      %1970 = vadd.xlane.f32.xlu0 %v1969
      %v1971 = vpop.xlane.xlu0 %1970
      %v1972 = vsel %vm1773, %v1907, 0.0
      %1973 = vadd.xlane.f32.xlu0 %v1972
      %v1974 = vpop.xlane.xlu0 %1973
      %v1975 = vsel %vm1773, %v1909, 0.0
      %1976 = vadd.xlane.f32.xlu0 %v1975
      %v1977 = vpop.xlane.xlu0 %1976
      %v1978 = vsel %vm1773, %v1911, 0.0
      %1979 = vadd.xlane.f32.xlu0 %v1978
      %v1980 = vpop.xlane.xlu0 %1979
      %v1981 = vsel %vm1773, %v1913, 0.0
      %1982 = vadd.xlane.f32.xlu0 %v1981
      %v1983 = vpop.xlane.xlu0 %1982
      %v1984 = vsel %vm1773, %v1915, 0.0
      %1985 = vadd.xlane.f32.xlu0 %v1984
      %v1986 = vpop.xlane.xlu0 %1985
      %v1987 = vsel %vm1773, %v1917, 0.0
      %1988 = vadd.xlane.f32.xlu0 %v1987
      %v1989 = vpop.xlane.xlu0 %1988
      %v1990 = vsel %vm1773, %v1919, 0.0
      %1991 = vadd.xlane.f32.xlu0 %v1990
      %v1992 = vpop.xlane.xlu0 %1991
      %v1993 = vsel %vm1773, %v1921, 0.0
      %1994 = vadd.xlane.f32.xlu0 %v1993
      %v1995 = vpop.xlane.xlu0 %1994
      %v1996 = vsel %vm1773, %v1923, 0.0
      %1997 = vadd.xlane.f32.xlu0 %v1996
      %v1998 = vpop.xlane.xlu0 %1997
      %v1999 = vsel %vm1773, %v1925, 0.0
      %2000 = vadd.xlane.f32.xlu0 %v1999
      %v2001 = vpop.xlane.xlu0 %2000
      %v2002 = vsel %vm1773, %v1927, 0.0
      %2003 = vadd.xlane.f32.xlu0 %v2002
      %v2004 = vpop.xlane.xlu0 %2003
      %v2005 = vsel %vm1773, %v1929, 0.0
      %2006 = vadd.xlane.f32.xlu0 %v2005
      %v2007 = vpop.xlane.xlu0 %2006
      %v2008 = vsel %vm1773, %v1931, 0.0
      %2009 = vadd.xlane.f32.xlu0 %v2008
      %v2010 = vpop.xlane.xlu0 %2009
      %v2011 = vsel %vm1773, %v1933, 0.0
      %2012 = vadd.xlane.f32.xlu0 %v2011
      %v2013 = vpop.xlane.xlu0 %2012
      %v2014 = vsel %vm1773, %v1935, 0.0
      %2015 = vadd.xlane.f32.xlu0 %v2014
      %v2016 = vpop.xlane.xlu0 %2015
      %v2017 = vsel %vm1773, %v1937, 0.0
      %2018 = vadd.xlane.f32.xlu0 %v2017
      %v2019 = vpop.xlane.xlu0 %2018
      %v2020 = vsel %vm1773, %v1939, 0.0
      %2021 = vadd.xlane.f32.xlu0 %v2020
      %v2022 = vpop.xlane.xlu0 %2021
      %v2023 = vsel %vm1773, %v1941, 0.0
      %2024 = vadd.xlane.f32.xlu0 %v2023
      %v2025 = vpop.xlane.xlu0 %2024
      %v2026 = vsel %vm1773, %v1943, 0.0
      %2027 = vadd.xlane.f32.xlu0 %v2026
      %v2028 = vpop.xlane.xlu0 %2027
      %v2029 = vsel %vm1773, %v1945, 0.0
      %2030 = vadd.xlane.f32.xlu0 %v2029
      %v2031 = vpop.xlane.xlu0 %2030
      %v2032 = vsel %vm1773, %v1947, 0.0
      %2033 = vadd.xlane.f32.xlu0 %v2032
      %v2034 = vpop.xlane.xlu0 %2033
      %v2035 = vsel %vm1773, %v1949, 0.0
      %2036 = vadd.xlane.f32.xlu0 %v2035
      %v2037 = vpop.xlane.xlu0 %2036
      %v2038 = vsel %vm1773, %v1951, 0.0
      %2039 = vadd.xlane.f32.xlu0 %v2038
      %v2040 = vpop.xlane.xlu0 %2039
      %v2041 = vsel %vm1773, %v1953, 0.0
      %2042 = vadd.xlane.f32.xlu0 %v2041
      %v2043 = vpop.xlane.xlu0 %2042
      %v2044 = vsel %vm1773, %v1955, 0.0
      %2045 = vadd.xlane.f32.xlu0 %v2044
      %v2046 = vpop.xlane.xlu0 %2045
      %v2047 = vsel %vm1773, %v1957, 0.0
      %2048 = vadd.xlane.f32.xlu0 %v2047
      %v2049 = vpop.xlane.xlu0 %2048
      %v2050 = vsel %vm1773, %v1959, 0.0
      %2051 = vadd.xlane.f32.xlu0 %v2050
      %v2052 = vpop.xlane.xlu0 %2051
      %v2053 = vsel %vm1773, %v1961, 0.0
      %2054 = vadd.xlane.f32.xlu0 %v2053
      %v2055 = vpop.xlane.xlu0 %2054
      %v2056 = vsel %vm1773, %v1963, 0.0
      %2057 = vadd.xlane.f32.xlu0 %v2056
      %v2058 = vpop.xlane.xlu0 %2057
      %v2059 = vsel %vm1773, %v1965, 0.0
      %2060 = vadd.xlane.f32.xlu0 %v2059
      %v2061 = vpop.xlane.xlu0 %2060
      %v2062 = vrcp.pop %v1968
      %v2063 = vrcp.pop %v1971
      %v2064 = vrcp.pop %v1974
      %v2065 = vrcp.pop %v1977
      %v2066 = vrcp.pop %v1980
      %v2067 = vrcp.pop %v1983
      %v2068 = vrcp.pop %v1986
      %v2069 = vrcp.pop %v1989
      %v2070 = vrcp.pop %v1992
      %v2071 = vrcp.pop %v1995
      %v2072 = vrcp.pop %v1998
      %v2073 = vrcp.pop %v2001
      %v2074 = vrcp.pop %v2004
      %v2075 = vrcp.pop %v2007
      %v2076 = vrcp.pop %v2010
      %v2077 = vrcp.pop %v2013
      %v2078 = vrcp.pop %v2016
      %v2079 = vrcp.pop %v2019
      %v2080 = vrcp.pop %v2022
      %v2081 = vrcp.pop %v2025
      %v2082 = vrcp.pop %v2028
      %v2083 = vrcp.pop %v2031
      %v2084 = vrcp.pop %v2034
      %v2085 = vrcp.pop %v2037
      %v2086 = vrcp.pop %v2040
      %v2087 = vrcp.pop %v2043
      %v2088 = vrcp.pop %v2046
      %v2089 = vrcp.pop %v2049
      %v2090 = vrcp.pop %v2052
      %v2091 = vrcp.pop %v2055
      %v2092 = vrcp.pop %v2058
      %v2093 = vrcp.pop %v2061
      %v2094 = vmul.f32 %v1903, %v2062
      %v2095 = vmul.f32 %v1905, %v2063
      %v2096 = vmul.f32 %v1907, %v2064
      %v2097 = vmul.f32 %v1909, %v2065
      %v2098 = vmul.f32 %v1911, %v2066
      %v2099 = vmul.f32 %v1913, %v2067
      %v2100 = vmul.f32 %v1915, %v2068
      %v2101 = vmul.f32 %v1917, %v2069
      %v2102 = vmul.f32 %v1919, %v2070
      %v2103 = vmul.f32 %v1921, %v2071
      %v2104 = vmul.f32 %v1923, %v2072
      %v2105 = vmul.f32 %v1925, %v2073
      %v2106 = vmul.f32 %v1927, %v2074
      %v2107 = vmul.f32 %v1929, %v2075
      %v2108 = vmul.f32 %v1931, %v2076
      %v2109 = vmul.f32 %v1933, %v2077
      %v2110 = vmul.f32 %v1935, %v2078
      %v2111 = vmul.f32 %v1937, %v2079
      %v2112 = vmul.f32 %v1939, %v2080
      %v2113 = vmul.f32 %v1941, %v2081
      %v2114 = vmul.f32 %v1943, %v2082
      %v2115 = vmul.f32 %v1945, %v2083
      %v2116 = vmul.f32 %v1947, %v2084
      %v2117 = vmul.f32 %v1949, %v2085
      %v2118 = vmul.f32 %v1951, %v2086
      %v2119 = vmul.f32 %v1953, %v2087
      %v2120 = vmul.f32 %v1955, %v2088
      %v2121 = vmul.f32 %v1957, %v2089
      %v2122 = vmul.f32 %v1959, %v2090
      %v2123 = vmul.f32 %v1961, %v2091
      %v2124 = vmul.f32 %v1963, %v2092
      %v2125 = vmul.f32 %v1965, %v2093
      %v2126 = vpack.c.bf16 %v2095, %v2094
      %v2127 = vpack.c.bf16 %v2097, %v2096
      %v2128 = vpack.c.bf16 %v2099, %v2098
      %v2129 = vpack.c.bf16 %v2101, %v2100
      %v2130 = vpack.c.bf16 %v2103, %v2102
      %v2131 = vpack.c.bf16 %v2105, %v2104
      %v2132 = vpack.c.bf16 %v2107, %v2106
      %v2133 = vpack.c.bf16 %v2109, %v2108
      %v2134 = vpack.c.bf16 %v2111, %v2110
      %v2135 = vpack.c.bf16 %v2113, %v2112
      %v2136 = vpack.c.bf16 %v2115, %v2114
      %v2137 = vpack.c.bf16 %v2117, %v2116
      %v2138 = vpack.c.bf16 %v2119, %v2118
      %v2139 = vpack.c.bf16 %v2121, %v2120
      %v2140 = vpack.c.bf16 %v2123, %v2122
      %v2141 = vpack.c.bf16 %v2125, %v2124
      %v2142 = vld [vmem:[#allocation3] sm:$0xff]
      %v2143 = vld [vmem:[#allocation3 + $0x8] sm:$0xff]
      %v2144 = vld [vmem:[#allocation3 + $0x10] sm:$0xff]
      %v2145 = vld [vmem:[#allocation3 + $0x18] sm:$0xff]
      %v2147 = vsel %vm1773, %v2126, 0
      %v2150 = vsel %vm1773, %v2127, 0
      %v2153 = vsel %vm1773, %v2128, 0
      %v2156 = vsel %vm1773, %v2129, 0
      %v2159 = vsel %vm1773, %v2130, 0
      %v2162 = vsel %vm1773, %v2131, 0
      %v2165 = vsel %vm1773, %v2132, 0
      %v2168 = vsel %vm1773, %v2133, 0
      %v2171 = vsel %vm1773, %v2134, 0
      %v2174 = vsel %vm1773, %v2135, 0
      %v2177 = vsel %vm1773, %v2136, 0
      %v2180 = vsel %vm1773, %v2137, 0
      %v2183 = vsel %vm1773, %v2138, 0
      %v2186 = vsel %vm1773, %v2139, 0
      %v2189 = vsel %vm1773, %v2140, 0
      %v2192 = vsel %vm1773, %v2141, 0
      %2194 = vmatprep.subr.bf16.mxu0 0
      %2195 = vmatpush1.bf16.msra.mxu0 %v2142
      %2196 = vmatprep.subr.bf16.mxu0 0
      %2197 = vmatpush1.bf16.msra.mxu0 %v2143
      %2198 = vmatprep.subr.bf16.mxu0 0
      %2199 = vmatpush1.bf16.msra.mxu0 %v2144
      %2200 = vmatprep.subr.bf16.mxu0 0
      %2201 = vmatpush1.bf16.msra.mxu0 %v2145
      %2202 = vmatprep.subr.bf16.mxu0 0
      %2203 = vmatpush1.bf16.msra.mxu0 0
      %2204 = vmatprep.subr.bf16.mxu0 0
      %2205 = vmatpush1.bf16.msra.mxu0 0
      %2206 = vmatprep.subr.bf16.mxu0 0
      %2207 = vmatpush1.bf16.msra.mxu0 0
      %2208 = vmatprep.subr.bf16.mxu0 0
      %2209 = vmatpush1.bf16.msra.mxu0 0
      %2210 = vmatprep.subr.bf16.mxu0 0
      %2211 = vmatpush1.bf16.msra.mxu0 0
      %2212 = vmatprep.subr.bf16.mxu0 0
      %2213 = vmatpush1.bf16.msra.mxu0 0
      %2214 = vmatprep.subr.bf16.mxu0 0
      %2215 = vmatpush1.bf16.msra.mxu0 0
      %2216 = vmatprep.subr.bf16.mxu0 0
      %2217 = vmatpush1.bf16.msra.mxu0 0
      %2218 = vmatprep.subr.bf16.mxu0 0
      %2219 = vmatpush1.bf16.msra.mxu0 0
      %2220 = vmatprep.subr.bf16.mxu0 0
      %2221 = vmatpush1.bf16.msra.mxu0 0
      %2222 = vmatprep.subr.bf16.mxu0 0
      %2223 = vmatpush1.bf16.msra.mxu0 0
      %2224 = vmatprep.subr.bf16.mxu0 0
      %2225 = vmatpush1.bf16.msra.mxu0 0
      %2226 = vmatprep.mubr.bf16.mxu0 0
      %2227 = vmatmul.mubr.bf16.gmra.mrb[0].mxu0 %v2147
      %v2228 = vpop.f32.mrb[0].mxu0
      %v2229 = vadd.f32 0.0, %v2228
      %v2230 = vpop.f32.mrb[0].mxu0
      %v2231 = vpop.f32.mrb[0].mxu0
      %v2232 = vadd.f32 0.0, %v2231
      %v2233 = vpop.f32.mrb[0].mxu0
      %2234 = vmatprep.mubr.bf16.mxu0 0
      %2235 = vmatmul.mubr.bf16.gmra.mrb[0].mxu0 %v2150
      %v2236 = vpop.f32.mrb[0].mxu0
      %v2237 = vadd.f32 0.0, %v2236
      %v2238 = vpop.f32.mrb[0].mxu0
      %v2239 = vpop.f32.mrb[0].mxu0
      %v2240 = vadd.f32 0.0, %v2239
      %v2241 = vpop.f32.mrb[0].mxu0
      %2242 = vmatprep.mubr.bf16.mxu0 0
      %2243 = vmatmul.mubr.bf16.gmra.mrb[0].mxu0 %v2153
      %v2244 = vpop.f32.mrb[0].mxu0
      %v2245 = vadd.f32 0.0, %v2244
      %v2246 = vpop.f32.mrb[0].mxu0
      %v2247 = vpop.f32.mrb[0].mxu0
      %v2248 = vadd.f32 0.0, %v2247
      %v2249 = vpop.f32.mrb[0].mxu0
      %2250 = vmatprep.mubr.bf16.mxu0 0
      %2251 = vmatmul.mubr.bf16.gmra.mrb[0].mxu0 %v2156
      %v2252 = vpop.f32.mrb[0].mxu0
      %v2253 = vadd.f32 0.0, %v2252
      %v2254 = vpop.f32.mrb[0].mxu0
      %v2255 = vpop.f32.mrb[0].mxu0
      %v2256 = vadd.f32 0.0, %v2255
      %v2257 = vpop.f32.mrb[0].mxu0
      %2258 = vmatprep.mubr.bf16.mxu0 0
      %2259 = vmatmul.mubr.bf16.gmra.mrb[0].mxu0 %v2159
      %v2260 = vpop.f32.mrb[0].mxu0
      %v2261 = vadd.f32 0.0, %v2260
      %v2262 = vpop.f32.mrb[0].mxu0
      %v2263 = vpop.f32.mrb[0].mxu0
      %v2264 = vadd.f32 0.0, %v2263
      %v2265 = vpop.f32.mrb[0].mxu0
      %2266 = vmatprep.mubr.bf16.mxu0 0
      %2267 = vmatmul.mubr.bf16.gmra.mrb[0].mxu0 %v2162
      %v2268 = vpop.f32.mrb[0].mxu0
      %v2269 = vadd.f32 0.0, %v2268
      %v2270 = vpop.f32.mrb[0].mxu0
      %v2271 = vpop.f32.mrb[0].mxu0
      %v2272 = vadd.f32 0.0, %v2271
      %v2273 = vpop.f32.mrb[0].mxu0
      %2274 = vmatprep.mubr.bf16.mxu0 0
      %2275 = vmatmul.mubr.bf16.gmra.mrb[0].mxu0 %v2165
      %v2276 = vpop.f32.mrb[0].mxu0
      %v2277 = vadd.f32 0.0, %v2276
      %v2278 = vpop.f32.mrb[0].mxu0
      %v2279 = vpop.f32.mrb[0].mxu0
      %v2280 = vadd.f32 0.0, %v2279
      %v2281 = vpop.f32.mrb[0].mxu0
      %2282 = vmatprep.mubr.bf16.mxu0 0
      %2283 = vmatmul.mubr.bf16.gmra.mrb[0].mxu0 %v2168
      %v2284 = vpop.f32.mrb[0].mxu0
      %v2285 = vadd.f32 0.0, %v2284
      %v2286 = vpop.f32.mrb[0].mxu0
      %v2287 = vpop.f32.mrb[0].mxu0
      %v2288 = vadd.f32 0.0, %v2287
      %v2289 = vpop.f32.mrb[0].mxu0
      %2290 = vmatprep.mubr.bf16.mxu0 0
      %2291 = vmatmul.mubr.bf16.gmra.mrb[0].mxu0 %v2171
      %v2292 = vpop.f32.mrb[0].mxu0
      %v2293 = vadd.f32 0.0, %v2292
      %v2294 = vpop.f32.mrb[0].mxu0
      %v2295 = vpop.f32.mrb[0].mxu0
      %v2296 = vadd.f32 0.0, %v2295
      %v2297 = vpop.f32.mrb[0].mxu0
      %2298 = vmatprep.mubr.bf16.mxu0 0
      %2299 = vmatmul.mubr.bf16.gmra.mrb[0].mxu0 %v2174
      %v2300 = vpop.f32.mrb[0].mxu0
      %v2301 = vadd.f32 0.0, %v2300
      %v2302 = vpop.f32.mrb[0].mxu0
      %v2303 = vpop.f32.mrb[0].mxu0
      %v2304 = vadd.f32 0.0, %v2303
      %v2305 = vpop.f32.mrb[0].mxu0
      %2306 = vmatprep.mubr.bf16.mxu0 0
      %2307 = vmatmul.mubr.bf16.gmra.mrb[0].mxu0 %v2177
      %v2308 = vpop.f32.mrb[0].mxu0
      %v2309 = vadd.f32 0.0, %v2308
      %v2310 = vpop.f32.mrb[0].mxu0
      %v2311 = vpop.f32.mrb[0].mxu0
      %v2312 = vadd.f32 0.0, %v2311
      %v2313 = vpop.f32.mrb[0].mxu0
      %2314 = vmatprep.mubr.bf16.mxu0 0
      %2315 = vmatmul.mubr.bf16.gmra.mrb[0].mxu0 %v2180
      %v2316 = vpop.f32.mrb[0].mxu0
      %v2317 = vadd.f32 0.0, %v2316
      %v2318 = vpop.f32.mrb[0].mxu0
      %v2319 = vpop.f32.mrb[0].mxu0
      %v2320 = vadd.f32 0.0, %v2319
      %v2321 = vpop.f32.mrb[0].mxu0
      %2322 = vmatprep.mubr.bf16.mxu0 0
      %2323 = vmatmul.mubr.bf16.gmra.mrb[0].mxu0 %v2183
      %v2324 = vpop.f32.mrb[0].mxu0
      %v2325 = vadd.f32 0.0, %v2324
      %v2326 = vpop.f32.mrb[0].mxu0
      %v2327 = vpop.f32.mrb[0].mxu0
      %v2328 = vadd.f32 0.0, %v2327
      %v2329 = vpop.f32.mrb[0].mxu0
      %2330 = vmatprep.mubr.bf16.mxu0 0
      %2331 = vmatmul.mubr.bf16.gmra.mrb[0].mxu0 %v2186
      %v2332 = vpop.f32.mrb[0].mxu0
      %v2333 = vadd.f32 0.0, %v2332
      %v2334 = vpop.f32.mrb[0].mxu0
      %v2335 = vpop.f32.mrb[0].mxu0
      %v2336 = vadd.f32 0.0, %v2335
      %v2337 = vpop.f32.mrb[0].mxu0
      %2338 = vmatprep.mubr.bf16.mxu0 0
      %2339 = vmatmul.mubr.bf16.gmra.mrb[0].mxu0 %v2189
      %v2340 = vpop.f32.mrb[0].mxu0
      %v2341 = vadd.f32 0.0, %v2340
      %v2342 = vpop.f32.mrb[0].mxu0
      %v2343 = vpop.f32.mrb[0].mxu0
      %v2344 = vadd.f32 0.0, %v2343
      %v2345 = vpop.f32.mrb[0].mxu0
      %2346 = vmatprep.mubr.bf16.mxu0 0
      %2347 = vmatmul.mubr.bf16.gmra.mrb[0].mxu0 %v2192
      %v2348 = vpop.f32.mrb[0].mxu0
      %v2349 = vadd.f32 0.0, %v2348
      %v2350 = vpop.f32.mrb[0].mxu0
      %v2351 = vpop.f32.mrb[0].mxu0
      %v2352 = vadd.f32 0.0, %v2351
      %v2353 = vpop.f32.mrb[0].mxu0
      %2354 = vdwg.mxu0
      %s2355 = scalar_lea.vmem %s6, 16
      %v2356 = vld [vmem:[%s2355] sm:$0xf]
      %v2357 = vld [vmem:[%s2355 + $0x4] sm:$0xf]
      %v2358 = vld [vmem:[%s2355 + $0x8] sm:$0xf]
      %v2359 = vld [vmem:[%s2355 + $0xc] sm:$0xf]
      %s2360 = scalar_lea.vmem %s7, 1
      %v2361 = vld [vmem:[%s2360] sm:$0x1]
      %v2363 = vlaneseq
      %v2364 = vshrl.u32 %v2363, 7
      %v2365 = vsub.s32 0, %v2364
      %v2366 = vrot.slane %v2361, %v2365
      %v2372 = vunpack.c.l.b16 %v2356
      %v2373 = vunpack.c.l.b16 %v2357
      %v2374 = vunpack.c.l.b16 %v2358
      %v2375 = vunpack.c.l.b16 %v2359
      %v2376 = vpack.c.b16 %v2373, %v2372
      %v2377 = vpack.c.b16 %v2375, %v2374
      %2380 = vmatprep.subr.bf16.mxu0 0
      %2381 = vmatpush1.bf16.msra.mxu0 %v2376
      %2382 = vmatprep.subr.bf16.mxu0 0
      %2383 = vmatpush1.bf16.msra.mxu0 %v2377
      %2384 = vmatprep.subr.bf16.mxu0 0
      %2385 = vmatpush1.bf16.msra.mxu0 0
      %2386 = vmatprep.subr.bf16.mxu0 0
      %2387 = vmatpush1.bf16.msra.mxu0 0
      %2388 = vmatprep.subr.bf16.mxu0 0
      %2389 = vmatpush1.bf16.msra.mxu0 0
      %2390 = vmatprep.subr.bf16.mxu0 0
      %2391 = vmatpush1.bf16.msra.mxu0 0
      %2392 = vmatprep.subr.bf16.mxu0 0
      %2393 = vmatpush1.bf16.msra.mxu0 0
      %2394 = vmatprep.subr.bf16.mxu0 0
      %2395 = vmatpush1.bf16.msra.mxu0 0
      %2396 = vmatprep.subr.bf16.mxu0 0
      %2397 = vmatpush1.bf16.msra.mxu0 0
      %2398 = vmatprep.subr.bf16.mxu0 0
      %2399 = vmatpush1.bf16.msra.mxu0 0
      %2400 = vmatprep.subr.bf16.mxu0 0
      %2401 = vmatpush1.bf16.msra.mxu0 0
      %2402 = vmatprep.subr.bf16.mxu0 0
      %2403 = vmatpush1.bf16.msra.mxu0 0
      %2404 = vmatprep.subr.bf16.mxu0 0
      %2405 = vmatpush1.bf16.msra.mxu0 0
      %2406 = vmatprep.subr.bf16.mxu0 0
      %2407 = vmatpush1.bf16.msra.mxu0 0
      %2408 = vmatprep.subr.bf16.mxu0 0
      %2409 = vmatpush1.bf16.msra.mxu0 0
      %2410 = vmatprep.subr.bf16.mxu0 0
      %2411 = vmatpush1.bf16.msra.mxu0 0
      %2412 = vmatprep.mubr.bf16.mxu0 0
      %2413 = vmatmul.mubr.bf16.gmra.mrb[0].mxu0 %v1338
      %v2414 = vpop.f32.mrb[0].mxu0
      %v2415 = vadd.f32 %v2366, %v2414
      %v2416 = vpop.f32.mrb[0].mxu0
      %v2417 = vpop.f32.mrb[0].mxu0
      %v2418 = vadd.f32 %v2366, %v2417
      %v2419 = vpop.f32.mrb[0].mxu0
      %2420 = vmatprep.mubr.bf16.mxu0 0
      %2421 = vmatmul.mubr.bf16.gmra.mrb[0].mxu0 %v1341
      %v2422 = vpop.f32.mrb[0].mxu0
      %v2423 = vadd.f32 %v2366, %v2422
      %v2424 = vpop.f32.mrb[0].mxu0
      %v2425 = vpop.f32.mrb[0].mxu0
      %v2426 = vadd.f32 %v2366, %v2425
      %v2427 = vpop.f32.mrb[0].mxu0
      %2428 = vmatprep.mubr.bf16.mxu0 0
      %2429 = vmatmul.mubr.bf16.gmra.mrb[0].mxu0 %v1344
      %v2430 = vpop.f32.mrb[0].mxu0
      %v2431 = vadd.f32 %v2366, %v2430
      %v2432 = vpop.f32.mrb[0].mxu0
      %v2433 = vpop.f32.mrb[0].mxu0
      %v2434 = vadd.f32 %v2366, %v2433
      %v2435 = vpop.f32.mrb[0].mxu0
      %2436 = vmatprep.mubr.bf16.mxu0 0
      %2437 = vmatmul.mubr.bf16.gmra.mrb[0].mxu0 %v1347
      %v2438 = vpop.f32.mrb[0].mxu0
      %v2439 = vadd.f32 %v2366, %v2438
      %v2440 = vpop.f32.mrb[0].mxu0
      %v2441 = vpop.f32.mrb[0].mxu0
      %v2442 = vadd.f32 %v2366, %v2441
      %v2443 = vpop.f32.mrb[0].mxu0
      %2444 = vmatprep.mubr.bf16.mxu0 0
      %2445 = vmatmul.mubr.bf16.gmra.mrb[0].mxu0 %v1350
      %v2446 = vpop.f32.mrb[0].mxu0
      %v2447 = vadd.f32 %v2366, %v2446
      %v2448 = vpop.f32.mrb[0].mxu0
      %v2449 = vpop.f32.mrb[0].mxu0
      %v2450 = vadd.f32 %v2366, %v2449
      %v2451 = vpop.f32.mrb[0].mxu0
      %2452 = vmatprep.mubr.bf16.mxu0 0
      %2453 = vmatmul.mubr.bf16.gmra.mrb[0].mxu0 %v1353
      %v2454 = vpop.f32.mrb[0].mxu0
      %v2455 = vadd.f32 %v2366, %v2454
      %v2456 = vpop.f32.mrb[0].mxu0
      %v2457 = vpop.f32.mrb[0].mxu0
      %v2458 = vadd.f32 %v2366, %v2457
      %v2459 = vpop.f32.mrb[0].mxu0
      %2460 = vmatprep.mubr.bf16.mxu0 0
      %2461 = vmatmul.mubr.bf16.gmra.mrb[0].mxu0 %v1356
      %v2462 = vpop.f32.mrb[0].mxu0
      %v2463 = vadd.f32 %v2366, %v2462
      %v2464 = vpop.f32.mrb[0].mxu0
      %v2465 = vpop.f32.mrb[0].mxu0
      %v2466 = vadd.f32 %v2366, %v2465
      %v2467 = vpop.f32.mrb[0].mxu0
      %2468 = vmatprep.mubr.bf16.mxu0 0
      %2469 = vmatmul.mubr.bf16.gmra.mrb[0].mxu0 %v1359
      %v2470 = vpop.f32.mrb[0].mxu0
      %v2471 = vadd.f32 %v2366, %v2470
      %v2472 = vpop.f32.mrb[0].mxu0
      %v2473 = vpop.f32.mrb[0].mxu0
      %v2474 = vadd.f32 %v2366, %v2473
      %v2475 = vpop.f32.mrb[0].mxu0
      %2476 = vmatprep.mubr.bf16.mxu0 0
      %2477 = vmatmul.mubr.bf16.gmra.mrb[0].mxu0 %v1362
      %v2478 = vpop.f32.mrb[0].mxu0
      %v2479 = vadd.f32 %v2366, %v2478
      %v2480 = vpop.f32.mrb[0].mxu0
      %v2481 = vpop.f32.mrb[0].mxu0
      %v2482 = vadd.f32 %v2366, %v2481
      %v2483 = vpop.f32.mrb[0].mxu0
      %2484 = vmatprep.mubr.bf16.mxu0 0
      %2485 = vmatmul.mubr.bf16.gmra.mrb[0].mxu0 %v1365
      %v2486 = vpop.f32.mrb[0].mxu0
      %v2487 = vadd.f32 %v2366, %v2486
      %v2488 = vpop.f32.mrb[0].mxu0
      %v2489 = vpop.f32.mrb[0].mxu0
      %v2490 = vadd.f32 %v2366, %v2489
      %v2491 = vpop.f32.mrb[0].mxu0
      %2492 = vmatprep.mubr.bf16.mxu0 0
      %2493 = vmatmul.mubr.bf16.gmra.mrb[0].mxu0 %v1368
      %v2494 = vpop.f32.mrb[0].mxu0
      %v2495 = vadd.f32 %v2366, %v2494
      %v2496 = vpop.f32.mrb[0].mxu0
      %v2497 = vpop.f32.mrb[0].mxu0
      %v2498 = vadd.f32 %v2366, %v2497
      %v2499 = vpop.f32.mrb[0].mxu0
      %2500 = vmatprep.mubr.bf16.mxu0 0
      %2501 = vmatmul.mubr.bf16.gmra.mrb[0].mxu0 %v1371
      %v2502 = vpop.f32.mrb[0].mxu0
      %v2503 = vadd.f32 %v2366, %v2502
      %v2504 = vpop.f32.mrb[0].mxu0
      %v2505 = vpop.f32.mrb[0].mxu0
      %v2506 = vadd.f32 %v2366, %v2505
      %v2507 = vpop.f32.mrb[0].mxu0
      %2508 = vmatprep.mubr.bf16.mxu0 0
      %2509 = vmatmul.mubr.bf16.gmra.mrb[0].mxu0 %v1374
      %v2510 = vpop.f32.mrb[0].mxu0
      %v2511 = vadd.f32 %v2366, %v2510
      %v2512 = vpop.f32.mrb[0].mxu0
      %v2513 = vpop.f32.mrb[0].mxu0
      %v2514 = vadd.f32 %v2366, %v2513
      %v2515 = vpop.f32.mrb[0].mxu0
      %2516 = vmatprep.mubr.bf16.mxu0 0
      %2517 = vmatmul.mubr.bf16.gmra.mrb[0].mxu0 %v1377
      %v2518 = vpop.f32.mrb[0].mxu0
      %v2519 = vadd.f32 %v2366, %v2518
      %v2520 = vpop.f32.mrb[0].mxu0
      %v2521 = vpop.f32.mrb[0].mxu0
      %v2522 = vadd.f32 %v2366, %v2521
      %v2523 = vpop.f32.mrb[0].mxu0
      %2524 = vmatprep.mubr.bf16.mxu0 0
      %2525 = vmatmul.mubr.bf16.gmra.mrb[0].mxu0 %v1380
      %v2526 = vpop.f32.mrb[0].mxu0
      %v2527 = vadd.f32 %v2366, %v2526
      %v2528 = vpop.f32.mrb[0].mxu0
      %v2529 = vpop.f32.mrb[0].mxu0
      %v2530 = vadd.f32 %v2366, %v2529
      %v2531 = vpop.f32.mrb[0].mxu0
      %2532 = vmatprep.mubr.bf16.mxu0 0
      %2533 = vmatmul.mubr.bf16.gmra.mrb[0].mxu0 %v1383
      %v2534 = vpop.f32.mrb[0].mxu0
      %v2535 = vadd.f32 %v2366, %v2534
      %v2536 = vpop.f32.mrb[0].mxu0
      %v2537 = vpop.f32.mrb[0].mxu0
      %v2538 = vadd.f32 %v2366, %v2537
      %v2539 = vpop.f32.mrb[0].mxu0
      %2540 = vdwg.mxu0
      %v2541 = vpack.c.bf16 %v2418, %v2415
      %v2542 = vpack.c.bf16 %v2426, %v2423
      %v2543 = vpack.c.bf16 %v2434, %v2431
      %v2544 = vpack.c.bf16 %v2442, %v2439
      %v2545 = vpack.c.bf16 %v2450, %v2447
      %v2546 = vpack.c.bf16 %v2458, %v2455
      %v2547 = vpack.c.bf16 %v2466, %v2463
      %v2548 = vpack.c.bf16 %v2474, %v2471
      %v2549 = vpack.c.bf16 %v2482, %v2479
      %v2550 = vpack.c.bf16 %v2490, %v2487
      %v2551 = vpack.c.bf16 %v2498, %v2495
      %v2552 = vpack.c.bf16 %v2506, %v2503
      %v2553 = vpack.c.bf16 %v2514, %v2511
      %v2554 = vpack.c.bf16 %v2522, %v2519
      %v2555 = vpack.c.bf16 %v2530, %v2527
      %v2556 = vpack.c.bf16 %v2538, %v2535
      %s2557 = scalar_lea.vmem [#allocation2], 8
      %v2558 = vld [vmem:[%s2557] sm:$0xff]
      %v2560 = vsel %vm1563, %v2541, 0
      %v2563 = vsel %vm1563, %v2542, 0
      %v2566 = vsel %vm1563, %v2543, 0
      %v2569 = vsel %vm1563, %v2544, 0
      %v2572 = vsel %vm1563, %v2545, 0
      %v2575 = vsel %vm1563, %v2546, 0
      %v2578 = vsel %vm1563, %v2547, 0
      %v2581 = vsel %vm1563, %v2548, 0
      %v2584 = vsel %vm1563, %v2549, 0
      %v2587 = vsel %vm1563, %v2550, 0
      %v2590 = vsel %vm1563, %v2551, 0
      %v2593 = vsel %vm1563, %v2552, 0
      %v2596 = vsel %vm1563, %v2553, 0
      %v2599 = vsel %vm1563, %v2554, 0
      %v2602 = vsel %vm1563, %v2555, 0
      %v2605 = vsel %vm1563, %v2556, 0
      %2607 = vmatprep.subr.bf16.mxu0 0
      %2608 = vmatpush1.bf16.msra.mxu0 %v2558
      %2609 = vmatprep.subr.bf16.mxu0 0
      %2610 = vmatpush1.bf16.msra.mxu0 0
      %2611 = vmatprep.subr.bf16.mxu0 0
      %2612 = vmatpush1.bf16.msra.mxu0 0
      %2613 = vmatprep.subr.bf16.mxu0 0
      %2614 = vmatpush1.bf16.msra.mxu0 0
      %2615 = vmatprep.subr.bf16.mxu0 0
      %2616 = vmatpush1.bf16.msra.mxu0 0
      %2617 = vmatprep.subr.bf16.mxu0 0
      %2618 = vmatpush1.bf16.msra.mxu0 0
      %2619 = vmatprep.subr.bf16.mxu0 0
      %2620 = vmatpush1.bf16.msra.mxu0 0
      %2621 = vmatprep.subr.bf16.mxu0 0
      %2622 = vmatpush1.bf16.msra.mxu0 0
      %2623 = vmatprep.subr.bf16.mxu0 0
      %2624 = vmatpush1.bf16.msra.mxu0 0
      %2625 = vmatprep.subr.bf16.mxu0 0
      %2626 = vmatpush1.bf16.msra.mxu0 0
      %2627 = vmatprep.subr.bf16.mxu0 0
      %2628 = vmatpush1.bf16.msra.mxu0 0
      %2629 = vmatprep.subr.bf16.mxu0 0
      %2630 = vmatpush1.bf16.msra.mxu0 0
      %2631 = vmatprep.subr.bf16.mxu0 0
      %2632 = vmatpush1.bf16.msra.mxu0 0
      %2633 = vmatprep.subr.bf16.mxu0 0
      %2634 = vmatpush1.bf16.msra.mxu0 0
      %2635 = vmatprep.subr.bf16.mxu0 0
      %2636 = vmatpush1.bf16.msra.mxu0 0
      %2637 = vmatprep.subr.bf16.mxu0 0
      %2638 = vmatpush1.bf16.msra.mxu0 0
      %2639 = vmatprep.mubr.bf16.mxu0 0
      %2640 = vmatmul.mubr.bf16.gmra.mrb[0].mxu0 %v2560
      %v2641 = vpop.f32.mrb[0].mxu0
      %v2642 = vadd.f32 0.0, %v2641
      %v2643 = vpop.f32.mrb[0].mxu0
      %v2644 = vpop.f32.mrb[0].mxu0
      %v2645 = vadd.f32 0.0, %v2644
      %v2646 = vpop.f32.mrb[0].mxu0
      %2647 = vmatprep.mubr.bf16.mxu0 0
      %2648 = vmatmul.mubr.bf16.gmra.mrb[0].mxu0 %v2563
      %v2649 = vpop.f32.mrb[0].mxu0
      %v2650 = vadd.f32 0.0, %v2649
      %v2651 = vpop.f32.mrb[0].mxu0
      %v2652 = vpop.f32.mrb[0].mxu0
      %v2653 = vadd.f32 0.0, %v2652
      %v2654 = vpop.f32.mrb[0].mxu0
      %2655 = vmatprep.mubr.bf16.mxu0 0
      %2656 = vmatmul.mubr.bf16.gmra.mrb[0].mxu0 %v2566
      %v2657 = vpop.f32.mrb[0].mxu0
      %v2658 = vadd.f32 0.0, %v2657
      %v2659 = vpop.f32.mrb[0].mxu0
      %v2660 = vpop.f32.mrb[0].mxu0
      %v2661 = vadd.f32 0.0, %v2660
      %v2662 = vpop.f32.mrb[0].mxu0
      %2663 = vmatprep.mubr.bf16.mxu0 0
      %2664 = vmatmul.mubr.bf16.gmra.mrb[0].mxu0 %v2569
      %v2665 = vpop.f32.mrb[0].mxu0
      %v2666 = vadd.f32 0.0, %v2665
      %v2667 = vpop.f32.mrb[0].mxu0
      %v2668 = vpop.f32.mrb[0].mxu0
      %v2669 = vadd.f32 0.0, %v2668
      %v2670 = vpop.f32.mrb[0].mxu0
      %2671 = vmatprep.mubr.bf16.mxu0 0
      %2672 = vmatmul.mubr.bf16.gmra.mrb[0].mxu0 %v2572
      %v2673 = vpop.f32.mrb[0].mxu0
      %v2674 = vadd.f32 0.0, %v2673
      %v2675 = vpop.f32.mrb[0].mxu0
      %v2676 = vpop.f32.mrb[0].mxu0
      %v2677 = vadd.f32 0.0, %v2676
      %v2678 = vpop.f32.mrb[0].mxu0
      %2679 = vmatprep.mubr.bf16.mxu0 0
      %2680 = vmatmul.mubr.bf16.gmra.mrb[0].mxu0 %v2575
      %v2681 = vpop.f32.mrb[0].mxu0
      %v2682 = vadd.f32 0.0, %v2681
      %v2683 = vpop.f32.mrb[0].mxu0
      %v2684 = vpop.f32.mrb[0].mxu0
      %v2685 = vadd.f32 0.0, %v2684
      %v2686 = vpop.f32.mrb[0].mxu0
      %2687 = vmatprep.mubr.bf16.mxu0 0
      %2688 = vmatmul.mubr.bf16.gmra.mrb[0].mxu0 %v2578
      %v2689 = vpop.f32.mrb[0].mxu0
      %v2690 = vadd.f32 0.0, %v2689
      %v2691 = vpop.f32.mrb[0].mxu0
      %v2692 = vpop.f32.mrb[0].mxu0
      %v2693 = vadd.f32 0.0, %v2692
      %v2694 = vpop.f32.mrb[0].mxu0
      %2695 = vmatprep.mubr.bf16.mxu0 0
      %2696 = vmatmul.mubr.bf16.gmra.mrb[0].mxu0 %v2581
      %v2697 = vpop.f32.mrb[0].mxu0
      %v2698 = vadd.f32 0.0, %v2697
      %v2699 = vpop.f32.mrb[0].mxu0
      %v2700 = vpop.f32.mrb[0].mxu0
      %v2701 = vadd.f32 0.0, %v2700
      %v2702 = vpop.f32.mrb[0].mxu0
      %2703 = vmatprep.mubr.bf16.mxu0 0
      %2704 = vmatmul.mubr.bf16.gmra.mrb[0].mxu0 %v2584
      %v2705 = vpop.f32.mrb[0].mxu0
      %v2706 = vadd.f32 0.0, %v2705
      %v2707 = vpop.f32.mrb[0].mxu0
      %v2708 = vpop.f32.mrb[0].mxu0
      %v2709 = vadd.f32 0.0, %v2708
      %v2710 = vpop.f32.mrb[0].mxu0
      %2711 = vmatprep.mubr.bf16.mxu0 0
      %2712 = vmatmul.mubr.bf16.gmra.mrb[0].mxu0 %v2587
      %v2713 = vpop.f32.mrb[0].mxu0
      %v2714 = vadd.f32 0.0, %v2713
      %v2715 = vpop.f32.mrb[0].mxu0
      %v2716 = vpop.f32.mrb[0].mxu0
      %v2717 = vadd.f32 0.0, %v2716
      %v2718 = vpop.f32.mrb[0].mxu0
      %2719 = vmatprep.mubr.bf16.mxu0 0
      %2720 = vmatmul.mubr.bf16.gmra.mrb[0].mxu0 %v2590
      %v2721 = vpop.f32.mrb[0].mxu0
      %v2722 = vadd.f32 0.0, %v2721
      %v2723 = vpop.f32.mrb[0].mxu0
      %v2724 = vpop.f32.mrb[0].mxu0
      %v2725 = vadd.f32 0.0, %v2724
      %v2726 = vpop.f32.mrb[0].mxu0
      %2727 = vmatprep.mubr.bf16.mxu0 0
      %2728 = vmatmul.mubr.bf16.gmra.mrb[0].mxu0 %v2593
      %v2729 = vpop.f32.mrb[0].mxu0
      %v2730 = vadd.f32 0.0, %v2729
      %v2731 = vpop.f32.mrb[0].mxu0
      %v2732 = vpop.f32.mrb[0].mxu0
      %v2733 = vadd.f32 0.0, %v2732
      %v2734 = vpop.f32.mrb[0].mxu0
      %2735 = vmatprep.mubr.bf16.mxu0 0
      %2736 = vmatmul.mubr.bf16.gmra.mrb[0].mxu0 %v2596
      %v2737 = vpop.f32.mrb[0].mxu0
      %v2738 = vadd.f32 0.0, %v2737
      %v2739 = vpop.f32.mrb[0].mxu0
      %v2740 = vpop.f32.mrb[0].mxu0
      %v2741 = vadd.f32 0.0, %v2740
      %v2742 = vpop.f32.mrb[0].mxu0
      %2743 = vmatprep.mubr.bf16.mxu0 0
      %2744 = vmatmul.mubr.bf16.gmra.mrb[0].mxu0 %v2599
      %v2745 = vpop.f32.mrb[0].mxu0
      %v2746 = vadd.f32 0.0, %v2745
      %v2747 = vpop.f32.mrb[0].mxu0
      %v2748 = vpop.f32.mrb[0].mxu0
      %v2749 = vadd.f32 0.0, %v2748
      %v2750 = vpop.f32.mrb[0].mxu0
      %2751 = vmatprep.mubr.bf16.mxu0 0
      %2752 = vmatmul.mubr.bf16.gmra.mrb[0].mxu0 %v2602
      %v2753 = vpop.f32.mrb[0].mxu0
      %v2754 = vadd.f32 0.0, %v2753
      %v2755 = vpop.f32.mrb[0].mxu0
      %v2756 = vpop.f32.mrb[0].mxu0
      %v2757 = vadd.f32 0.0, %v2756
      %v2758 = vpop.f32.mrb[0].mxu0
      %2759 = vmatprep.mubr.bf16.mxu0 0
      %2760 = vmatmul.mubr.bf16.gmra.mrb[0].mxu0 %v2605
      %v2761 = vpop.f32.mrb[0].mxu0
      %v2762 = vadd.f32 0.0, %v2761
      %v2763 = vpop.f32.mrb[0].mxu0
      %v2764 = vpop.f32.mrb[0].mxu0
      %v2765 = vadd.f32 0.0, %v2764
      %v2766 = vpop.f32.mrb[0].mxu0
      %2767 = vdwg.mxu0
      %v2768 = vsel %vm1773, %v2642, -inf
      %2769 = vmax.xlane.f32.xlu0 %v2768
      %v2770 = vpop.xlane.xlu0 %2769
      %v2771 = vsel %vm1773, %v2645, -inf
      %2772 = vmax.xlane.f32.xlu0 %v2771
      %v2773 = vpop.xlane.xlu0 %2772
      %v2774 = vsel %vm1773, %v2650, -inf
      %2775 = vmax.xlane.f32.xlu0 %v2774
      %v2776 = vpop.xlane.xlu0 %2775
      %v2777 = vsel %vm1773, %v2653, -inf
      %2778 = vmax.xlane.f32.xlu0 %v2777
      %v2779 = vpop.xlane.xlu0 %2778
      %v2780 = vsel %vm1773, %v2658, -inf
      %2781 = vmax.xlane.f32.xlu0 %v2780
      %v2782 = vpop.xlane.xlu0 %2781
      %v2783 = vsel %vm1773, %v2661, -inf
      %2784 = vmax.xlane.f32.xlu0 %v2783
      %v2785 = vpop.xlane.xlu0 %2784
      %v2786 = vsel %vm1773, %v2666, -inf
      %2787 = vmax.xlane.f32.xlu0 %v2786
      %v2788 = vpop.xlane.xlu0 %2787
      %v2789 = vsel %vm1773, %v2669, -inf
      %2790 = vmax.xlane.f32.xlu0 %v2789
      %v2791 = vpop.xlane.xlu0 %2790
      %v2792 = vsel %vm1773, %v2674, -inf
      %2793 = vmax.xlane.f32.xlu0 %v2792
      %v2794 = vpop.xlane.xlu0 %2793
      %v2795 = vsel %vm1773, %v2677, -inf
      %2796 = vmax.xlane.f32.xlu0 %v2795
      %v2797 = vpop.xlane.xlu0 %2796
      %v2798 = vsel %vm1773, %v2682, -inf
      %2799 = vmax.xlane.f32.xlu0 %v2798
      %v2800 = vpop.xlane.xlu0 %2799
      %v2801 = vsel %vm1773, %v2685, -inf
      %2802 = vmax.xlane.f32.xlu0 %v2801
      %v2803 = vpop.xlane.xlu0 %2802
      %v2804 = vsel %vm1773, %v2690, -inf
      %2805 = vmax.xlane.f32.xlu0 %v2804
      %v2806 = vpop.xlane.xlu0 %2805
      %v2807 = vsel %vm1773, %v2693, -inf
      %2808 = vmax.xlane.f32.xlu0 %v2807
      %v2809 = vpop.xlane.xlu0 %2808
      %v2810 = vsel %vm1773, %v2698, -inf
      %2811 = vmax.xlane.f32.xlu0 %v2810
      %v2812 = vpop.xlane.xlu0 %2811
      %v2813 = vsel %vm1773, %v2701, -inf
      %2814 = vmax.xlane.f32.xlu0 %v2813
      %v2815 = vpop.xlane.xlu0 %2814
      %v2816 = vsel %vm1773, %v2706, -inf
      %2817 = vmax.xlane.f32.xlu0 %v2816
      %v2818 = vpop.xlane.xlu0 %2817
      %v2819 = vsel %vm1773, %v2709, -inf
      %2820 = vmax.xlane.f32.xlu0 %v2819
      %v2821 = vpop.xlane.xlu0 %2820
      %v2822 = vsel %vm1773, %v2714, -inf
      %2823 = vmax.xlane.f32.xlu0 %v2822
      %v2824 = vpop.xlane.xlu0 %2823
      %v2825 = vsel %vm1773, %v2717, -inf
      %2826 = vmax.xlane.f32.xlu0 %v2825
      %v2827 = vpop.xlane.xlu0 %2826
      %v2828 = vsel %vm1773, %v2722, -inf
      %2829 = vmax.xlane.f32.xlu0 %v2828
      %v2830 = vpop.xlane.xlu0 %2829
      %v2831 = vsel %vm1773, %v2725, -inf
      %2832 = vmax.xlane.f32.xlu0 %v2831
      %v2833 = vpop.xlane.xlu0 %2832
      %v2834 = vsel %vm1773, %v2730, -inf
      %2835 = vmax.xlane.f32.xlu0 %v2834
      %v2836 = vpop.xlane.xlu0 %2835
      %v2837 = vsel %vm1773, %v2733, -inf
      %2838 = vmax.xlane.f32.xlu0 %v2837
      %v2839 = vpop.xlane.xlu0 %2838
      %v2840 = vsel %vm1773, %v2738, -inf
      %2841 = vmax.xlane.f32.xlu0 %v2840
      %v2842 = vpop.xlane.xlu0 %2841
      %v2843 = vsel %vm1773, %v2741, -inf
      %2844 = vmax.xlane.f32.xlu0 %v2843
      %v2845 = vpop.xlane.xlu0 %2844
      %v2846 = vsel %vm1773, %v2746, -inf
      %2847 = vmax.xlane.f32.xlu0 %v2846
      %v2848 = vpop.xlane.xlu0 %2847
      %v2849 = vsel %vm1773, %v2749, -inf
      %2850 = vmax.xlane.f32.xlu0 %v2849
      %v2851 = vpop.xlane.xlu0 %2850
      %v2852 = vsel %vm1773, %v2754, -inf
      %2853 = vmax.xlane.f32.xlu0 %v2852
      %v2854 = vpop.xlane.xlu0 %2853
      %v2855 = vsel %vm1773, %v2757, -inf
      %2856 = vmax.xlane.f32.xlu0 %v2855
      %v2857 = vpop.xlane.xlu0 %2856
      %v2858 = vsel %vm1773, %v2762, -inf
      %2859 = vmax.xlane.f32.xlu0 %v2858
      %v2860 = vpop.xlane.xlu0 %2859
      %v2861 = vsel %vm1773, %v2765, -inf
      %2862 = vmax.xlane.f32.xlu0 %v2861
      %v2863 = vpop.xlane.xlu0 %2862
      %v2864 = vsub.f32 %v2642, %v2770
      %v2865 = vsub.f32 %v2645, %v2773
      %v2866 = vsub.f32 %v2650, %v2776
      %v2867 = vsub.f32 %v2653, %v2779
      %v2868 = vsub.f32 %v2658, %v2782
      %v2869 = vsub.f32 %v2661, %v2785
      %v2870 = vsub.f32 %v2666, %v2788
      %v2871 = vsub.f32 %v2669, %v2791
      %v2872 = vsub.f32 %v2674, %v2794
      %v2873 = vsub.f32 %v2677, %v2797
      %v2874 = vsub.f32 %v2682, %v2800
      %v2875 = vsub.f32 %v2685, %v2803
      %v2876 = vsub.f32 %v2690, %v2806
      %v2877 = vsub.f32 %v2693, %v2809
      %v2878 = vsub.f32 %v2698, %v2812
      %v2879 = vsub.f32 %v2701, %v2815
      %v2880 = vsub.f32 %v2706, %v2818
      %v2881 = vsub.f32 %v2709, %v2821
      %v2882 = vsub.f32 %v2714, %v2824
      %v2883 = vsub.f32 %v2717, %v2827
      %v2884 = vsub.f32 %v2722, %v2830
      %v2885 = vsub.f32 %v2725, %v2833
      %v2886 = vsub.f32 %v2730, %v2836
      %v2887 = vsub.f32 %v2733, %v2839
      %v2888 = vsub.f32 %v2738, %v2842
      %v2889 = vsub.f32 %v2741, %v2845
      %v2890 = vsub.f32 %v2746, %v2848
      %v2891 = vsub.f32 %v2749, %v2851
      %v2892 = vsub.f32 %v2754, %v2854
      %v2893 = vsub.f32 %v2757, %v2857
      %v2894 = vsub.f32 %v2762, %v2860
      %v2895 = vsub.f32 %v2765, %v2863
      %v2896 = vmul.f32 %v2864, 1.442695
      %v2897 = vpow.pop %v2896
      %v2898 = vmul.f32 %v2865, 1.442695
      %v2899 = vpow.pop %v2898
      %v2900 = vmul.f32 %v2866, 1.442695
      %v2901 = vpow.pop %v2900
      %v2902 = vmul.f32 %v2867, 1.442695
      %v2903 = vpow.pop %v2902
      %v2904 = vmul.f32 %v2868, 1.442695
      %v2905 = vpow.pop %v2904
      %v2906 = vmul.f32 %v2869, 1.442695
      %v2907 = vpow.pop %v2906
      %v2908 = vmul.f32 %v2870, 1.442695
      %v2909 = vpow.pop %v2908
      %v2910 = vmul.f32 %v2871, 1.442695
      %v2911 = vpow.pop %v2910
      %v2912 = vmul.f32 %v2872, 1.442695
      %v2913 = vpow.pop %v2912
      %v2914 = vmul.f32 %v2873, 1.442695
      %v2915 = vpow.pop %v2914
      %v2916 = vmul.f32 %v2874, 1.442695
      %v2917 = vpow.pop %v2916
      %v2918 = vmul.f32 %v2875, 1.442695
      %v2919 = vpow.pop %v2918
      %v2920 = vmul.f32 %v2876, 1.442695
      %v2921 = vpow.pop %v2920
      %v2922 = vmul.f32 %v2877, 1.442695
      %v2923 = vpow.pop %v2922
      %v2924 = vmul.f32 %v2878, 1.442695
      %v2925 = vpow.pop %v2924
      %v2926 = vmul.f32 %v2879, 1.442695
      %v2927 = vpow.pop %v2926
      %v2928 = vmul.f32 %v2880, 1.442695
      %v2929 = vpow.pop %v2928
      %v2930 = vmul.f32 %v2881, 1.442695
      %v2931 = vpow.pop %v2930
      %v2932 = vmul.f32 %v2882, 1.442695
      %v2933 = vpow.pop %v2932
      %v2934 = vmul.f32 %v2883, 1.442695
      %v2935 = vpow.pop %v2934
      %v2936 = vmul.f32 %v2884, 1.442695
      %v2937 = vpow.pop %v2936
      %v2938 = vmul.f32 %v2885, 1.442695
      %v2939 = vpow.pop %v2938
      %v2940 = vmul.f32 %v2886, 1.442695
      %v2941 = vpow.pop %v2940
      %v2942 = vmul.f32 %v2887, 1.442695
      %v2943 = vpow.pop %v2942
      %v2944 = vmul.f32 %v2888, 1.442695
      %v2945 = vpow.pop %v2944
      %v2946 = vmul.f32 %v2889, 1.442695
      %v2947 = vpow.pop %v2946
      %v2948 = vmul.f32 %v2890, 1.442695
      %v2949 = vpow.pop %v2948
      %v2950 = vmul.f32 %v2891, 1.442695
      %v2951 = vpow.pop %v2950
      %v2952 = vmul.f32 %v2892, 1.442695
      %v2953 = vpow.pop %v2952
      %v2954 = vmul.f32 %v2893, 1.442695
      %v2955 = vpow.pop %v2954
      %v2956 = vmul.f32 %v2894, 1.442695
      %v2957 = vpow.pop %v2956
      %v2958 = vmul.f32 %v2895, 1.442695
      %v2959 = vpow.pop %v2958
      %v2960 = vsel %vm1773, %v2897, 0.0
      %2961 = vadd.xlane.f32.xlu0 %v2960
      %v2962 = vpop.xlane.xlu0 %2961
      %v2963 = vsel %vm1773, %v2899, 0.0
      %2964 = vadd.xlane.f32.xlu0 %v2963
      %v2965 = vpop.xlane.xlu0 %2964
      %v2966 = vsel %vm1773, %v2901, 0.0
      %2967 = vadd.xlane.f32.xlu0 %v2966
      %v2968 = vpop.xlane.xlu0 %2967
      %v2969 = vsel %vm1773, %v2903, 0.0
      %2970 = vadd.xlane.f32.xlu0 %v2969
      %v2971 = vpop.xlane.xlu0 %2970
      %v2972 = vsel %vm1773, %v2905, 0.0
      %2973 = vadd.xlane.f32.xlu0 %v2972
      %v2974 = vpop.xlane.xlu0 %2973
      %v2975 = vsel %vm1773, %v2907, 0.0
      %2976 = vadd.xlane.f32.xlu0 %v2975
      %v2977 = vpop.xlane.xlu0 %2976
      %v2978 = vsel %vm1773, %v2909, 0.0
      %2979 = vadd.xlane.f32.xlu0 %v2978
      %v2980 = vpop.xlane.xlu0 %2979
      %v2981 = vsel %vm1773, %v2911, 0.0
      %2982 = vadd.xlane.f32.xlu0 %v2981
      %v2983 = vpop.xlane.xlu0 %2982
      %v2984 = vsel %vm1773, %v2913, 0.0
      %2985 = vadd.xlane.f32.xlu0 %v2984
      %v2986 = vpop.xlane.xlu0 %2985
      %v2987 = vsel %vm1773, %v2915, 0.0
      %2988 = vadd.xlane.f32.xlu0 %v2987
      %v2989 = vpop.xlane.xlu0 %2988
      %v2990 = vsel %vm1773, %v2917, 0.0
      %2991 = vadd.xlane.f32.xlu0 %v2990
      %v2992 = vpop.xlane.xlu0 %2991
      %v2993 = vsel %vm1773, %v2919, 0.0
      %2994 = vadd.xlane.f32.xlu0 %v2993
      %v2995 = vpop.xlane.xlu0 %2994
      %v2996 = vsel %vm1773, %v2921, 0.0
      %2997 = vadd.xlane.f32.xlu0 %v2996
      %v2998 = vpop.xlane.xlu0 %2997
      %v2999 = vsel %vm1773, %v2923, 0.0
      %3000 = vadd.xlane.f32.xlu0 %v2999
      %v3001 = vpop.xlane.xlu0 %3000
      %v3002 = vsel %vm1773, %v2925, 0.0
      %3003 = vadd.xlane.f32.xlu0 %v3002
      %v3004 = vpop.xlane.xlu0 %3003
      %v3005 = vsel %vm1773, %v2927, 0.0
      %3006 = vadd.xlane.f32.xlu0 %v3005
      %v3007 = vpop.xlane.xlu0 %3006
      %v3008 = vsel %vm1773, %v2929, 0.0
      %3009 = vadd.xlane.f32.xlu0 %v3008
      %v3010 = vpop.xlane.xlu0 %3009
      %v3011 = vsel %vm1773, %v2931, 0.0
      %3012 = vadd.xlane.f32.xlu0 %v3011
      %v3013 = vpop.xlane.xlu0 %3012
      %v3014 = vsel %vm1773, %v2933, 0.0
      %3015 = vadd.xlane.f32.xlu0 %v3014
      %v3016 = vpop.xlane.xlu0 %3015
      %v3017 = vsel %vm1773, %v2935, 0.0
      %3018 = vadd.xlane.f32.xlu0 %v3017
      %v3019 = vpop.xlane.xlu0 %3018
      %v3020 = vsel %vm1773, %v2937, 0.0
      %3021 = vadd.xlane.f32.xlu0 %v3020
      %v3022 = vpop.xlane.xlu0 %3021
      %v3023 = vsel %vm1773, %v2939, 0.0
      %3024 = vadd.xlane.f32.xlu0 %v3023
      %v3025 = vpop.xlane.xlu0 %3024
      %v3026 = vsel %vm1773, %v2941, 0.0
      %3027 = vadd.xlane.f32.xlu0 %v3026
      %v3028 = vpop.xlane.xlu0 %3027
      %v3029 = vsel %vm1773, %v2943, 0.0
      %3030 = vadd.xlane.f32.xlu0 %v3029
      %v3031 = vpop.xlane.xlu0 %3030
      %v3032 = vsel %vm1773, %v2945, 0.0
      %3033 = vadd.xlane.f32.xlu0 %v3032
      %v3034 = vpop.xlane.xlu0 %3033
      %v3035 = vsel %vm1773, %v2947, 0.0
      %3036 = vadd.xlane.f32.xlu0 %v3035
      %v3037 = vpop.xlane.xlu0 %3036
      %v3038 = vsel %vm1773, %v2949, 0.0
      %3039 = vadd.xlane.f32.xlu0 %v3038
      %v3040 = vpop.xlane.xlu0 %3039
      %v3041 = vsel %vm1773, %v2951, 0.0
      %3042 = vadd.xlane.f32.xlu0 %v3041
      %v3043 = vpop.xlane.xlu0 %3042
      %v3044 = vsel %vm1773, %v2953, 0.0
      %3045 = vadd.xlane.f32.xlu0 %v3044
      %v3046 = vpop.xlane.xlu0 %3045
      %v3047 = vsel %vm1773, %v2955, 0.0
      %3048 = vadd.xlane.f32.xlu0 %v3047
      %v3049 = vpop.xlane.xlu0 %3048
      %v3050 = vsel %vm1773, %v2957, 0.0
      %3051 = vadd.xlane.f32.xlu0 %v3050
      %v3052 = vpop.xlane.xlu0 %3051
      %v3053 = vsel %vm1773, %v2959, 0.0
      %3054 = vadd.xlane.f32.xlu0 %v3053
      %v3055 = vpop.xlane.xlu0 %3054
      %v3056 = vrcp.pop %v2962
      %v3057 = vrcp.pop %v2965
      %v3058 = vrcp.pop %v2968
      %v3059 = vrcp.pop %v2971
      %v3060 = vrcp.pop %v2974
      %v3061 = vrcp.pop %v2977
      %v3062 = vrcp.pop %v2980
      %v3063 = vrcp.pop %v2983
      %v3064 = vrcp.pop %v2986
      %v3065 = vrcp.pop %v2989
      %v3066 = vrcp.pop %v2992
      %v3067 = vrcp.pop %v2995
      %v3068 = vrcp.pop %v2998
      %v3069 = vrcp.pop %v3001
      %v3070 = vrcp.pop %v3004
      %v3071 = vrcp.pop %v3007
      %v3072 = vrcp.pop %v3010
      %v3073 = vrcp.pop %v3013
      %v3074 = vrcp.pop %v3016
      %v3075 = vrcp.pop %v3019
      %v3076 = vrcp.pop %v3022
      %v3077 = vrcp.pop %v3025
      %v3078 = vrcp.pop %v3028
      %v3079 = vrcp.pop %v3031
      %v3080 = vrcp.pop %v3034
      %v3081 = vrcp.pop %v3037
      %v3082 = vrcp.pop %v3040
      %v3083 = vrcp.pop %v3043
      %v3084 = vrcp.pop %v3046
      %v3085 = vrcp.pop %v3049
      %v3086 = vrcp.pop %v3052
      %v3087 = vrcp.pop %v3055
      %v3088 = vmul.f32 %v2897, %v3056
      %v3089 = vmul.f32 %v2899, %v3057
      %v3090 = vmul.f32 %v2901, %v3058
      %v3091 = vmul.f32 %v2903, %v3059
      %v3092 = vmul.f32 %v2905, %v3060
      %v3093 = vmul.f32 %v2907, %v3061
      %v3094 = vmul.f32 %v2909, %v3062
      %v3095 = vmul.f32 %v2911, %v3063
      %v3096 = vmul.f32 %v2913, %v3064
      %v3097 = vmul.f32 %v2915, %v3065
      %v3098 = vmul.f32 %v2917, %v3066
      %v3099 = vmul.f32 %v2919, %v3067
      %v3100 = vmul.f32 %v2921, %v3068
      %v3101 = vmul.f32 %v2923, %v3069
      %v3102 = vmul.f32 %v2925, %v3070
      %v3103 = vmul.f32 %v2927, %v3071
      %v3104 = vmul.f32 %v2929, %v3072
      %v3105 = vmul.f32 %v2931, %v3073
      %v3106 = vmul.f32 %v2933, %v3074
      %v3107 = vmul.f32 %v2935, %v3075
      %v3108 = vmul.f32 %v2937, %v3076
      %v3109 = vmul.f32 %v2939, %v3077
      %v3110 = vmul.f32 %v2941, %v3078
      %v3111 = vmul.f32 %v2943, %v3079
      %v3112 = vmul.f32 %v2945, %v3080
      %v3113 = vmul.f32 %v2947, %v3081
      %v3114 = vmul.f32 %v2949, %v3082
      %v3115 = vmul.f32 %v2951, %v3083
      %v3116 = vmul.f32 %v2953, %v3084
      %v3117 = vmul.f32 %v2955, %v3085
      %v3118 = vmul.f32 %v2957, %v3086
      %v3119 = vmul.f32 %v2959, %v3087
      %v3120 = vpack.c.bf16 %v3089, %v3088
      %v3121 = vpack.c.bf16 %v3091, %v3090
      %v3122 = vpack.c.bf16 %v3093, %v3092
      %v3123 = vpack.c.bf16 %v3095, %v3094
      %v3124 = vpack.c.bf16 %v3097, %v3096
      %v3125 = vpack.c.bf16 %v3099, %v3098
      %v3126 = vpack.c.bf16 %v3101, %v3100
      %v3127 = vpack.c.bf16 %v3103, %v3102
      %v3128 = vpack.c.bf16 %v3105, %v3104
      %v3129 = vpack.c.bf16 %v3107, %v3106
      %v3130 = vpack.c.bf16 %v3109, %v3108
      %v3131 = vpack.c.bf16 %v3111, %v3110
      %v3132 = vpack.c.bf16 %v3113, %v3112
      %v3133 = vpack.c.bf16 %v3115, %v3114
      %v3134 = vpack.c.bf16 %v3117, %v3116
      %v3135 = vpack.c.bf16 %v3119, %v3118
      %s3136 = scalar_lea.vmem [#allocation3], 32
      %v3137 = vld [vmem:[%s3136] sm:$0xff]
      %v3138 = vld [vmem:[%s3136 + $0x8] sm:$0xff]
      %v3139 = vld [vmem:[%s3136 + $0x10] sm:$0xff]
      %v3140 = vld [vmem:[%s3136 + $0x18] sm:$0xff]
      %v3142 = vsel %vm1773, %v3120, 0
      %v3145 = vsel %vm1773, %v3121, 0
      %v3148 = vsel %vm1773, %v3122, 0
      %v3151 = vsel %vm1773, %v3123, 0
      %v3154 = vsel %vm1773, %v3124, 0
      %v3157 = vsel %vm1773, %v3125, 0
      %v3160 = vsel %vm1773, %v3126, 0
      %v3163 = vsel %vm1773, %v3127, 0
      %v3166 = vsel %vm1773, %v3128, 0
      %v3169 = vsel %vm1773, %v3129, 0
      %v3172 = vsel %vm1773, %v3130, 0
      %v3175 = vsel %vm1773, %v3131, 0
      %v3178 = vsel %vm1773, %v3132, 0
      %v3181 = vsel %vm1773, %v3133, 0
      %v3184 = vsel %vm1773, %v3134, 0
      %v3187 = vsel %vm1773, %v3135, 0
      %3189 = vmatprep.subr.bf16.mxu0 0
      %3190 = vmatpush1.bf16.msra.mxu0 %v3137
      %3191 = vmatprep.subr.bf16.mxu0 0
      %3192 = vmatpush1.bf16.msra.mxu0 %v3138
      %3193 = vmatprep.subr.bf16.mxu0 0
      %3194 = vmatpush1.bf16.msra.mxu0 %v3139
      %3195 = vmatprep.subr.bf16.mxu0 0
      %3196 = vmatpush1.bf16.msra.mxu0 %v3140
      %3197 = vmatprep.subr.bf16.mxu0 0
      %3198 = vmatpush1.bf16.msra.mxu0 0
      %3199 = vmatprep.subr.bf16.mxu0 0
      %3200 = vmatpush1.bf16.msra.mxu0 0
      %3201 = vmatprep.subr.bf16.mxu0 0
      %3202 = vmatpush1.bf16.msra.mxu0 0
      %3203 = vmatprep.subr.bf16.mxu0 0
      %3204 = vmatpush1.bf16.msra.mxu0 0
      %3205 = vmatprep.subr.bf16.mxu0 0
      %3206 = vmatpush1.bf16.msra.mxu0 0
      %3207 = vmatprep.subr.bf16.mxu0 0
      %3208 = vmatpush1.bf16.msra.mxu0 0
      %3209 = vmatprep.subr.bf16.mxu0 0
      %3210 = vmatpush1.bf16.msra.mxu0 0
      %3211 = vmatprep.subr.bf16.mxu0 0
      %3212 = vmatpush1.bf16.msra.mxu0 0
      %3213 = vmatprep.subr.bf16.mxu0 0
      %3214 = vmatpush1.bf16.msra.mxu0 0
      %3215 = vmatprep.subr.bf16.mxu0 0
      %3216 = vmatpush1.bf16.msra.mxu0 0
      %3217 = vmatprep.subr.bf16.mxu0 0
      %3218 = vmatpush1.bf16.msra.mxu0 0
      %3219 = vmatprep.subr.bf16.mxu0 0
      %3220 = vmatpush1.bf16.msra.mxu0 0
      %3221 = vmatprep.mubr.bf16.mxu0 0
      %3222 = vmatmul.mubr.bf16.gmra.mrb[0].mxu0 %v3142
      %v3223 = vpop.f32.mrb[0].mxu0
      %v3224 = vadd.f32 0.0, %v3223
      %v3225 = vpop.f32.mrb[0].mxu0
      %v3226 = vpop.f32.mrb[0].mxu0
      %v3227 = vadd.f32 0.0, %v3226
      %v3228 = vpop.f32.mrb[0].mxu0
      %3229 = vmatprep.mubr.bf16.mxu0 0
      %3230 = vmatmul.mubr.bf16.gmra.mrb[0].mxu0 %v3145
      %v3231 = vpop.f32.mrb[0].mxu0
      %v3232 = vadd.f32 0.0, %v3231
      %v3233 = vpop.f32.mrb[0].mxu0
      %v3234 = vpop.f32.mrb[0].mxu0
      %v3235 = vadd.f32 0.0, %v3234
      %v3236 = vpop.f32.mrb[0].mxu0
      %3237 = vmatprep.mubr.bf16.mxu0 0
      %3238 = vmatmul.mubr.bf16.gmra.mrb[0].mxu0 %v3148
      %v3239 = vpop.f32.mrb[0].mxu0
      %v3240 = vadd.f32 0.0, %v3239
      %v3241 = vpop.f32.mrb[0].mxu0
      %v3242 = vpop.f32.mrb[0].mxu0
      %v3243 = vadd.f32 0.0, %v3242
      %v3244 = vpop.f32.mrb[0].mxu0
      %3245 = vmatprep.mubr.bf16.mxu0 0
      %3246 = vmatmul.mubr.bf16.gmra.mrb[0].mxu0 %v3151
      %v3247 = vpop.f32.mrb[0].mxu0
      %v3248 = vadd.f32 0.0, %v3247
      %v3249 = vpop.f32.mrb[0].mxu0
      %v3250 = vpop.f32.mrb[0].mxu0
      %v3251 = vadd.f32 0.0, %v3250
      %v3252 = vpop.f32.mrb[0].mxu0
      %3253 = vmatprep.mubr.bf16.mxu0 0
      %3254 = vmatmul.mubr.bf16.gmra.mrb[0].mxu0 %v3154
      %v3255 = vpop.f32.mrb[0].mxu0
      %v3256 = vadd.f32 0.0, %v3255
      %v3257 = vpop.f32.mrb[0].mxu0
      %v3258 = vpop.f32.mrb[0].mxu0
      %v3259 = vadd.f32 0.0, %v3258
      %v3260 = vpop.f32.mrb[0].mxu0
      %3261 = vmatprep.mubr.bf16.mxu0 0
      %3262 = vmatmul.mubr.bf16.gmra.mrb[0].mxu0 %v3157
      %v3263 = vpop.f32.mrb[0].mxu0
      %v3264 = vadd.f32 0.0, %v3263
      %v3265 = vpop.f32.mrb[0].mxu0
      %v3266 = vpop.f32.mrb[0].mxu0
      %v3267 = vadd.f32 0.0, %v3266
      %v3268 = vpop.f32.mrb[0].mxu0
      %3269 = vmatprep.mubr.bf16.mxu0 0
      %3270 = vmatmul.mubr.bf16.gmra.mrb[0].mxu0 %v3160
      %v3271 = vpop.f32.mrb[0].mxu0
      %v3272 = vadd.f32 0.0, %v3271
      %v3273 = vpop.f32.mrb[0].mxu0
      %v3274 = vpop.f32.mrb[0].mxu0
      %v3275 = vadd.f32 0.0, %v3274
      %v3276 = vpop.f32.mrb[0].mxu0
      %3277 = vmatprep.mubr.bf16.mxu0 0
      %3278 = vmatmul.mubr.bf16.gmra.mrb[0].mxu0 %v3163
      %v3279 = vpop.f32.mrb[0].mxu0
      %v3280 = vadd.f32 0.0, %v3279
      %v3281 = vpop.f32.mrb[0].mxu0
      %v3282 = vpop.f32.mrb[0].mxu0
      %v3283 = vadd.f32 0.0, %v3282
      %v3284 = vpop.f32.mrb[0].mxu0
      %3285 = vmatprep.mubr.bf16.mxu0 0
      %3286 = vmatmul.mubr.bf16.gmra.mrb[0].mxu0 %v3166
      %v3287 = vpop.f32.mrb[0].mxu0
      %v3288 = vadd.f32 0.0, %v3287
      %v3289 = vpop.f32.mrb[0].mxu0
      %v3290 = vpop.f32.mrb[0].mxu0
      %v3291 = vadd.f32 0.0, %v3290
      %v3292 = vpop.f32.mrb[0].mxu0
      %3293 = vmatprep.mubr.bf16.mxu0 0
      %3294 = vmatmul.mubr.bf16.gmra.mrb[0].mxu0 %v3169
      %v3295 = vpop.f32.mrb[0].mxu0
      %v3296 = vadd.f32 0.0, %v3295
      %v3297 = vpop.f32.mrb[0].mxu0
      %v3298 = vpop.f32.mrb[0].mxu0
      %v3299 = vadd.f32 0.0, %v3298
      %v3300 = vpop.f32.mrb[0].mxu0
      %3301 = vmatprep.mubr.bf16.mxu0 0
      %3302 = vmatmul.mubr.bf16.gmra.mrb[0].mxu0 %v3172
      %v3303 = vpop.f32.mrb[0].mxu0
      %v3304 = vadd.f32 0.0, %v3303
      %v3305 = vpop.f32.mrb[0].mxu0
      %v3306 = vpop.f32.mrb[0].mxu0
      %v3307 = vadd.f32 0.0, %v3306
      %v3308 = vpop.f32.mrb[0].mxu0
      %3309 = vmatprep.mubr.bf16.mxu0 0
      %3310 = vmatmul.mubr.bf16.gmra.mrb[0].mxu0 %v3175
      %v3311 = vpop.f32.mrb[0].mxu0
      %v3312 = vadd.f32 0.0, %v3311
      %v3313 = vpop.f32.mrb[0].mxu0
      %v3314 = vpop.f32.mrb[0].mxu0
      %v3315 = vadd.f32 0.0, %v3314
      %v3316 = vpop.f32.mrb[0].mxu0
      %3317 = vmatprep.mubr.bf16.mxu0 0
      %3318 = vmatmul.mubr.bf16.gmra.mrb[0].mxu0 %v3178
      %v3319 = vpop.f32.mrb[0].mxu0
      %v3320 = vadd.f32 0.0, %v3319
      %v3321 = vpop.f32.mrb[0].mxu0
      %v3322 = vpop.f32.mrb[0].mxu0
      %v3323 = vadd.f32 0.0, %v3322
      %v3324 = vpop.f32.mrb[0].mxu0
      %3325 = vmatprep.mubr.bf16.mxu0 0
      %3326 = vmatmul.mubr.bf16.gmra.mrb[0].mxu0 %v3181
      %v3327 = vpop.f32.mrb[0].mxu0
      %v3328 = vadd.f32 0.0, %v3327
      %v3329 = vpop.f32.mrb[0].mxu0
      %v3330 = vpop.f32.mrb[0].mxu0
      %v3331 = vadd.f32 0.0, %v3330
      %v3332 = vpop.f32.mrb[0].mxu0
      %3333 = vmatprep.mubr.bf16.mxu0 0
      %3334 = vmatmul.mubr.bf16.gmra.mrb[0].mxu0 %v3184
      %v3335 = vpop.f32.mrb[0].mxu0
      %v3336 = vadd.f32 0.0, %v3335
      %v3337 = vpop.f32.mrb[0].mxu0
      %v3338 = vpop.f32.mrb[0].mxu0
      %v3339 = vadd.f32 0.0, %v3338
      %v3340 = vpop.f32.mrb[0].mxu0
      %3341 = vmatprep.mubr.bf16.mxu0 0
      %3342 = vmatmul.mubr.bf16.gmra.mrb[0].mxu0 %v3187
      %v3343 = vpop.f32.mrb[0].mxu0
      %v3344 = vadd.f32 0.0, %v3343
      %v3345 = vpop.f32.mrb[0].mxu0
      %v3346 = vpop.f32.mrb[0].mxu0
      %v3347 = vadd.f32 0.0, %v3346
      %v3348 = vpop.f32.mrb[0].mxu0
      %3349 = vdwg.mxu0
      %3382 = vrot.lane.b32.xlu0 %v3224, 16
      %v3383 = vpop.permute.xlu0 %3382
      %3384 = vrot.lane.b32.xlu0 %v3227, 16
      %v3385 = vpop.permute.xlu0 %3384
      %3386 = vrot.lane.b32.xlu0 %v3232, 16
      %v3387 = vpop.permute.xlu0 %3386
      %3388 = vrot.lane.b32.xlu0 %v3235, 16
      %v3389 = vpop.permute.xlu0 %3388
      %3390 = vrot.lane.b32.xlu0 %v3240, 16
      %v3391 = vpop.permute.xlu0 %3390
      %3392 = vrot.lane.b32.xlu0 %v3243, 16
      %v3393 = vpop.permute.xlu0 %3392
      %3394 = vrot.lane.b32.xlu0 %v3248, 16
      %v3395 = vpop.permute.xlu0 %3394
      %3396 = vrot.lane.b32.xlu0 %v3251, 16
      %v3397 = vpop.permute.xlu0 %3396
      %3398 = vrot.lane.b32.xlu0 %v3256, 16
      %v3399 = vpop.permute.xlu0 %3398
      %3400 = vrot.lane.b32.xlu0 %v3259, 16
      %v3401 = vpop.permute.xlu0 %3400
      %3402 = vrot.lane.b32.xlu0 %v3264, 16
      %v3403 = vpop.permute.xlu0 %3402
      %3404 = vrot.lane.b32.xlu0 %v3267, 16
      %v3405 = vpop.permute.xlu0 %3404
      %3406 = vrot.lane.b32.xlu0 %v3272, 16
      %v3407 = vpop.permute.xlu0 %3406
      %3408 = vrot.lane.b32.xlu0 %v3275, 16
      %v3409 = vpop.permute.xlu0 %3408
      %3410 = vrot.lane.b32.xlu0 %v3280, 16
      %v3411 = vpop.permute.xlu0 %3410
      %3412 = vrot.lane.b32.xlu0 %v3283, 16
      %v3413 = vpop.permute.xlu0 %3412
      %3414 = vrot.lane.b32.xlu0 %v3288, 16
      %v3415 = vpop.permute.xlu0 %3414
      %3416 = vrot.lane.b32.xlu0 %v3291, 16
      %v3417 = vpop.permute.xlu0 %3416
      %3418 = vrot.lane.b32.xlu0 %v3296, 16
      %v3419 = vpop.permute.xlu0 %3418
      %3420 = vrot.lane.b32.xlu0 %v3299, 16
      %v3421 = vpop.permute.xlu0 %3420
      %3422 = vrot.lane.b32.xlu0 %v3304, 16
      %v3423 = vpop.permute.xlu0 %3422
      %3424 = vrot.lane.b32.xlu0 %v3307, 16
      %v3425 = vpop.permute.xlu0 %3424
      %3426 = vrot.lane.b32.xlu0 %v3312, 16
      %v3427 = vpop.permute.xlu0 %3426
      %3428 = vrot.lane.b32.xlu0 %v3315, 16
      %v3429 = vpop.permute.xlu0 %3428
      %3430 = vrot.lane.b32.xlu0 %v3320, 16
      %v3431 = vpop.permute.xlu0 %3430
      %3432 = vrot.lane.b32.xlu0 %v3323, 16
      %v3433 = vpop.permute.xlu0 %3432
      %3434 = vrot.lane.b32.xlu0 %v3328, 16
      %v3435 = vpop.permute.xlu0 %3434
      %3436 = vrot.lane.b32.xlu0 %v3331, 16
      %v3437 = vpop.permute.xlu0 %3436
      %3438 = vrot.lane.b32.xlu0 %v3336, 16
      %v3439 = vpop.permute.xlu0 %3438
      %3440 = vrot.lane.b32.xlu0 %v3339, 16
      %v3441 = vpop.permute.xlu0 %3440
      %3442 = vrot.lane.b32.xlu0 %v3344, 16
      %v3443 = vpop.permute.xlu0 %3442
      %3444 = vrot.lane.b32.xlu0 %v3347, 16
      %v3445 = vpop.permute.xlu0 %3444
      %v3478 = vsel %vm1563, %v2229, %v3383
      %v3479 = vsel %vm1563, %v2232, %v3385
      %v3480 = vsel %vm1563, %v2237, %v3387
      %v3481 = vsel %vm1563, %v2240, %v3389
      %v3482 = vsel %vm1563, %v2245, %v3391
      %v3483 = vsel %vm1563, %v2248, %v3393
      %v3484 = vsel %vm1563, %v2253, %v3395
      %v3485 = vsel %vm1563, %v2256, %v3397
      %v3486 = vsel %vm1563, %v2261, %v3399
      %v3487 = vsel %vm1563, %v2264, %v3401
      %v3488 = vsel %vm1563, %v2269, %v3403
      %v3489 = vsel %vm1563, %v2272, %v3405
      %v3490 = vsel %vm1563, %v2277, %v3407
      %v3491 = vsel %vm1563, %v2280, %v3409
      %v3492 = vsel %vm1563, %v2285, %v3411
      %v3493 = vsel %vm1563, %v2288, %v3413
      %v3494 = vsel %vm1563, %v2293, %v3415
      %v3495 = vsel %vm1563, %v2296, %v3417
      %v3496 = vsel %vm1563, %v2301, %v3419
      %v3497 = vsel %vm1563, %v2304, %v3421
      %v3498 = vsel %vm1563, %v2309, %v3423
      %v3499 = vsel %vm1563, %v2312, %v3425
      %v3500 = vsel %vm1563, %v2317, %v3427
      %v3501 = vsel %vm1563, %v2320, %v3429
      %v3502 = vsel %vm1563, %v2325, %v3431
      %v3503 = vsel %vm1563, %v2328, %v3433
      %v3504 = vsel %vm1563, %v2333, %v3435
      %v3505 = vsel %vm1563, %v2336, %v3437
      %v3506 = vsel %vm1563, %v2341, %v3439
      %v3507 = vsel %vm1563, %v2344, %v3441
      %v3508 = vsel %vm1563, %v2349, %v3443
      %v3509 = vsel %vm1563, %v2352, %v3445
      %v3510 = vpack.c.bf16 %v3479, %v3478
      %v3511 = vpack.c.bf16 %v3481, %v3480
      %v3512 = vpack.c.bf16 %v3483, %v3482
      %v3513 = vpack.c.bf16 %v3485, %v3484
      %v3514 = vpack.c.bf16 %v3487, %v3486
      %v3515 = vpack.c.bf16 %v3489, %v3488
      %v3516 = vpack.c.bf16 %v3491, %v3490
      %v3517 = vpack.c.bf16 %v3493, %v3492
      %v3518 = vpack.c.bf16 %v3495, %v3494
      %v3519 = vpack.c.bf16 %v3497, %v3496
      %v3520 = vpack.c.bf16 %v3499, %v3498
      %v3521 = vpack.c.bf16 %v3501, %v3500
      %v3522 = vpack.c.bf16 %v3503, %v3502
      %v3523 = vpack.c.bf16 %v3505, %v3504
      %v3524 = vpack.c.bf16 %v3507, %v3506
      %v3525 = vpack.c.bf16 %v3509, %v3508
      %v3526 = vld [vmem:[%s12] sm:$0xf]
      %v3527 = vld [vmem:[%s12 + $0x4] sm:$0xf]
      %v3528 = vld [vmem:[%s12 + $0x8] sm:$0xf]
      %v3529 = vld [vmem:[%s12 + $0xc] sm:$0xf]
      %v3530 = vld [vmem:[%s13] sm:$0x1]
      %v3532 = vlaneseq
      %v3533 = vshrl.u32 %v3532, 7
      %v3534 = vsub.s32 0, %v3533
      %v3535 = vrot.slane %v3530, %v3534
      %v3541 = vunpack.c.l.b16 %v3526
      %v3542 = vunpack.c.l.b16 %v3527
      %v3543 = vunpack.c.l.b16 %v3528
      %v3544 = vunpack.c.l.b16 %v3529
      %v3545 = vpack.c.b16 %v3542, %v3541
      %v3546 = vpack.c.b16 %v3544, %v3543
      %v3550 = vsel %vm1336, %v3510, 0
      %v3553 = vsel %vm1336, %v3511, 0
      %v3556 = vsel %vm1336, %v3512, 0
      %v3559 = vsel %vm1336, %v3513, 0
      %v3562 = vsel %vm1336, %v3514, 0
      %v3565 = vsel %vm1336, %v3515, 0
      %v3568 = vsel %vm1336, %v3516, 0
      %v3571 = vsel %vm1336, %v3517, 0
      %v3574 = vsel %vm1336, %v3518, 0
      %v3577 = vsel %vm1336, %v3519, 0
      %v3580 = vsel %vm1336, %v3520, 0
      %v3583 = vsel %vm1336, %v3521, 0
      %v3586 = vsel %vm1336, %v3522, 0
      %v3589 = vsel %vm1336, %v3523, 0
      %v3592 = vsel %vm1336, %v3524, 0
      %v3595 = vsel %vm1336, %v3525, 0
      %3597 = vmatprep.subr.bf16.mxu0 0
      %3598 = vmatpush1.bf16.msra.mxu0 %v3545
      %3599 = vmatprep.subr.bf16.mxu0 0
      %3600 = vmatpush1.bf16.msra.mxu0 %v3546
      %3601 = vmatprep.subr.bf16.mxu0 0
      %3602 = vmatpush1.bf16.msra.mxu0 0
      %3603 = vmatprep.subr.bf16.mxu0 0
      %3604 = vmatpush1.bf16.msra.mxu0 0
      %3605 = vmatprep.subr.bf16.mxu0 0
      %3606 = vmatpush1.bf16.msra.mxu0 0
      %3607 = vmatprep.subr.bf16.mxu0 0
      %3608 = vmatpush1.bf16.msra.mxu0 0
      %3609 = vmatprep.subr.bf16.mxu0 0
      %3610 = vmatpush1.bf16.msra.mxu0 0
      %3611 = vmatprep.subr.bf16.mxu0 0
      %3612 = vmatpush1.bf16.msra.mxu0 0
      %3613 = vmatprep.subr.bf16.mxu0 0
      %3614 = vmatpush1.bf16.msra.mxu0 0
      %3615 = vmatprep.subr.bf16.mxu0 0
      %3616 = vmatpush1.bf16.msra.mxu0 0
      %3617 = vmatprep.subr.bf16.mxu0 0
      %3618 = vmatpush1.bf16.msra.mxu0 0
      %3619 = vmatprep.subr.bf16.mxu0 0
      %3620 = vmatpush1.bf16.msra.mxu0 0
      %3621 = vmatprep.subr.bf16.mxu0 0
      %3622 = vmatpush1.bf16.msra.mxu0 0
      %3623 = vmatprep.subr.bf16.mxu0 0
      %3624 = vmatpush1.bf16.msra.mxu0 0
      %3625 = vmatprep.subr.bf16.mxu0 0
      %3626 = vmatpush1.bf16.msra.mxu0 0
      %3627 = vmatprep.subr.bf16.mxu0 0
      %3628 = vmatpush1.bf16.msra.mxu0 0
      %3629 = vmatprep.mubr.bf16.mxu0 0
      %3630 = vmatmul.mubr.bf16.gmra.mrb[0].mxu0 %v3550
      %v3631 = vpop.f32.mrb[0].mxu0
      %v3632 = vadd.f32 %v3535, %v3631
      %v3633 = vpop.f32.mrb[0].mxu0
      %v3634 = vpop.f32.mrb[0].mxu0
      %v3635 = vadd.f32 %v3535, %v3634
      %v3636 = vpop.f32.mrb[0].mxu0
      %3637 = vmatprep.mubr.bf16.mxu0 0
      %3638 = vmatmul.mubr.bf16.gmra.mrb[0].mxu0 %v3553
      %v3639 = vpop.f32.mrb[0].mxu0
      %v3640 = vadd.f32 %v3535, %v3639
      %v3641 = vpop.f32.mrb[0].mxu0
      %v3642 = vpop.f32.mrb[0].mxu0
      %v3643 = vadd.f32 %v3535, %v3642
      %v3644 = vpop.f32.mrb[0].mxu0
      %3645 = vmatprep.mubr.bf16.mxu0 0
      %3646 = vmatmul.mubr.bf16.gmra.mrb[0].mxu0 %v3556
      %v3647 = vpop.f32.mrb[0].mxu0
      %v3648 = vadd.f32 %v3535, %v3647
      %v3649 = vpop.f32.mrb[0].mxu0
      %v3650 = vpop.f32.mrb[0].mxu0
      %v3651 = vadd.f32 %v3535, %v3650
      %v3652 = vpop.f32.mrb[0].mxu0
      %3653 = vmatprep.mubr.bf16.mxu0 0
      %3654 = vmatmul.mubr.bf16.gmra.mrb[0].mxu0 %v3559
      %v3655 = vpop.f32.mrb[0].mxu0
      %v3656 = vadd.f32 %v3535, %v3655
      %v3657 = vpop.f32.mrb[0].mxu0
      %v3658 = vpop.f32.mrb[0].mxu0
      %v3659 = vadd.f32 %v3535, %v3658
      %v3660 = vpop.f32.mrb[0].mxu0
      %3661 = vmatprep.mubr.bf16.mxu0 0
      %3662 = vmatmul.mubr.bf16.gmra.mrb[0].mxu0 %v3562
      %v3663 = vpop.f32.mrb[0].mxu0
      %v3664 = vadd.f32 %v3535, %v3663
      %v3665 = vpop.f32.mrb[0].mxu0
      %v3666 = vpop.f32.mrb[0].mxu0
      %v3667 = vadd.f32 %v3535, %v3666
      %v3668 = vpop.f32.mrb[0].mxu0
      %3669 = vmatprep.mubr.bf16.mxu0 0
      %3670 = vmatmul.mubr.bf16.gmra.mrb[0].mxu0 %v3565
      %v3671 = vpop.f32.mrb[0].mxu0
      %v3672 = vadd.f32 %v3535, %v3671
      %v3673 = vpop.f32.mrb[0].mxu0
      %v3674 = vpop.f32.mrb[0].mxu0
      %v3675 = vadd.f32 %v3535, %v3674
      %v3676 = vpop.f32.mrb[0].mxu0
      %3677 = vmatprep.mubr.bf16.mxu0 0
      %3678 = vmatmul.mubr.bf16.gmra.mrb[0].mxu0 %v3568
      %v3679 = vpop.f32.mrb[0].mxu0
      %v3680 = vadd.f32 %v3535, %v3679
      %v3681 = vpop.f32.mrb[0].mxu0
      %v3682 = vpop.f32.mrb[0].mxu0
      %v3683 = vadd.f32 %v3535, %v3682
      %v3684 = vpop.f32.mrb[0].mxu0
      %3685 = vmatprep.mubr.bf16.mxu0 0
      %3686 = vmatmul.mubr.bf16.gmra.mrb[0].mxu0 %v3571
      %v3687 = vpop.f32.mrb[0].mxu0
      %v3688 = vadd.f32 %v3535, %v3687
      %v3689 = vpop.f32.mrb[0].mxu0
      %v3690 = vpop.f32.mrb[0].mxu0
      %v3691 = vadd.f32 %v3535, %v3690
      %v3692 = vpop.f32.mrb[0].mxu0
      %3693 = vmatprep.mubr.bf16.mxu0 0
      %3694 = vmatmul.mubr.bf16.gmra.mrb[0].mxu0 %v3574
      %v3695 = vpop.f32.mrb[0].mxu0
      %v3696 = vadd.f32 %v3535, %v3695
      %v3697 = vpop.f32.mrb[0].mxu0
      %v3698 = vpop.f32.mrb[0].mxu0
      %v3699 = vadd.f32 %v3535, %v3698
      %v3700 = vpop.f32.mrb[0].mxu0
      %3701 = vmatprep.mubr.bf16.mxu0 0
      %3702 = vmatmul.mubr.bf16.gmra.mrb[0].mxu0 %v3577
      %v3703 = vpop.f32.mrb[0].mxu0
      %v3704 = vadd.f32 %v3535, %v3703
      %v3705 = vpop.f32.mrb[0].mxu0
      %v3706 = vpop.f32.mrb[0].mxu0
      %v3707 = vadd.f32 %v3535, %v3706
      %v3708 = vpop.f32.mrb[0].mxu0
      %3709 = vmatprep.mubr.bf16.mxu0 0
      %3710 = vmatmul.mubr.bf16.gmra.mrb[0].mxu0 %v3580
      %v3711 = vpop.f32.mrb[0].mxu0
      %v3712 = vadd.f32 %v3535, %v3711
      %v3713 = vpop.f32.mrb[0].mxu0
      %v3714 = vpop.f32.mrb[0].mxu0
      %v3715 = vadd.f32 %v3535, %v3714
      %v3716 = vpop.f32.mrb[0].mxu0
      %3717 = vmatprep.mubr.bf16.mxu0 0
      %3718 = vmatmul.mubr.bf16.gmra.mrb[0].mxu0 %v3583
      %v3719 = vpop.f32.mrb[0].mxu0
      %v3720 = vadd.f32 %v3535, %v3719
      %v3721 = vpop.f32.mrb[0].mxu0
      %v3722 = vpop.f32.mrb[0].mxu0
      %v3723 = vadd.f32 %v3535, %v3722
      %v3724 = vpop.f32.mrb[0].mxu0
      %3725 = vmatprep.mubr.bf16.mxu0 0
      %3726 = vmatmul.mubr.bf16.gmra.mrb[0].mxu0 %v3586
      %v3727 = vpop.f32.mrb[0].mxu0
      %v3728 = vadd.f32 %v3535, %v3727
      %v3729 = vpop.f32.mrb[0].mxu0
      %v3730 = vpop.f32.mrb[0].mxu0
      %v3731 = vadd.f32 %v3535, %v3730
      %v3732 = vpop.f32.mrb[0].mxu0
      %3733 = vmatprep.mubr.bf16.mxu0 0
      %3734 = vmatmul.mubr.bf16.gmra.mrb[0].mxu0 %v3589
      %v3735 = vpop.f32.mrb[0].mxu0
      %v3736 = vadd.f32 %v3535, %v3735
      %v3737 = vpop.f32.mrb[0].mxu0
      %v3738 = vpop.f32.mrb[0].mxu0
      %v3739 = vadd.f32 %v3535, %v3738
      %v3740 = vpop.f32.mrb[0].mxu0
      %3741 = vmatprep.mubr.bf16.mxu0 0
      %3742 = vmatmul.mubr.bf16.gmra.mrb[0].mxu0 %v3592
      %v3743 = vpop.f32.mrb[0].mxu0
      %v3744 = vadd.f32 %v3535, %v3743
      %v3745 = vpop.f32.mrb[0].mxu0
      %v3746 = vpop.f32.mrb[0].mxu0
      %v3747 = vadd.f32 %v3535, %v3746
      %v3748 = vpop.f32.mrb[0].mxu0
      %3749 = vmatprep.mubr.bf16.mxu0 0
      %3750 = vmatmul.mubr.bf16.gmra.mrb[0].mxu0 %v3595
      %v3751 = vpop.f32.mrb[0].mxu0
      %v3752 = vadd.f32 %v3535, %v3751
      %v3753 = vpop.f32.mrb[0].mxu0
      %v3754 = vpop.f32.mrb[0].mxu0
      %v3755 = vadd.f32 %v3535, %v3754
      %v3756 = vpop.f32.mrb[0].mxu0
      %3757 = vdwg.mxu0
      %3758 = vst.msk [vmem:[%s543] sm:$0xff] %vm1336, %v3632
      %3759 = vst.msk [vmem:[%s543 + $0x8] sm:$0xff] %vm1336, %v3635
      %3760 = vst.msk [vmem:[%s543 + $0x10] sm:$0xff] %vm1336, %v3640
      %3761 = vst.msk [vmem:[%s543 + $0x18] sm:$0xff] %vm1336, %v3643
      %3762 = vst.msk [vmem:[%s543 + $0x20] sm:$0xff] %vm1336, %v3648
      %3763 = vst.msk [vmem:[%s543 + $0x28] sm:$0xff] %vm1336, %v3651
      %3764 = vst.msk [vmem:[%s543 + $0x30] sm:$0xff] %vm1336, %v3656
      %3765 = vst.msk [vmem:[%s543 + $0x38] sm:$0xff] %vm1336, %v3659
      %3766 = vst.msk [vmem:[%s543 + $0x40] sm:$0xff] %vm1336, %v3664
      %3767 = vst.msk [vmem:[%s543 + $0x48] sm:$0xff] %vm1336, %v3667
      %3768 = vst.msk [vmem:[%s543 + $0x50] sm:$0xff] %vm1336, %v3672
      %3769 = vst.msk [vmem:[%s543 + $0x58] sm:$0xff] %vm1336, %v3675
      %3770 = vst.msk [vmem:[%s543 + $0x60] sm:$0xff] %vm1336, %v3680
      %3771 = vst.msk [vmem:[%s543 + $0x68] sm:$0xff] %vm1336, %v3683
      %3772 = vst.msk [vmem:[%s543 + $0x70] sm:$0xff] %vm1336, %v3688
      %3773 = vst.msk [vmem:[%s543 + $0x78] sm:$0xff] %vm1336, %v3691
      %3774 = vst.msk [vmem:[%s543 + $0x80] sm:$0xff] %vm1336, %v3696
      %3775 = vst.msk [vmem:[%s543 + $0x88] sm:$0xff] %vm1336, %v3699
      %3776 = vst.msk [vmem:[%s543 + $0x90] sm:$0xff] %vm1336, %v3704
      %3777 = vst.msk [vmem:[%s543 + $0x98] sm:$0xff] %vm1336, %v3707
      %3778 = vst.msk [vmem:[%s543 + $0xa0] sm:$0xff] %vm1336, %v3712
      %3779 = vst.msk [vmem:[%s543 + $0xa8] sm:$0xff] %vm1336, %v3715
      %3780 = vst.msk [vmem:[%s543 + $0xb0] sm:$0xff] %vm1336, %v3720
      %3781 = vst.msk [vmem:[%s543 + $0xb8] sm:$0xff] %vm1336, %v3723
      %3782 = vst.msk [vmem:[%s543 + $0xc0] sm:$0xff] %vm1336, %v3728
      %3783 = vst.msk [vmem:[%s543 + $0xc8] sm:$0xff] %vm1336, %v3731
      %3784 = vst.msk [vmem:[%s543 + $0xd0] sm:$0xff] %vm1336, %v3736
      %3785 = vst.msk [vmem:[%s543 + $0xd8] sm:$0xff] %vm1336, %v3739
      %3786 = vst.msk [vmem:[%s543 + $0xe0] sm:$0xff] %vm1336, %v3744
      %3787 = vst.msk [vmem:[%s543 + $0xe8] sm:$0xff] %vm1336, %v3747
      %3788 = vst.msk [vmem:[%s543 + $0xf0] sm:$0xff] %vm1336, %v3752
      %3789 = vst.msk [vmem:[%s543 + $0xf8] sm:$0xff] %vm1336, %v3755
      %s3790 = sadd.s32 %s31, %s32
      %s3791 = smul.u32 32, %s3790
      %p3792 = scmp.lt.s32.totalorder %s30, 1
      %s3793 = scalar_select %p3792, %s30, 1
      %p3794 = scmp.lt.s32.totalorder %s3791, 31
      %s3795 = scalar_select %p3794, %s3791, 31
      %s3796 = smul.addr %s3793, 32
      %s3797 = sadd.s32 %s3795, %s3796
      %s3798 = smul.addr %s3797, 8
      %s3799 = scalar_lea.vmem %s14, %s3798
      // Predicated region
      $region81: #{tpu_custom_call.1} parent=75 // pred_check
        %p3800 = pneg %p374
      $region82: #{tpu_custom_call.1} parent=75 // pred_check_branch
        %3802 = sbr.rel (%p3800) target = $region84
      $region83: #{tpu_custom_call.1} parent=75 // pred_region
        %s3803 = sadd.s32 %s31, %s32
        %s3804 = smul.u32 32, %s3803
      $region84: #{tpu_custom_call.1} parent=75 // pred_fallthru
        _
    $region76: #{tpu_custom_call.1} parent=5 // pred_fallthru
      _
    %p3805 = scmp.le.s32.totalorder 2, %s20
    // Predicated region
    $region85: #{tpu_custom_call.1} parent=5 // pred_check
      %p3806 = pneg %p3805
    $region86: #{tpu_custom_call.1} parent=5 // pred_check_branch
      %3808 = sbr.rel (%p3806) target = $region88
    $region87: #{tpu_custom_call.1} parent=5 // pred_region
      %s3809 = ssub.s32 %s20, 2
      // Predicated region
      $region89: #{tpu_custom_call.1} parent=87 // pred_check
        %p3810 = pneg %p380
      $region90: #{tpu_custom_call.1} parent=87 // pred_check_branch
        %3812 = sbr.rel (%p3810) target = $region92
      $region91: #{tpu_custom_call.1} parent=87 // pred_region
        %s3813 = sadd.s32 %s34, %s35
        %s3814 = smul.u32 32, %s3813
        %p3815 = scmp.lt.s32.totalorder %s33, 1
        %s3816 = scalar_select %p3815, %s33, 1
        %p3817 = scmp.lt.s32.totalorder %s3814, 31
        %s3818 = scalar_select %p3817, %s3814, 31
        %s3819 = smul.addr %s3816, 32
        %s3820 = sadd.s32 %s3818, %s3819
        %s3821 = smul.addr %s3820, 8
        %s3822 = scalar_lea.vmem %s14, %s3821
      $region92: #{tpu_custom_call.1} parent=87 // pred_fallthru
        _
    $region88: #{tpu_custom_call.1} parent=5 // pred_fallthru
      _
  $region6: #{tpu_custom_call.1} parent=0 // loop_footer
    %s24 = sadd.s32 1, %s20
  $region7: #{tpu_custom_call.1} parent=0 // loop_footer_branch
    %19 = sbr.rel target = $region3
  $region8: #{tpu_custom_call.1} parent=0 // loop_exit
    _

</llo_original>
